<compile_context>
chip_gen: v7x
topology: tpu7x:2x2x1
jax: 0.10.0
libtpu: 0.0.40
codegen_flags: <defaults>
</compile_context>

<pallas_src>
import math

import numpy as np
import jax
import jax.numpy as jnp
from jax.experimental import pallas as pl
from jax.experimental.pallas import tpu as pltpu

# ---------------- small deterministic configuration --------------------------
BATCH = 2
SEQ_LEN = 16
PRED_LEN = 8
ENC_IN = 7
RATE = 0.1                               # dropout rate == LeakyReLU negative slope
PATCH = [4, 8]
N_PATCH = [SEQ_LEN // p if SEQ_LEN % p == 0 else SEQ_LEN // p + 1 for p in PATCH]
LAYERS = len(PATCH)
CP = int(math.sqrt(ENC_IN)) + 1          # channel_patch
NEW_CHANNEL = CP * CP

BN_EPS = 1e-5
BN_SCALE = 1.0 / math.sqrt(1.0 + BN_EPS)  # eval-mode BatchNorm2d with default stats

_PER_LAYER_REFS = 20                      # prepared arrays per layer fed to the kernel


def _leaky(x):
    return jnp.where(x > 0, x, RATE * x)


# ---------------- the single fused Pallas kernel ------------------------------
def _freq_block(v, a_ref, ba_ref, b_ref, k_ref, c_ref):
    """Folded (rfft -> zero -> BN -> complex 2-layer MLP -> +residual -> irfft)."""
    h = _leaky(jnp.dot(v, a_ref[...], preferred_element_type=jnp.float32) + ba_ref[...])
    return (jnp.dot(v, k_ref[...], preferred_element_type=jnp.float32)
            + jnp.dot(h, b_ref[...], preferred_element_type=jnp.float32)
            + c_ref[...])


def _channel_block(u, w1_ref, b1_ref, w2_ref, b2_ref):
    """u + MLP(BN(u)) where the MLP acts on one axis of the 3x3 channel patch
    (already folded into left-multiplying expanded weights)."""
    h = _leaky(jnp.dot(w1_ref[...], u, preferred_element_type=jnp.float32) + b1_ref[...])
    return u + jnp.dot(w2_ref[...], h, preferred_element_type=jnp.float32) + b2_ref[...]


def _fused_kernel(*refs):
    x_ref, pad_ref, sel_ref = refs[0], refs[1], refs[2]
    layer_refs = refs[3:-1]
    o_ref = refs[-1]

    # ---- RevIN-style normalization (per (b, c) row, over the seq axis) ----
    v0 = x_ref[0]                                       # (ENC_IN, SEQ_LEN)
    mean = jnp.mean(v0, axis=1, keepdims=True)
    xc = v0 - mean
    var = jnp.mean(xc * xc, axis=1, keepdims=True)      # unbiased=False
    std = jnp.sqrt(var + 1e-5)
    vn = xc / std

    acc = jnp.zeros((ENC_IN, PRED_LEN), jnp.float32)
    for i in range(LAYERS):
        (a_l, ba_l, b_l, k_l, c_l,
         a_g, ba_g, b_g, k_g, c_g,
         w1x, b1c, w2x, b2c, w3x, b3c, w4x, b4c,
         wp, bp) = layer_refs[i * _PER_LAYER_REFS:(i + 1) * _PER_LAYER_REFS]

        v1 = _freq_block(vn, a_l, ba_l, b_l, k_l, c_l)  # local (within-patch) freq mix
        v2 = _freq_block(v1, a_g, ba_g, b_g, k_g, c_g)  # global (across-patch) freq mix

        # channel-patch section: pad 7 -> 9 channels, two residual MLPs, select 7
        u = jnp.dot(pad_ref[...], v2, preferred_element_type=jnp.float32)   # (9, L)
        u = _channel_block(u, w1x, b1c, w2x, b2c)
        u = _channel_block(u, w3x, b3c, w4x, b4c)
        t = jnp.dot(sel_ref[...], u, preferred_element_type=jnp.float32)    # (7, L)

        # pred head; layer weight w_i / LAYERS already folded into wp, bp
        acc = acc + jnp.dot(t, wp[...], preferred_element_type=jnp.float32) + bp[...]

    o_ref[0] = acc * std + mean                         # de-normalize


@jax.jit
def model_forward(x_enc, weights):
    B = x_enc.shape[0]
    xt = jnp.transpose(x_enc, (0, 2, 1)).astype(jnp.float32)   # (B, C, S)
    in_specs = ([pl.BlockSpec((1, ENC_IN, SEQ_LEN), lambda b: (b, 0, 0))]
                + [pl.BlockSpec(w.shape, lambda b: (0, 0)) for w in weights])
    out = pl.pallas_call(
        _fused_kernel,
        out_shape=jax.ShapeDtypeStruct((B, ENC_IN, PRED_LEN), jnp.float32),
        grid=(B,),
        in_specs=in_specs,
        out_specs=pl.BlockSpec((1, ENC_IN, PRED_LEN), lambda b: (b, 0, 0)),
        compiler_params=pltpu.CompilerParams(dimension_semantics=("parallel",)),
    )(xt, *weights)
    dec = jnp.transpose(out, (0, 2, 1))                        # (B, pred_len, C)
    return dec[:, -PRED_LEN:, :]


# ---------------- offline weight folding (inference-time prep) ----------------
def _dft_mats(m):
    """Real rfft/irfft matrices for even length m (matches numpy/torch defaults)."""
    F = m // 2 + 1
    j = np.arange(m)[:, None]
    k = np.arange(F)[None, :]
    ang = 2.0 * np.pi * j * k / m
    fr = np.cos(ang)                          # (m, F):  Re(rfft)
    fi = -np.sin(ang)                         # (m, F):  Im(rfft)
    w = np.full(F, 2.0)
    w[0] = 1.0
    if m % 2 == 0:
        w[-1] = 1.0
    ir = (w[:, None] / m) * np.cos(ang).T     # (F, m):  irfft from Re
    ii = -(w[:, None] / m) * np.sin(ang).T    # (F, m):  irfft from Im
    return fr, fi, ir, ii


def _prep_freq(cm, m, groups, smap, pad):
    """Fold one ComplexMultiplication block (plus rfft/irfft and the aliased
    zeroing / eval-BN) into (A, bA, B, K, c) acting on the flat column layout."""
    F = m // 2 + 1
    fr, fi, ir, ii = _dft_mats(m)
    frz = fr.copy(); frz[:, F // 2:] = 0.0    # in-place zeroing (aliases residual)
    fiz = fi.copy(); fiz[:, F // 2:] = 0.0

    w1cat = np.concatenate([cm['wr1'], cm['wi1']], axis=1) * BN_SCALE   # (F, 8F)
    b1cat = np.concatenate([cm['br1'], cm['bi1']], axis=1)              # (1, 8F)

    a_small = np.concatenate([frz @ w1cat, fiz @ w1cat], axis=1)        # (m, 16F)
    ba_small = np.concatenate([b1cat, b1cat], axis=1)                   # (1, 16F)
    b_small = np.concatenate([cm['wr2'] @ ir,
                              cm['wi2'] @ ii,
                              cm['wr2'] @ ii,
                              -(cm['wi2'] @ ir)], axis=0)               # (16F, m)
    c_small = cm['br2'] @ (ir + ii) + cm['bi2'] @ (ii - ir)             # (1, m)
    k_small = frz @ ir + fiz @ ii                                       # (m, m)

    L = groups * m
    W = 16 * F
    a_full = np.zeros((L, groups * W))
    ba_full = np.zeros((1, groups * W))
    b_full = np.zeros((groups * W, L))
    k_full = np.zeros((L, L))
    c_full = np.zeros((1, L))
    for g in range(groups):
        cols = np.asarray(smap[g])
        hcols = np.arange(g * W, (g + 1) * W)
        a_full[np.ix_(cols, hcols)] = a_small
        b_full[np.ix_(hcols, cols)] = b_small
        k_full[np.ix_(cols, cols)] = k_small
        ba_full[0, hcols] = ba_small[0]
        c_full[0, cols] = c_small[0]
    return pad @ a_full, ba_full, b_full, pad @ k_full, c_full


def _prep_channel(ch):
    """Expand the per-3x3-axis channel MLPs into left-multiplying 9-channel ops."""
    H = 4 * CP
    w1x = np.zeros((CP * H, NEW_CHANNEL)); b1c = np.zeros((CP * H, 1))
    w2x = np.zeros((NEW_CHANNEL, CP * H)); b2c = np.zeros((NEW_CHANNEL, 1))
    w3x = np.zeros((CP * H, NEW_CHANNEL)); b3c = np.zeros((CP * H, 1))
    w4x = np.zeros((NEW_CHANNEL, CP * H)); b4c = np.zeros((NEW_CHANNEL, 1))
    for r in range(CP):                       # block 1: MLP over the inner (col) index
        w1x[r * H:(r + 1) * H, r * CP:(r + 1) * CP] = BN_SCALE * ch['w1'].T
        b1c[r * H:(r + 1) * H, 0] = ch['b1'][0]
        w2x[r * CP:(r + 1) * CP, r * H:(r + 1) * H] = ch['w2'].T
        b2c[r * CP:(r + 1) * CP, 0] = ch['b2'][0]
    for c in range(CP):                       # block 2: MLP over the outer (row) index
        for r in range(CP):
            w3x[c * H:(c + 1) * H, CP * r + c] = BN_SCALE * ch['w3'][r, :]
            w4x[CP * r + c, c * H:(c + 1) * H] = ch['w4'][:, r]
            b4c[CP * r + c, 0] = ch['b4'][0, r]
        b3c[c * H:(c + 1) * H, 0] = ch['b3'][0]
    return [w1x, b1c, w2x, b2c, w3x, b3c, w4x, b4c]


def prepare_params(params):
    """One-time inference-time weight folding (float64), returns flat f32 tuple."""
    npp = jax.tree_util.tree_map(lambda a: np.asarray(a, np.float64), params)

    pad = np.zeros((NEW_CHANNEL, ENC_IN))
    for q in range(ENC_IN):
        pad[q, q] = 1.0
    for r in range(NEW_CHANNEL - ENC_IN):
        pad[ENC_IN + r, r] = 1.0
    sel = np.zeros((ENC_IN, NEW_CHANNEL))
    for c in range(ENC_IN):
        sel[c, c] = 1.0

    flat = [pad, sel]
    for i in range(LAYERS):
        p, n = PATCH[i], N_PATCH[i]
        L = p * n
        padM = np.zeros((SEQ_LEN, L))                     # circular pad S -> L
        for s in range(L):
            padM[s if s < SEQ_LEN else s - SEQ_LEN, s] = 1.0

        if p != 1:
            smap_local = [[g * p + t for t in range(p)] for g in range(n)]
            flat += list(_prep_freq(npp['local'][i], p, n, smap_local, padM))
        else:
            # TODO(synk): p == 1 skips the local freq block in PyTorch; identity path.
            flat += [np.zeros((SEQ_LEN, 8)), np.zeros((1, 8)),
                     np.zeros((8, L)), padM.copy(), np.zeros((1, L))]

        smap_glob = [[t * p + g for t in range(n)] for g in range(p)]
        flat += list(_prep_freq(npp['glob'][i], n, p, smap_glob, np.eye(L)))

        flat += _prep_channel(npp['ch'][i])

        scale = float(npp['w'][i]) / LAYERS               # fold layer weight + mean
        flat += [npp['pred'][i]['w'] * scale, npp['pred'][i]['b'] * scale]

    return tuple(jnp.asarray(a, jnp.float32) for a in flat)


# ---------------- deterministic parameter construction -----------------------
def _linear_init(key, fan_in, fan_out):
    k1, k2 = jax.random.split(key)
    bound = 1.0 / math.sqrt(fan_in)
    w = jax.random.uniform(k1, (fan_in, fan_out), jnp.float32, -bound, bound)
    b = jax.random.uniform(k2, (1, fan_out), jnp.float32, -bound, bound)
    return w, b


def _cmul_init(key, a):
    ks = jax.random.split(key, 4)
    wr1, br1 = _linear_init(ks[0], a, 4 * a)
    wr2, br2 = _linear_init(ks[1], 4 * a, a)
    wi1, bi1 = _linear_init(ks[2], a, 4 * a)
    wi2, bi2 = _linear_init(ks[3], 4 * a, a)
    return dict(wr1=wr1, br1=br1, wr2=wr2, br2=br2,
                wi1=wi1, bi1=bi1, wi2=wi2, bi2=bi2)


def init_params(key):
    params = dict(local=[], glob=[], ch=[], pred=[])
    for i in range(LAYERS):
        key, k1, k2, k3, k4, k5, k6, k7 = jax.random.split(key, 8)
        params['local'].append(_cmul_init(k1, PATCH[i] // 2 + 1))
        params['glob'].append(_cmul_init(k2, N_PATCH[i] // 2 + 1))
        w1, b1 = _linear_init(k3, CP, 4 * CP)
        w2, b2 = _linear_init(k4, 4 * CP, CP)
        w3, b3 = _linear_init(k5, CP, 4 * CP)
        w4, b4 = _linear_init(k6, 4 * CP, CP)
        params['ch'].append(dict(w1=w1, b1=b1, w2=w2, b2=b2,
                                 w3=w3, b3=b3, w4=w4, b4=b4))
        wp, bp = _linear_init(k7, N_PATCH[i] * PATCH[i], PRED_LEN)
        params['pred'].append(dict(w=wp, b=bp))
    params['w'] = jnp.ones((LAYERS,), jnp.float32)        # self.w
    return params


# ---------------- pure-JAX reference (mirrors the PyTorch forward) ------------
@jax.jit
def _reference_forward(x_enc, params):
    hp = jax.lax.Precision.HIGHEST
    x = x_enc.astype(jnp.float32)
    mean = jnp.mean(x, axis=1, keepdims=True)
    xc = x - mean
    std = jnp.sqrt(jnp.mean(xc * xc, axis=1, keepdims=True) + 1e-5)
    xn = xc / std
    B, S, C = x.shape

    def cmul(real, imag, cm):
        F = real.shape[-1]
        real = real.at[..., F // 2:].set(0.0)
        imag = imag.at[..., F // 2:].set(0.0)

        def mlp(v, w1, b1, w2, b2):
            h = _leaky(jnp.dot(v, w1, precision=hp) + b1)
            return jnp.dot(h, w2, precision=hp) + b2

        rb, ib = real * BN_SCALE, imag * BN_SCALE
        r2 = real + mlp(rb, cm['wr1'], cm['br1'], cm['wr2'], cm['br2']) \
                  - mlp(ib, cm['wi1'], cm['bi1'], cm['wi2'], cm['bi2'])
        i2 = imag + mlp(ib, cm['wr1'], cm['br1'], cm['wr2'], cm['br2']) \
                  + mlp(rb, cm['wi1'], cm['bi1'], cm['wi2'], cm['bi2'])
        return r2, i2

    results = []
    for i in range(LAYERS):
        p, n = PATCH[i], N_PATCH[i]
        L = n * p
        trend = jnp.concatenate([xn, xn[:, :L - S, :]], axis=1)
        trend = trend.reshape(B, n, p, C).transpose(0, 3, 1, 2)
        if p != 1:
            fr = jnp.fft.rfft(trend, axis=-1)
            r2, i2 = cmul(fr.real, fr.imag, params['local'][i])
            trend = jnp.fft.irfft(jax.lax.complex(r2, i2), n=p, axis=-1)
        trend = trend.transpose(0, 1, 3, 2)
        fr = jnp.fft.rfft(trend, axis=-1)
        r2, i2 = cmul(fr.real, fr.imag, params['glob'][i])
        trend = jnp.fft.irfft(jax.lax.complex(r2, i2), n=n, axis=-1)
        trend = trend.transpose(0, 1, 3, 2).reshape(B, C, L).transpose(0, 2, 1)
        trend = jnp.concatenate([trend, trend[:, :, :NEW_CHANNEL - C]], axis=-1)
        trend = trend.reshape(B, L, CP, CP)
        ch = params['ch'][i]
        h = _leaky(jnp.dot(trend * BN_SCALE, ch['w1'], precision=hp) + ch['b1'])
        trend = trend + jnp.dot(h, ch['w2'], precision=hp) + ch['b2']
        tp = jnp.swapaxes(trend * BN_SCALE, -1, -2)
        h = _leaky(jnp.dot(tp, ch['w3'], precision=hp) + ch['b3'])
        d = jnp.dot(h, ch['w4'], precision=hp) + ch['b4']
        trend = trend + jnp.swapaxes(d, -1, -2)
        trend = trend.reshape(B, L, NEW_CHANNEL)[:, :, :C].transpose(0, 2, 1)
        pr = jnp.dot(trend, params['pred'][i]['w'], precision=hp) + params['pred'][i]['b']
        results.append(pr)
    stacked = jnp.stack(results, axis=-1)
    x_pred = jnp.mean(stacked * params['w'][None, None, None, :], axis=-1)
    x_pred = x_pred.transpose(0, 2, 1)
    dec = x_pred * std + mean
    return dec[:, -PRED_LEN:, :]


if __name__ == "__main__":
    key = jax.random.PRNGKey(0)
    pkey, xkey = jax.random.split(key)
    params = init_params(pkey)
    weights = prepare_params(params)            # one-time offline weight folding
    x_enc = jax.random.normal(xkey, (BATCH, SEQ_LEN, ENC_IN), jnp.float32)

    out = jax.block_until_ready(model_forward(x_enc, weights))
    assert out.shape == (BATCH, PRED_LEN, ENC_IN)
    assert bool(jnp.all(jnp.isfinite(out)))

    # sanity check against a plain-JAX port of the PyTorch forward
    ref = jax.block_until_ready(_reference_forward(x_enc, params))
    err = float(jnp.max(jnp.abs(out - ref)))
    scale = float(jnp.max(jnp.abs(ref)))
    assert err <= 5e-2 * (1.0 + scale), f"mismatch: max_err={err}, scale={scale}"

    print("KERNEL_OK")
</pallas_src>

<mosaic_0001>
module attributes {stable_mosaic.version = 11 : i64} {
  func.func @_fused_kernel(%arg0: i32, %arg1: memref<1x7x16xf32, #tpu.memory_space<vmem>>, %arg2: memref<9x7xf32, #tpu.memory_space<vmem>>, %arg3: memref<7x9xf32, #tpu.memory_space<vmem>>, %arg4: memref<16x192xf32, #tpu.memory_space<vmem>>, %arg5: memref<1x192xf32, #tpu.memory_space<vmem>>, %arg6: memref<192x16xf32, #tpu.memory_space<vmem>>, %arg7: memref<16x16xf32, #tpu.memory_space<vmem>>, %arg8: memref<1x16xf32, #tpu.memory_space<vmem>>, %arg9: memref<16x192xf32, #tpu.memory_space<vmem>>, %arg10: memref<1x192xf32, #tpu.memory_space<vmem>>, %arg11: memref<192x16xf32, #tpu.memory_space<vmem>>, %arg12: memref<16x16xf32, #tpu.memory_space<vmem>>, %arg13: memref<1x16xf32, #tpu.memory_space<vmem>>, %arg14: memref<36x9xf32, #tpu.memory_space<vmem>>, %arg15: memref<36x1xf32, #tpu.memory_space<vmem>>, %arg16: memref<9x36xf32, #tpu.memory_space<vmem>>, %arg17: memref<9x1xf32, #tpu.memory_space<vmem>>, %arg18: memref<36x9xf32, #tpu.memory_space<vmem>>, %arg19: memref<36x1xf32, #tpu.memory_space<vmem>>, %arg20: memref<9x36xf32, #tpu.memory_space<vmem>>, %arg21: memref<9x1xf32, #tpu.memory_space<vmem>>, %arg22: memref<16x8xf32, #tpu.memory_space<vmem>>, %arg23: memref<1x8xf32, #tpu.memory_space<vmem>>, %arg24: memref<16x160xf32, #tpu.memory_space<vmem>>, %arg25: memref<1x160xf32, #tpu.memory_space<vmem>>, %arg26: memref<160x16xf32, #tpu.memory_space<vmem>>, %arg27: memref<16x16xf32, #tpu.memory_space<vmem>>, %arg28: memref<1x16xf32, #tpu.memory_space<vmem>>, %arg29: memref<16x256xf32, #tpu.memory_space<vmem>>, %arg30: memref<1x256xf32, #tpu.memory_space<vmem>>, %arg31: memref<256x16xf32, #tpu.memory_space<vmem>>, %arg32: memref<16x16xf32, #tpu.memory_space<vmem>>, %arg33: memref<1x16xf32, #tpu.memory_space<vmem>>, %arg34: memref<36x9xf32, #tpu.memory_space<vmem>>, %arg35: memref<36x1xf32, #tpu.memory_space<vmem>>, %arg36: memref<9x36xf32, #tpu.memory_space<vmem>>, %arg37: memref<9x1xf32, #tpu.memory_space<vmem>>, %arg38: memref<36x9xf32, #tpu.memory_space<vmem>>, %arg39: memref<36x1xf32, #tpu.memory_space<vmem>>, %arg40: memref<9x36xf32, #tpu.memory_space<vmem>>, %arg41: memref<9x1xf32, #tpu.memory_space<vmem>>, %arg42: memref<16x8xf32, #tpu.memory_space<vmem>>, %arg43: memref<1x8xf32, #tpu.memory_space<vmem>>, %arg44: memref<1x7x8xf32, #tpu.memory_space<vmem>>) attributes {dimension_semantics = [#tpu.dimension_semantics<parallel>], iteration_bounds = array<i64: 2>, scalar_prefetch = 0 : i64, scratch_operands = 0 : i64, tpu.core_type = #tpu.core_type<tc>, window_params = [{transform_indices = @transform_0, window_bounds = array<i64: 1, 7, 16>}, {pipeline_mode = #tpu.pipeline_mode<synchronous>, transform_indices = @transform_1, window_bounds = array<i64: 9, 7>}, {pipeline_mode = #tpu.pipeline_mode<synchronous>, transform_indices = @transform_2, window_bounds = array<i64: 7, 9>}, {pipeline_mode = #tpu.pipeline_mode<synchronous>, transform_indices = @transform_3, window_bounds = array<i64: 16, 192>}, {pipeline_mode = #tpu.pipeline_mode<synchronous>, transform_indices = @transform_4, window_bounds = array<i64: 1, 192>}, {pipeline_mode = #tpu.pipeline_mode<synchronous>, transform_indices = @transform_5, window_bounds = array<i64: 192, 16>}, {pipeline_mode = #tpu.pipeline_mode<synchronous>, transform_indices = @transform_6, window_bounds = array<i64: 16, 16>}, {pipeline_mode = #tpu.pipeline_mode<synchronous>, transform_indices = @transform_7, window_bounds = array<i64: 1, 16>}, {pipeline_mode = #tpu.pipeline_mode<synchronous>, transform_indices = @transform_8, window_bounds = array<i64: 16, 192>}, {pipeline_mode = #tpu.pipeline_mode<synchronous>, transform_indices = @transform_9, window_bounds = array<i64: 1, 192>}, {pipeline_mode = #tpu.pipeline_mode<synchronous>, transform_indices = @transform_10, window_bounds = array<i64: 192, 16>}, {pipeline_mode = #tpu.pipeline_mode<synchronous>, transform_indices = @transform_11, window_bounds = array<i64: 16, 16>}, {pipeline_mode = #tpu.pipeline_mode<synchronous>, transform_indices = @transform_12, window_bounds = array<i64: 1, 16>}, {pipeline_mode = #tpu.pipeline_mode<synchronous>, transform_indices = @transform_13, window_bounds = array<i64: 36, 9>}, {pipeline_mode = #tpu.pipeline_mode<synchronous>, transform_indices = @transform_14, window_bounds = array<i64: 36, 1>}, {pipeline_mode = #tpu.pipeline_mode<synchronous>, transform_indices = @transform_15, window_bounds = array<i64: 9, 36>}, {pipeline_mode = #tpu.pipeline_mode<synchronous>, transform_indices = @transform_16, window_bounds = array<i64: 9, 1>}, {pipeline_mode = #tpu.pipeline_mode<synchronous>, transform_indices = @transform_17, window_bounds = array<i64: 36, 9>}, {pipeline_mode = #tpu.pipeline_mode<synchronous>, transform_indices = @transform_18, window_bounds = array<i64: 36, 1>}, {pipeline_mode = #tpu.pipeline_mode<synchronous>, transform_indices = @transform_19, window_bounds = array<i64: 9, 36>}, {pipeline_mode = #tpu.pipeline_mode<synchronous>, transform_indices = @transform_20, window_bounds = array<i64: 9, 1>}, {pipeline_mode = #tpu.pipeline_mode<synchronous>, transform_indices = @transform_21, window_bounds = array<i64: 16, 8>}, {pipeline_mode = #tpu.pipeline_mode<synchronous>, transform_indices = @transform_22, window_bounds = array<i64: 1, 8>}, {pipeline_mode = #tpu.pipeline_mode<synchronous>, transform_indices = @transform_23, window_bounds = array<i64: 16, 160>}, {pipeline_mode = #tpu.pipeline_mode<synchronous>, transform_indices = @transform_24, window_bounds = array<i64: 1, 160>}, {pipeline_mode = #tpu.pipeline_mode<synchronous>, transform_indices = @transform_25, window_bounds = array<i64: 160, 16>}, {pipeline_mode = #tpu.pipeline_mode<synchronous>, transform_indices = @transform_26, window_bounds = array<i64: 16, 16>}, {pipeline_mode = #tpu.pipeline_mode<synchronous>, transform_indices = @transform_27, window_bounds = array<i64: 1, 16>}, {pipeline_mode = #tpu.pipeline_mode<synchronous>, transform_indices = @transform_28, window_bounds = array<i64: 16, 256>}, {pipeline_mode = #tpu.pipeline_mode<synchronous>, transform_indices = @transform_29, window_bounds = array<i64: 1, 256>}, {pipeline_mode = #tpu.pipeline_mode<synchronous>, transform_indices = @transform_30, window_bounds = array<i64: 256, 16>}, {pipeline_mode = #tpu.pipeline_mode<synchronous>, transform_indices = @transform_31, window_bounds = array<i64: 16, 16>}, {pipeline_mode = #tpu.pipeline_mode<synchronous>, transform_indices = @transform_32, window_bounds = array<i64: 1, 16>}, {pipeline_mode = #tpu.pipeline_mode<synchronous>, transform_indices = @transform_33, window_bounds = array<i64: 36, 9>}, {pipeline_mode = #tpu.pipeline_mode<synchronous>, transform_indices = @transform_34, window_bounds = array<i64: 36, 1>}, {pipeline_mode = #tpu.pipeline_mode<synchronous>, transform_indices = @transform_35, window_bounds = array<i64: 9, 36>}, {pipeline_mode = #tpu.pipeline_mode<synchronous>, transform_indices = @transform_36, window_bounds = array<i64: 9, 1>}, {pipeline_mode = #tpu.pipeline_mode<synchronous>, transform_indices = @transform_37, window_bounds = array<i64: 36, 9>}, {pipeline_mode = #tpu.pipeline_mode<synchronous>, transform_indices = @transform_38, window_bounds = array<i64: 36, 1>}, {pipeline_mode = #tpu.pipeline_mode<synchronous>, transform_indices = @transform_39, window_bounds = array<i64: 9, 36>}, {pipeline_mode = #tpu.pipeline_mode<synchronous>, transform_indices = @transform_40, window_bounds = array<i64: 9, 1>}, {pipeline_mode = #tpu.pipeline_mode<synchronous>, transform_indices = @transform_41, window_bounds = array<i64: 16, 8>}, {pipeline_mode = #tpu.pipeline_mode<synchronous>, transform_indices = @transform_42, window_bounds = array<i64: 1, 8>}, {transform_indices = @transform_43, window_bounds = array<i64: 1, 7, 8>}]} {
    %c0 = arith.constant 0 : index
    %c0_0 = arith.constant 0 : index
    %c0_1 = arith.constant 0 : index
    %0 = vector.load %arg1[%c0, %c0_0, %c0_1] : memref<1x7x16xf32, #tpu.memory_space<vmem>>, vector<1x7x16xf32>
    %1 = vector.shape_cast %0 : vector<1x7x16xf32> to vector<7x16xf32>
    %cst = arith.constant dense<0.000000e+00> : vector<7xf32>
    %2 = vector.multi_reduction <add>, %1, %cst [1] : vector<7x16xf32> to vector<7xf32>
    %3 = vector.shape_cast %2 : vector<7xf32> to vector<7x1xf32>
    %cst_2 = arith.constant 1.600000e+01 : f32
    %4 = vector.broadcast %cst_2 : f32 to vector<7x1xf32>
    %5 = arith.divf %3, %4 : vector<7x1xf32>
    %6 = vector.broadcast %5 : vector<7x1xf32> to vector<7x16xf32>
    %7 = arith.subf %1, %6 : vector<7x16xf32>
    %8 = arith.mulf %7, %7 : vector<7x16xf32>
    %cst_3 = arith.constant dense<0.000000e+00> : vector<7xf32>
    %9 = vector.multi_reduction <add>, %8, %cst_3 [1] : vector<7x16xf32> to vector<7xf32>
    %10 = vector.shape_cast %9 : vector<7xf32> to vector<7x1xf32>
    %cst_4 = arith.constant 1.600000e+01 : f32
    %11 = vector.broadcast %cst_4 : f32 to vector<7x1xf32>
    %12 = arith.divf %10, %11 : vector<7x1xf32>
    %cst_5 = arith.constant 9.99999974E-6 : f32
    %13 = vector.broadcast %cst_5 : f32 to vector<7x1xf32>
    %14 = arith.addf %12, %13 : vector<7x1xf32>
    %15 = math.sqrt %14 : vector<7x1xf32>
    %16 = vector.broadcast %15 : vector<7x1xf32> to vector<7x16xf32>
    %17 = arith.divf %7, %16 : vector<7x16xf32>
    %cst_6 = arith.constant 0.000000e+00 : f32
    %18 = vector.broadcast %cst_6 : f32 to vector<7x8xf32>
    %c0_7 = arith.constant 0 : index
    %c0_8 = arith.constant 0 : index
    %19 = vector.load %arg4[%c0_7, %c0_8] : memref<16x192xf32, #tpu.memory_space<vmem>>, vector<16x192xf32>
    %cst_9 = arith.constant dense<0.000000e+00> : vector<7x192xf32>
    %20 = tpu.matmul %17, %19, %cst_9 {dimension_numbers = #tpu.dot_dimension_numbers<[1], [0], [0], [1], [0, 0, 1, 1], [], []>} : vector<7x16xf32>, vector<16x192xf32>, vector<7x192xf32> -> vector<7x192xf32>
    %c0_10 = arith.constant 0 : index
    %c0_11 = arith.constant 0 : index
    %21 = vector.load %arg5[%c0_10, %c0_11] : memref<1x192xf32, #tpu.memory_space<vmem>>, vector<1x192xf32>
    %22 = vector.broadcast %21 : vector<1x192xf32> to vector<7x192xf32>
    %23 = arith.addf %20, %22 : vector<7x192xf32>
    %cst_12 = arith.constant 0.000000e+00 : f32
    %24 = vector.broadcast %cst_12 : f32 to vector<7x192xf32>
    %25 = arith.cmpf ogt, %23, %24 : vector<7x192xf32>
    %cst_13 = arith.constant 1.000000e-01 : f32
    %26 = vector.broadcast %cst_13 : f32 to vector<7x192xf32>
    %27 = arith.mulf %26, %23 : vector<7x192xf32>
    %28 = arith.select %25, %23, %27 : vector<7x192xi1>, vector<7x192xf32>
    %c0_14 = arith.constant 0 : index
    %c0_15 = arith.constant 0 : index
    %29 = vector.load %arg7[%c0_14, %c0_15] : memref<16x16xf32, #tpu.memory_space<vmem>>, vector<16x16xf32>
    %cst_16 = arith.constant dense<0.000000e+00> : vector<7x16xf32>
    %30 = tpu.matmul %17, %29, %cst_16 {dimension_numbers = #tpu.dot_dimension_numbers<[1], [0], [0], [1], [0, 0, 1, 1], [], []>} : vector<7x16xf32>, vector<16x16xf32>, vector<7x16xf32> -> vector<7x16xf32>
    %c0_17 = arith.constant 0 : index
    %c0_18 = arith.constant 0 : index
    %31 = vector.load %arg6[%c0_17, %c0_18] : memref<192x16xf32, #tpu.memory_space<vmem>>, vector<192x16xf32>
    %cst_19 = arith.constant dense<0.000000e+00> : vector<7x16xf32>
    %32 = tpu.matmul %28, %31, %cst_19 {dimension_numbers = #tpu.dot_dimension_numbers<[1], [0], [0], [1], [0, 0, 1, 1], [], []>} : vector<7x192xf32>, vector<192x16xf32>, vector<7x16xf32> -> vector<7x16xf32>
    %33 = arith.addf %30, %32 : vector<7x16xf32>
    %c0_20 = arith.constant 0 : index
    %c0_21 = arith.constant 0 : index
    %34 = vector.load %arg8[%c0_20, %c0_21] : memref<1x16xf32, #tpu.memory_space<vmem>>, vector<1x16xf32>
    %35 = vector.broadcast %34 : vector<1x16xf32> to vector<7x16xf32>
    %36 = arith.addf %33, %35 : vector<7x16xf32>
    %c0_22 = arith.constant 0 : index
    %c0_23 = arith.constant 0 : index
    %37 = vector.load %arg9[%c0_22, %c0_23] : memref<16x192xf32, #tpu.memory_space<vmem>>, vector<16x192xf32>
    %cst_24 = arith.constant dense<0.000000e+00> : vector<7x192xf32>
    %38 = tpu.matmul %36, %37, %cst_24 {dimension_numbers = #tpu.dot_dimension_numbers<[1], [0], [0], [1], [0, 0, 1, 1], [], []>} : vector<7x16xf32>, vector<16x192xf32>, vector<7x192xf32> -> vector<7x192xf32>
    %c0_25 = arith.constant 0 : index
    %c0_26 = arith.constant 0 : index
    %39 = vector.load %arg10[%c0_25, %c0_26] : memref<1x192xf32, #tpu.memory_space<vmem>>, vector<1x192xf32>
    %40 = vector.broadcast %39 : vector<1x192xf32> to vector<7x192xf32>
    %41 = arith.addf %38, %40 : vector<7x192xf32>
    %cst_27 = arith.constant 0.000000e+00 : f32
    %42 = vector.broadcast %cst_27 : f32 to vector<7x192xf32>
    %43 = arith.cmpf ogt, %41, %42 : vector<7x192xf32>
    %cst_28 = arith.constant 1.000000e-01 : f32
    %44 = vector.broadcast %cst_28 : f32 to vector<7x192xf32>
    %45 = arith.mulf %44, %41 : vector<7x192xf32>
    %46 = arith.select %43, %41, %45 : vector<7x192xi1>, vector<7x192xf32>
    %c0_29 = arith.constant 0 : index
    %c0_30 = arith.constant 0 : index
    %47 = vector.load %arg12[%c0_29, %c0_30] : memref<16x16xf32, #tpu.memory_space<vmem>>, vector<16x16xf32>
    %cst_31 = arith.constant dense<0.000000e+00> : vector<7x16xf32>
    %48 = tpu.matmul %36, %47, %cst_31 {dimension_numbers = #tpu.dot_dimension_numbers<[1], [0], [0], [1], [0, 0, 1, 1], [], []>} : vector<7x16xf32>, vector<16x16xf32>, vector<7x16xf32> -> vector<7x16xf32>
    %c0_32 = arith.constant 0 : index
    %c0_33 = arith.constant 0 : index
    %49 = vector.load %arg11[%c0_32, %c0_33] : memref<192x16xf32, #tpu.memory_space<vmem>>, vector<192x16xf32>
    %cst_34 = arith.constant dense<0.000000e+00> : vector<7x16xf32>
    %50 = tpu.matmul %46, %49, %cst_34 {dimension_numbers = #tpu.dot_dimension_numbers<[1], [0], [0], [1], [0, 0, 1, 1], [], []>} : vector<7x192xf32>, vector<192x16xf32>, vector<7x16xf32> -> vector<7x16xf32>
    %51 = arith.addf %48, %50 : vector<7x16xf32>
    %c0_35 = arith.constant 0 : index
    %c0_36 = arith.constant 0 : index
    %52 = vector.load %arg13[%c0_35, %c0_36] : memref<1x16xf32, #tpu.memory_space<vmem>>, vector<1x16xf32>
    %53 = vector.broadcast %52 : vector<1x16xf32> to vector<7x16xf32>
    %54 = arith.addf %51, %53 : vector<7x16xf32>
    %c0_37 = arith.constant 0 : index
    %c0_38 = arith.constant 0 : index
    %55 = vector.load %arg2[%c0_37, %c0_38] : memref<9x7xf32, #tpu.memory_space<vmem>>, vector<9x7xf32>
    %cst_39 = arith.constant dense<0.000000e+00> : vector<9x16xf32>
    %56 = tpu.matmul %55, %54, %cst_39 {dimension_numbers = #tpu.dot_dimension_numbers<[1], [0], [0], [1], [0, 0, 1, 1], [], []>} : vector<9x7xf32>, vector<7x16xf32>, vector<9x16xf32> -> vector<9x16xf32>
    %c0_40 = arith.constant 0 : index
    %c0_41 = arith.constant 0 : index
    %57 = vector.load %arg14[%c0_40, %c0_41] : memref<36x9xf32, #tpu.memory_space<vmem>>, vector<36x9xf32>
    %cst_42 = arith.constant dense<0.000000e+00> : vector<36x16xf32>
    %58 = tpu.matmul %57, %56, %cst_42 {dimension_numbers = #tpu.dot_dimension_numbers<[1], [0], [0], [1], [0, 0, 1, 1], [], []>} : vector<36x9xf32>, vector<9x16xf32>, vector<36x16xf32> -> vector<36x16xf32>
    %c0_43 = arith.constant 0 : index
    %c0_44 = arith.constant 0 : index
    %59 = vector.load %arg15[%c0_43, %c0_44] : memref<36x1xf32, #tpu.memory_space<vmem>>, vector<36x1xf32>
    %60 = vector.broadcast %59 : vector<36x1xf32> to vector<36x16xf32>
    %61 = arith.addf %58, %60 : vector<36x16xf32>
    %cst_45 = arith.constant 0.000000e+00 : f32
    %62 = vector.broadcast %cst_45 : f32 to vector<36x16xf32>
    %63 = arith.cmpf ogt, %61, %62 : vector<36x16xf32>
    %cst_46 = arith.constant 1.000000e-01 : f32
    %64 = vector.broadcast %cst_46 : f32 to vector<36x16xf32>
    %65 = arith.mulf %64, %61 : vector<36x16xf32>
    %66 = arith.select %63, %61, %65 : vector<36x16xi1>, vector<36x16xf32>
    %c0_47 = arith.constant 0 : index
    %c0_48 = arith.constant 0 : index
    %67 = vector.load %arg16[%c0_47, %c0_48] : memref<9x36xf32, #tpu.memory_space<vmem>>, vector<9x36xf32>
    %cst_49 = arith.constant dense<0.000000e+00> : vector<9x16xf32>
    %68 = tpu.matmul %67, %66, %cst_49 {dimension_numbers = #tpu.dot_dimension_numbers<[1], [0], [0], [1], [0, 0, 1, 1], [], []>} : vector<9x36xf32>, vector<36x16xf32>, vector<9x16xf32> -> vector<9x16xf32>
    %69 = arith.addf %56, %68 : vector<9x16xf32>
    %c0_50 = arith.constant 0 : index
    %c0_51 = arith.constant 0 : index
    %70 = vector.load %arg17[%c0_50, %c0_51] : memref<9x1xf32, #tpu.memory_space<vmem>>, vector<9x1xf32>
    %71 = vector.broadcast %70 : vector<9x1xf32> to vector<9x16xf32>
    %72 = arith.addf %69, %71 : vector<9x16xf32>
    %c0_52 = arith.constant 0 : index
    %c0_53 = arith.constant 0 : index
    %73 = vector.load %arg18[%c0_52, %c0_53] : memref<36x9xf32, #tpu.memory_space<vmem>>, vector<36x9xf32>
    %cst_54 = arith.constant dense<0.000000e+00> : vector<36x16xf32>
    %74 = tpu.matmul %73, %72, %cst_54 {dimension_numbers = #tpu.dot_dimension_numbers<[1], [0], [0], [1], [0, 0, 1, 1], [], []>} : vector<36x9xf32>, vector<9x16xf32>, vector<36x16xf32> -> vector<36x16xf32>
    %c0_55 = arith.constant 0 : index
    %c0_56 = arith.constant 0 : index
    %75 = vector.load %arg19[%c0_55, %c0_56] : memref<36x1xf32, #tpu.memory_space<vmem>>, vector<36x1xf32>
    %76 = vector.broadcast %75 : vector<36x1xf32> to vector<36x16xf32>
    %77 = arith.addf %74, %76 : vector<36x16xf32>
    %cst_57 = arith.constant 0.000000e+00 : f32
    %78 = vector.broadcast %cst_57 : f32 to vector<36x16xf32>
    %79 = arith.cmpf ogt, %77, %78 : vector<36x16xf32>
    %cst_58 = arith.constant 1.000000e-01 : f32
    %80 = vector.broadcast %cst_58 : f32 to vector<36x16xf32>
    %81 = arith.mulf %80, %77 : vector<36x16xf32>
    %82 = arith.select %79, %77, %81 : vector<36x16xi1>, vector<36x16xf32>
    %c0_59 = arith.constant 0 : index
    %c0_60 = arith.constant 0 : index
    %83 = vector.load %arg20[%c0_59, %c0_60] : memref<9x36xf32, #tpu.memory_space<vmem>>, vector<9x36xf32>
    %cst_61 = arith.constant dense<0.000000e+00> : vector<9x16xf32>
    %84 = tpu.matmul %83, %82, %cst_61 {dimension_numbers = #tpu.dot_dimension_numbers<[1], [0], [0], [1], [0, 0, 1, 1], [], []>} : vector<9x36xf32>, vector<36x16xf32>, vector<9x16xf32> -> vector<9x16xf32>
    %85 = arith.addf %72, %84 : vector<9x16xf32>
    %c0_62 = arith.constant 0 : index
    %c0_63 = arith.constant 0 : index
    %86 = vector.load %arg21[%c0_62, %c0_63] : memref<9x1xf32, #tpu.memory_space<vmem>>, vector<9x1xf32>
    %87 = vector.broadcast %86 : vector<9x1xf32> to vector<9x16xf32>
    %88 = arith.addf %85, %87 : vector<9x16xf32>
    %c0_64 = arith.constant 0 : index
    %c0_65 = arith.constant 0 : index
    %89 = vector.load %arg3[%c0_64, %c0_65] : memref<7x9xf32, #tpu.memory_space<vmem>>, vector<7x9xf32>
    %cst_66 = arith.constant dense<0.000000e+00> : vector<7x16xf32>
    %90 = tpu.matmul %89, %88, %cst_66 {dimension_numbers = #tpu.dot_dimension_numbers<[1], [0], [0], [1], [0, 0, 1, 1], [], []>} : vector<7x9xf32>, vector<9x16xf32>, vector<7x16xf32> -> vector<7x16xf32>
    %c0_67 = arith.constant 0 : index
    %c0_68 = arith.constant 0 : index
    %91 = vector.load %arg22[%c0_67, %c0_68] : memref<16x8xf32, #tpu.memory_space<vmem>>, vector<16x8xf32>
    %cst_69 = arith.constant dense<0.000000e+00> : vector<7x8xf32>
    %92 = tpu.matmul %90, %91, %cst_69 {dimension_numbers = #tpu.dot_dimension_numbers<[1], [0], [0], [1], [0, 0, 1, 1], [], []>} : vector<7x16xf32>, vector<16x8xf32>, vector<7x8xf32> -> vector<7x8xf32>
    %93 = arith.addf %18, %92 : vector<7x8xf32>
    %c0_70 = arith.constant 0 : index
    %c0_71 = arith.constant 0 : index
    %94 = vector.load %arg23[%c0_70, %c0_71] : memref<1x8xf32, #tpu.memory_space<vmem>>, vector<1x8xf32>
    %95 = vector.broadcast %94 : vector<1x8xf32> to vector<7x8xf32>
    %96 = arith.addf %93, %95 : vector<7x8xf32>
    %c0_72 = arith.constant 0 : index
    %c0_73 = arith.constant 0 : index
    %97 = vector.load %arg24[%c0_72, %c0_73] : memref<16x160xf32, #tpu.memory_space<vmem>>, vector<16x160xf32>
    %cst_74 = arith.constant dense<0.000000e+00> : vector<7x160xf32>
    %98 = tpu.matmul %17, %97, %cst_74 {dimension_numbers = #tpu.dot_dimension_numbers<[1], [0], [0], [1], [0, 0, 1, 1], [], []>} : vector<7x16xf32>, vector<16x160xf32>, vector<7x160xf32> -> vector<7x160xf32>
    %c0_75 = arith.constant 0 : index
    %c0_76 = arith.constant 0 : index
    %99 = vector.load %arg25[%c0_75, %c0_76] : memref<1x160xf32, #tpu.memory_space<vmem>>, vector<1x160xf32>
    %100 = vector.broadcast %99 : vector<1x160xf32> to vector<7x160xf32>
    %101 = arith.addf %98, %100 : vector<7x160xf32>
    %cst_77 = arith.constant 0.000000e+00 : f32
    %102 = vector.broadcast %cst_77 : f32 to vector<7x160xf32>
    %103 = arith.cmpf ogt, %101, %102 : vector<7x160xf32>
    %cst_78 = arith.constant 1.000000e-01 : f32
    %104 = vector.broadcast %cst_78 : f32 to vector<7x160xf32>
    %105 = arith.mulf %104, %101 : vector<7x160xf32>
    %106 = arith.select %103, %101, %105 : vector<7x160xi1>, vector<7x160xf32>
    %c0_79 = arith.constant 0 : index
    %c0_80 = arith.constant 0 : index
    %107 = vector.load %arg27[%c0_79, %c0_80] : memref<16x16xf32, #tpu.memory_space<vmem>>, vector<16x16xf32>
    %cst_81 = arith.constant dense<0.000000e+00> : vector<7x16xf32>
    %108 = tpu.matmul %17, %107, %cst_81 {dimension_numbers = #tpu.dot_dimension_numbers<[1], [0], [0], [1], [0, 0, 1, 1], [], []>} : vector<7x16xf32>, vector<16x16xf32>, vector<7x16xf32> -> vector<7x16xf32>
    %c0_82 = arith.constant 0 : index
    %c0_83 = arith.constant 0 : index
    %109 = vector.load %arg26[%c0_82, %c0_83] : memref<160x16xf32, #tpu.memory_space<vmem>>, vector<160x16xf32>
    %cst_84 = arith.constant dense<0.000000e+00> : vector<7x16xf32>
    %110 = tpu.matmul %106, %109, %cst_84 {dimension_numbers = #tpu.dot_dimension_numbers<[1], [0], [0], [1], [0, 0, 1, 1], [], []>} : vector<7x160xf32>, vector<160x16xf32>, vector<7x16xf32> -> vector<7x16xf32>
    %111 = arith.addf %108, %110 : vector<7x16xf32>
    %c0_85 = arith.constant 0 : index
    %c0_86 = arith.constant 0 : index
    %112 = vector.load %arg28[%c0_85, %c0_86] : memref<1x16xf32, #tpu.memory_space<vmem>>, vector<1x16xf32>
    %113 = vector.broadcast %112 : vector<1x16xf32> to vector<7x16xf32>
    %114 = arith.addf %111, %113 : vector<7x16xf32>
    %c0_87 = arith.constant 0 : index
    %c0_88 = arith.constant 0 : index
    %115 = vector.load %arg29[%c0_87, %c0_88] : memref<16x256xf32, #tpu.memory_space<vmem>>, vector<16x256xf32>
    %cst_89 = arith.constant dense<0.000000e+00> : vector<7x256xf32>
    %116 = tpu.matmul %114, %115, %cst_89 {dimension_numbers = #tpu.dot_dimension_numbers<[1], [0], [0], [1], [0, 0, 1, 1], [], []>} : vector<7x16xf32>, vector<16x256xf32>, vector<7x256xf32> -> vector<7x256xf32>
    %c0_90 = arith.constant 0 : index
    %c0_91 = arith.constant 0 : index
    %117 = vector.load %arg30[%c0_90, %c0_91] : memref<1x256xf32, #tpu.memory_space<vmem>>, vector<1x256xf32>
    %118 = vector.broadcast %117 : vector<1x256xf32> to vector<7x256xf32>
    %119 = arith.addf %116, %118 : vector<7x256xf32>
    %cst_92 = arith.constant 0.000000e+00 : f32
    %120 = vector.broadcast %cst_92 : f32 to vector<7x256xf32>
    %121 = arith.cmpf ogt, %119, %120 : vector<7x256xf32>
    %cst_93 = arith.constant 1.000000e-01 : f32
    %122 = vector.broadcast %cst_93 : f32 to vector<7x256xf32>
    %123 = arith.mulf %122, %119 : vector<7x256xf32>
    %124 = arith.select %121, %119, %123 : vector<7x256xi1>, vector<7x256xf32>
    %c0_94 = arith.constant 0 : index
    %c0_95 = arith.constant 0 : index
    %125 = vector.load %arg32[%c0_94, %c0_95] : memref<16x16xf32, #tpu.memory_space<vmem>>, vector<16x16xf32>
    %cst_96 = arith.constant dense<0.000000e+00> : vector<7x16xf32>
    %126 = tpu.matmul %114, %125, %cst_96 {dimension_numbers = #tpu.dot_dimension_numbers<[1], [0], [0], [1], [0, 0, 1, 1], [], []>} : vector<7x16xf32>, vector<16x16xf32>, vector<7x16xf32> -> vector<7x16xf32>
    %c0_97 = arith.constant 0 : index
    %c0_98 = arith.constant 0 : index
    %127 = vector.load %arg31[%c0_97, %c0_98] : memref<256x16xf32, #tpu.memory_space<vmem>>, vector<256x16xf32>
    %cst_99 = arith.constant dense<0.000000e+00> : vector<7x16xf32>
    %128 = tpu.matmul %124, %127, %cst_99 {dimension_numbers = #tpu.dot_dimension_numbers<[1], [0], [0], [1], [0, 0, 1, 1], [], []>} : vector<7x256xf32>, vector<256x16xf32>, vector<7x16xf32> -> vector<7x16xf32>
    %129 = arith.addf %126, %128 : vector<7x16xf32>
    %c0_100 = arith.constant 0 : index
    %c0_101 = arith.constant 0 : index
    %130 = vector.load %arg33[%c0_100, %c0_101] : memref<1x16xf32, #tpu.memory_space<vmem>>, vector<1x16xf32>
    %131 = vector.broadcast %130 : vector<1x16xf32> to vector<7x16xf32>
    %132 = arith.addf %129, %131 : vector<7x16xf32>
    %c0_102 = arith.constant 0 : index
    %c0_103 = arith.constant 0 : index
    %133 = vector.load %arg2[%c0_102, %c0_103] : memref<9x7xf32, #tpu.memory_space<vmem>>, vector<9x7xf32>
    %cst_104 = arith.constant dense<0.000000e+00> : vector<9x16xf32>
    %134 = tpu.matmul %133, %132, %cst_104 {dimension_numbers = #tpu.dot_dimension_numbers<[1], [0], [0], [1], [0, 0, 1, 1], [], []>} : vector<9x7xf32>, vector<7x16xf32>, vector<9x16xf32> -> vector<9x16xf32>
    %c0_105 = arith.constant 0 : index
    %c0_106 = arith.constant 0 : index
    %135 = vector.load %arg34[%c0_105, %c0_106] : memref<36x9xf32, #tpu.memory_space<vmem>>, vector<36x9xf32>
    %cst_107 = arith.constant dense<0.000000e+00> : vector<36x16xf32>
    %136 = tpu.matmul %135, %134, %cst_107 {dimension_numbers = #tpu.dot_dimension_numbers<[1], [0], [0], [1], [0, 0, 1, 1], [], []>} : vector<36x9xf32>, vector<9x16xf32>, vector<36x16xf32> -> vector<36x16xf32>
    %c0_108 = arith.constant 0 : index
    %c0_109 = arith.constant 0 : index
    %137 = vector.load %arg35[%c0_108, %c0_109] : memref<36x1xf32, #tpu.memory_space<vmem>>, vector<36x1xf32>
    %138 = vector.broadcast %137 : vector<36x1xf32> to vector<36x16xf32>
    %139 = arith.addf %136, %138 : vector<36x16xf32>
    %cst_110 = arith.constant 0.000000e+00 : f32
    %140 = vector.broadcast %cst_110 : f32 to vector<36x16xf32>
    %141 = arith.cmpf ogt, %139, %140 : vector<36x16xf32>
    %cst_111 = arith.constant 1.000000e-01 : f32
    %142 = vector.broadcast %cst_111 : f32 to vector<36x16xf32>
    %143 = arith.mulf %142, %139 : vector<36x16xf32>
    %144 = arith.select %141, %139, %143 : vector<36x16xi1>, vector<36x16xf32>
    %c0_112 = arith.constant 0 : index
    %c0_113 = arith.constant 0 : index
    %145 = vector.load %arg36[%c0_112, %c0_113] : memref<9x36xf32, #tpu.memory_space<vmem>>, vector<9x36xf32>
    %cst_114 = arith.constant dense<0.000000e+00> : vector<9x16xf32>
    %146 = tpu.matmul %145, %144, %cst_114 {dimension_numbers = #tpu.dot_dimension_numbers<[1], [0], [0], [1], [0, 0, 1, 1], [], []>} : vector<9x36xf32>, vector<36x16xf32>, vector<9x16xf32> -> vector<9x16xf32>
    %147 = arith.addf %134, %146 : vector<9x16xf32>
    %c0_115 = arith.constant 0 : index
    %c0_116 = arith.constant 0 : index
    %148 = vector.load %arg37[%c0_115, %c0_116] : memref<9x1xf32, #tpu.memory_space<vmem>>, vector<9x1xf32>
    %149 = vector.broadcast %148 : vector<9x1xf32> to vector<9x16xf32>
    %150 = arith.addf %147, %149 : vector<9x16xf32>
    %c0_117 = arith.constant 0 : index
    %c0_118 = arith.constant 0 : index
    %151 = vector.load %arg38[%c0_117, %c0_118] : memref<36x9xf32, #tpu.memory_space<vmem>>, vector<36x9xf32>
    %cst_119 = arith.constant dense<0.000000e+00> : vector<36x16xf32>
    %152 = tpu.matmul %151, %150, %cst_119 {dimension_numbers = #tpu.dot_dimension_numbers<[1], [0], [0], [1], [0, 0, 1, 1], [], []>} : vector<36x9xf32>, vector<9x16xf32>, vector<36x16xf32> -> vector<36x16xf32>
    %c0_120 = arith.constant 0 : index
    %c0_121 = arith.constant 0 : index
    %153 = vector.load %arg39[%c0_120, %c0_121] : memref<36x1xf32, #tpu.memory_space<vmem>>, vector<36x1xf32>
    %154 = vector.broadcast %153 : vector<36x1xf32> to vector<36x16xf32>
    %155 = arith.addf %152, %154 : vector<36x16xf32>
    %cst_122 = arith.constant 0.000000e+00 : f32
    %156 = vector.broadcast %cst_122 : f32 to vector<36x16xf32>
    %157 = arith.cmpf ogt, %155, %156 : vector<36x16xf32>
    %cst_123 = arith.constant 1.000000e-01 : f32
    %158 = vector.broadcast %cst_123 : f32 to vector<36x16xf32>
    %159 = arith.mulf %158, %155 : vector<36x16xf32>
    %160 = arith.select %157, %155, %159 : vector<36x16xi1>, vector<36x16xf32>
    %c0_124 = arith.constant 0 : index
    %c0_125 = arith.constant 0 : index
    %161 = vector.load %arg40[%c0_124, %c0_125] : memref<9x36xf32, #tpu.memory_space<vmem>>, vector<9x36xf32>
    %cst_126 = arith.constant dense<0.000000e+00> : vector<9x16xf32>
    %162 = tpu.matmul %161, %160, %cst_126 {dimension_numbers = #tpu.dot_dimension_numbers<[1], [0], [0], [1], [0, 0, 1, 1], [], []>} : vector<9x36xf32>, vector<36x16xf32>, vector<9x16xf32> -> vector<9x16xf32>
    %163 = arith.addf %150, %162 : vector<9x16xf32>
    %c0_127 = arith.constant 0 : index
    %c0_128 = arith.constant 0 : index
    %164 = vector.load %arg41[%c0_127, %c0_128] : memref<9x1xf32, #tpu.memory_space<vmem>>, vector<9x1xf32>
    %165 = vector.broadcast %164 : vector<9x1xf32> to vector<9x16xf32>
    %166 = arith.addf %163, %165 : vector<9x16xf32>
    %c0_129 = arith.constant 0 : index
    %c0_130 = arith.constant 0 : index
    %167 = vector.load %arg3[%c0_129, %c0_130] : memref<7x9xf32, #tpu.memory_space<vmem>>, vector<7x9xf32>
    %cst_131 = arith.constant dense<0.000000e+00> : vector<7x16xf32>
    %168 = tpu.matmul %167, %166, %cst_131 {dimension_numbers = #tpu.dot_dimension_numbers<[1], [0], [0], [1], [0, 0, 1, 1], [], []>} : vector<7x9xf32>, vector<9x16xf32>, vector<7x16xf32> -> vector<7x16xf32>
    %c0_132 = arith.constant 0 : index
    %c0_133 = arith.constant 0 : index
    %169 = vector.load %arg42[%c0_132, %c0_133] : memref<16x8xf32, #tpu.memory_space<vmem>>, vector<16x8xf32>
    %cst_134 = arith.constant dense<0.000000e+00> : vector<7x8xf32>
    %170 = tpu.matmul %168, %169, %cst_134 {dimension_numbers = #tpu.dot_dimension_numbers<[1], [0], [0], [1], [0, 0, 1, 1], [], []>} : vector<7x16xf32>, vector<16x8xf32>, vector<7x8xf32> -> vector<7x8xf32>
    %171 = arith.addf %96, %170 : vector<7x8xf32>
    %c0_135 = arith.constant 0 : index
    %c0_136 = arith.constant 0 : index
    %172 = vector.load %arg43[%c0_135, %c0_136] : memref<1x8xf32, #tpu.memory_space<vmem>>, vector<1x8xf32>
    %173 = vector.broadcast %172 : vector<1x8xf32> to vector<7x8xf32>
    %174 = arith.addf %171, %173 : vector<7x8xf32>
    %175 = vector.broadcast %15 : vector<7x1xf32> to vector<7x8xf32>
    %176 = arith.mulf %174, %175 : vector<7x8xf32>
    %177 = vector.broadcast %5 : vector<7x1xf32> to vector<7x8xf32>
    %178 = arith.addf %176, %177 : vector<7x8xf32>
    %c0_137 = arith.constant 0 : index
    %c0_138 = arith.constant 0 : index
    %c0_139 = arith.constant 0 : index
    %179 = vector.load %arg44[%c0_137, %c0_138, %c0_139] : memref<1x7x8xf32, #tpu.memory_space<vmem>>, vector<1x7x8xf32>
    %180 = vector.shape_cast %179 : vector<1x7x8xf32> to vector<7x8xf32>
    %181 = vector.shape_cast %178 : vector<7x8xf32> to vector<1x7x8xf32>
    tpu.vector_store %arg44[%c0_137, %c0_138, %c0_139], %181 {strides = array<i32>} : memref<1x7x8xf32, #tpu.memory_space<vmem>>, vector<1x7x8xf32>,
    return
  }
  func.func @transform_0(%arg0: i32) -> (i32, i32, i32) {
    %c0_i32 = arith.constant 0 : i32
    %c0_i32_0 = arith.constant 0 : i32
    %c0_i32_1 = arith.constant 0 : i32
    return %arg0, %c0_i32, %c0_i32_0 : i32, i32, i32
  }
  func.func @transform_1(%arg0: i32) -> (i32, i32) {
    %c0_i32 = arith.constant 0 : i32
    %c0_i32_0 = arith.constant 0 : i32
    %c0_i32_1 = arith.constant 0 : i32
    return %c0_i32, %c0_i32_0 : i32, i32
  }
  func.func @transform_2(%arg0: i32) -> (i32, i32) {
    %c0_i32 = arith.constant 0 : i32
    %c0_i32_0 = arith.constant 0 : i32
    %c0_i32_1 = arith.constant 0 : i32
    return %c0_i32, %c0_i32_0 : i32, i32
  }
  func.func @transform_3(%arg0: i32) -> (i32, i32) {
    %c0_i32 = arith.constant 0 : i32
    %c0_i32_0 = arith.constant 0 : i32
    %c0_i32_1 = arith.constant 0 : i32
    return %c0_i32, %c0_i32_0 : i32, i32
  }
  func.func @transform_4(%arg0: i32) -> (i32, i32) {
    %c0_i32 = arith.constant 0 : i32
    %c0_i32_0 = arith.constant 0 : i32
    %c0_i32_1 = arith.constant 0 : i32
    return %c0_i32, %c0_i32_0 : i32, i32
  }
  func.func @transform_5(%arg0: i32) -> (i32, i32) {
    %c0_i32 = arith.constant 0 : i32
    %c0_i32_0 = arith.constant 0 : i32
    %c0_i32_1 = arith.constant 0 : i32
    return %c0_i32, %c0_i32_0 : i32, i32
  }
  func.func @transform_6(%arg0: i32) -> (i32, i32) {
    %c0_i32 = arith.constant 0 : i32
    %c0_i32_0 = arith.constant 0 : i32
    %c0_i32_1 = arith.constant 0 : i32
    return %c0_i32, %c0_i32_0 : i32, i32
  }
  func.func @transform_7(%arg0: i32) -> (i32, i32) {
    %c0_i32 = arith.constant 0 : i32
    %c0_i32_0 = arith.constant 0 : i32
    %c0_i32_1 = arith.constant 0 : i32
    return %c0_i32, %c0_i32_0 : i32, i32
  }
  func.func @transform_8(%arg0: i32) -> (i32, i32) {
    %c0_i32 = arith.constant 0 : i32
    %c0_i32_0 = arith.constant 0 : i32
    %c0_i32_1 = arith.constant 0 : i32
    return %c0_i32, %c0_i32_0 : i32, i32
  }
  func.func @transform_9(%arg0: i32) -> (i32, i32) {
    %c0_i32 = arith.constant 0 : i32
    %c0_i32_0 = arith.constant 0 : i32
    %c0_i32_1 = arith.constant 0 : i32
    return %c0_i32, %c0_i32_0 : i32, i32
  }
  func.func @transform_10(%arg0: i32) -> (i32, i32) {
    %c0_i32 = arith.constant 0 : i32
    %c0_i32_0 = arith.constant 0 : i32
    %c0_i32_1 = arith.constant 0 : i32
    return %c0_i32, %c0_i32_0 : i32, i32
  }
  func.func @transform_11(%arg0: i32) -> (i32, i32) {
    %c0_i32 = arith.constant 0 : i32
    %c0_i32_0 = arith.constant 0 : i32
    %c0_i32_1 = arith.constant 0 : i32
    return %c0_i32, %c0_i32_0 : i32, i32
  }
  func.func @transform_12(%arg0: i32) -> (i32, i32) {
    %c0_i32 = arith.constant 0 : i32
    %c0_i32_0 = arith.constant 0 : i32
    %c0_i32_1 = arith.constant 0 : i32
    return %c0_i32, %c0_i32_0 : i32, i32
  }
  func.func @transform_13(%arg0: i32) -> (i32, i32) {
    %c0_i32 = arith.constant 0 : i32
    %c0_i32_0 = arith.constant 0 : i32
    %c0_i32_1 = arith.constant 0 : i32
    return %c0_i32, %c0_i32_0 : i32, i32
  }
  func.func @transform_14(%arg0: i32) -> (i32, i32) {
    %c0_i32 = arith.constant 0 : i32
    %c0_i32_0 = arith.constant 0 : i32
    %c0_i32_1 = arith.constant 0 : i32
    return %c0_i32, %c0_i32_0 : i32, i32
  }
  func.func @transform_15(%arg0: i32) -> (i32, i32) {
    %c0_i32 = arith.constant 0 : i32
    %c0_i32_0 = arith.constant 0 : i32
    %c0_i32_1 = arith.constant 0 : i32
    return %c0_i32, %c0_i32_0 : i32, i32
  }
  func.func @transform_16(%arg0: i32) -> (i32, i32) {
    %c0_i32 = arith.constant 0 : i32
    %c0_i32_0 = arith.constant 0 : i32
    %c0_i32_1 = arith.constant 0 : i32
    return %c0_i32, %c0_i32_0 : i32, i32
  }
  func.func @transform_17(%arg0: i32) -> (i32, i32) {
    %c0_i32 = arith.constant 0 : i32
    %c0_i32_0 = arith.constant 0 : i32
    %c0_i32_1 = arith.constant 0 : i32
    return %c0_i32, %c0_i32_0 : i32, i32
  }
  func.func @transform_18(%arg0: i32) -> (i32, i32) {
    %c0_i32 = arith.constant 0 : i32
    %c0_i32_0 = arith.constant 0 : i32
    %c0_i32_1 = arith.constant 0 : i32
    return %c0_i32, %c0_i32_0 : i32, i32
  }
  func.func @transform_19(%arg0: i32) -> (i32, i32) {
    %c0_i32 = arith.constant 0 : i32
    %c0_i32_0 = arith.constant 0 : i32
    %c0_i32_1 = arith.constant 0 : i32
    return %c0_i32, %c0_i32_0 : i32, i32
  }
  func.func @transform_20(%arg0: i32) -> (i32, i32) {
    %c0_i32 = arith.constant 0 : i32
    %c0_i32_0 = arith.constant 0 : i32
    %c0_i32_1 = arith.constant 0 : i32
    return %c0_i32, %c0_i32_0 : i32, i32
  }
  func.func @transform_21(%arg0: i32) -> (i32, i32) {
    %c0_i32 = arith.constant 0 : i32
    %c0_i32_0 = arith.constant 0 : i32
    %c0_i32_1 = arith.constant 0 : i32
    return %c0_i32, %c0_i32_0 : i32, i32
  }
  func.func @transform_22(%arg0: i32) -> (i32, i32) {
    %c0_i32 = arith.constant 0 : i32
    %c0_i32_0 = arith.constant 0 : i32
    %c0_i32_1 = arith.constant 0 : i32
    return %c0_i32, %c0_i32_0 : i32, i32
  }
  func.func @transform_23(%arg0: i32) -> (i32, i32) {
    %c0_i32 = arith.constant 0 : i32
    %c0_i32_0 = arith.constant 0 : i32
    %c0_i32_1 = arith.constant 0 : i32
    return %c0_i32, %c0_i32_0 : i32, i32
  }
  func.func @transform_24(%arg0: i32) -> (i32, i32) {
    %c0_i32 = arith.constant 0 : i32
    %c0_i32_0 = arith.constant 0 : i32
    %c0_i32_1 = arith.constant 0 : i32
    return %c0_i32, %c0_i32_0 : i32, i32
  }
  func.func @transform_25(%arg0: i32) -> (i32, i32) {
    %c0_i32 = arith.constant 0 : i32
    %c0_i32_0 = arith.constant 0 : i32
    %c0_i32_1 = arith.constant 0 : i32
    return %c0_i32, %c0_i32_0 : i32, i32
  }
  func.func @transform_26(%arg0: i32) -> (i32, i32) {
    %c0_i32 = arith.constant 0 : i32
    %c0_i32_0 = arith.constant 0 : i32
    %c0_i32_1 = arith.constant 0 : i32
    return %c0_i32, %c0_i32_0 : i32, i32
  }
  func.func @transform_27(%arg0: i32) -> (i32, i32) {
    %c0_i32 = arith.constant 0 : i32
    %c0_i32_0 = arith.constant 0 : i32
    %c0_i32_1 = arith.constant 0 : i32
    return %c0_i32, %c0_i32_0 : i32, i32
  }
  func.func @transform_28(%arg0: i32) -> (i32, i32) {
    %c0_i32 = arith.constant 0 : i32
    %c0_i32_0 = arith.constant 0 : i32
    %c0_i32_1 = arith.constant 0 : i32
    return %c0_i32, %c0_i32_0 : i32, i32
  }
  func.func @transform_29(%arg0: i32) -> (i32, i32) {
    %c0_i32 = arith.constant 0 : i32
    %c0_i32_0 = arith.constant 0 : i32
    %c0_i32_1 = arith.constant 0 : i32
    return %c0_i32, %c0_i32_0 : i32, i32
  }
  func.func @transform_30(%arg0: i32) -> (i32, i32) {
    %c0_i32 = arith.constant 0 : i32
    %c0_i32_0 = arith.constant 0 : i32
    %c0_i32_1 = arith.constant 0 : i32
    return %c0_i32, %c0_i32_0 : i32, i32
  }
  func.func @transform_31(%arg0: i32) -> (i32, i32) {
    %c0_i32 = arith.constant 0 : i32
    %c0_i32_0 = arith.constant 0 : i32
    %c0_i32_1 = arith.constant 0 : i32
    return %c0_i32, %c0_i32_0 : i32, i32
  }
  func.func @transform_32(%arg0: i32) -> (i32, i32) {
    %c0_i32 = arith.constant 0 : i32
    %c0_i32_0 = arith.constant 0 : i32
    %c0_i32_1 = arith.constant 0 : i32
    return %c0_i32, %c0_i32_0 : i32, i32
  }
  func.func @transform_33(%arg0: i32) -> (i32, i32) {
    %c0_i32 = arith.constant 0 : i32
    %c0_i32_0 = arith.constant 0 : i32
    %c0_i32_1 = arith.constant 0 : i32
    return %c0_i32, %c0_i32_0 : i32, i32
  }
  func.func @transform_34(%arg0: i32) -> (i32, i32) {
    %c0_i32 = arith.constant 0 : i32
    %c0_i32_0 = arith.constant 0 : i32
    %c0_i32_1 = arith.constant 0 : i32
    return %c0_i32, %c0_i32_0 : i32, i32
  }
  func.func @transform_35(%arg0: i32) -> (i32, i32) {
    %c0_i32 = arith.constant 0 : i32
    %c0_i32_0 = arith.constant 0 : i32
    %c0_i32_1 = arith.constant 0 : i32
    return %c0_i32, %c0_i32_0 : i32, i32
  }
  func.func @transform_36(%arg0: i32) -> (i32, i32) {
    %c0_i32 = arith.constant 0 : i32
    %c0_i32_0 = arith.constant 0 : i32
    %c0_i32_1 = arith.constant 0 : i32
    return %c0_i32, %c0_i32_0 : i32, i32
  }
  func.func @transform_37(%arg0: i32) -> (i32, i32) {
    %c0_i32 = arith.constant 0 : i32
    %c0_i32_0 = arith.constant 0 : i32
    %c0_i32_1 = arith.constant 0 : i32
    return %c0_i32, %c0_i32_0 : i32, i32
  }
  func.func @transform_38(%arg0: i32) -> (i32, i32) {
    %c0_i32 = arith.constant 0 : i32
    %c0_i32_0 = arith.constant 0 : i32
    %c0_i32_1 = arith.constant 0 : i32
    return %c0_i32, %c0_i32_0 : i32, i32
  }
  func.func @transform_39(%arg0: i32) -> (i32, i32) {
    %c0_i32 = arith.constant 0 : i32
    %c0_i32_0 = arith.constant 0 : i32
    %c0_i32_1 = arith.constant 0 : i32
    return %c0_i32, %c0_i32_0 : i32, i32
  }
  func.func @transform_40(%arg0: i32) -> (i32, i32) {
    %c0_i32 = arith.constant 0 : i32
    %c0_i32_0 = arith.constant 0 : i32
    %c0_i32_1 = arith.constant 0 : i32
    return %c0_i32, %c0_i32_0 : i32, i32
  }
  func.func @transform_41(%arg0: i32) -> (i32, i32) {
    %c0_i32 = arith.constant 0 : i32
    %c0_i32_0 = arith.constant 0 : i32
    %c0_i32_1 = arith.constant 0 : i32
    return %c0_i32, %c0_i32_0 : i32, i32
  }
  func.func @transform_42(%arg0: i32) -> (i32, i32) {
    %c0_i32 = arith.constant 0 : i32
    %c0_i32_0 = arith.constant 0 : i32
    %c0_i32_1 = arith.constant 0 : i32
    return %c0_i32, %c0_i32_0 : i32, i32
  }
  func.func @transform_43(%arg0: i32) -> (i32, i32, i32) {
    %c0_i32 = arith.constant 0 : i32
    %c0_i32_0 = arith.constant 0 : i32
    %c0_i32_1 = arith.constant 0 : i32
    return %arg0, %c0_i32, %c0_i32_0 : i32, i32, i32
  }
}

</mosaic_0001>

<llo_original>
// kernel: model_forward.1
$region0: #{model_forward.1}
  #allocation0 [shape = 'u32[]', space=smem, size = 0x4, offset = 0x4, fixed_abs, tag = 'smem constant byte address 0x4 - core index']
  #allocation1 [shape = 'u32[144,128]{1,0:T(1,128)}', space=vmem, size = 0x12000, scoped, tag = 'internal scratch']
  %s0 = inlined_call_operand.smem [shape: u32[44], index: -1, kind: input, shape index: {}]
  %s1 = sld [smem:[%s0]]
  %s2 = scalar_lea.smem %s0, 1
  %s3 = sld [smem:[%s2]]
  %s4 = scalar_lea.smem %s0, 2
  %s5 = sld [smem:[%s4]]
  %s6 = scalar_lea.smem %s0, 3
  %s7 = sld [smem:[%s6]]
  %s8 = scalar_lea.smem %s0, 4
  %s9 = sld [smem:[%s8]]
  %s10 = scalar_lea.smem %s0, 5
  %s11 = sld [smem:[%s10]]
  %s12 = scalar_lea.smem %s0, 6
  %s13 = sld [smem:[%s12]]
  %s14 = scalar_lea.smem %s0, 7
  %s15 = sld [smem:[%s14]]
  %s16 = scalar_lea.smem %s0, 8
  %s17 = sld [smem:[%s16]]
  %s18 = scalar_lea.smem %s0, 9
  %s19 = sld [smem:[%s18]]
  %s20 = scalar_lea.smem %s0, 10
  %s21 = sld [smem:[%s20]]
  %s22 = scalar_lea.smem %s0, 11
  %s23 = sld [smem:[%s22]]
  %s24 = scalar_lea.smem %s0, 12
  %s25 = sld [smem:[%s24]]
  %s26 = scalar_lea.smem %s0, 13
  %s27 = sld [smem:[%s26]]
  %s28 = scalar_lea.smem %s0, 14
  %s29 = sld [smem:[%s28]]
  %s30 = scalar_lea.smem %s0, 15
  %s31 = sld [smem:[%s30]]
  %s32 = scalar_lea.smem %s0, 16
  %s33 = sld [smem:[%s32]]
  %s34 = scalar_lea.smem %s0, 17
  %s35 = sld [smem:[%s34]]
  %s36 = scalar_lea.smem %s0, 18
  %s37 = sld [smem:[%s36]]
  %s38 = scalar_lea.smem %s0, 19
  %s39 = sld [smem:[%s38]]
  %s40 = scalar_lea.smem %s0, 20
  %s41 = sld [smem:[%s40]]
  %s42 = scalar_lea.smem %s0, 21
  %s43 = sld [smem:[%s42]]
  %s44 = scalar_lea.smem %s0, 22
  %s45 = sld [smem:[%s44]]
  %s46 = scalar_lea.smem %s0, 23
  %s47 = sld [smem:[%s46]]
  %s48 = scalar_lea.smem %s0, 24
  %s49 = sld [smem:[%s48]]
  %s50 = scalar_lea.smem %s0, 25
  %s51 = sld [smem:[%s50]]
  %s52 = scalar_lea.smem %s0, 26
  %s53 = sld [smem:[%s52]]
  %s54 = scalar_lea.smem %s0, 27
  %s55 = sld [smem:[%s54]]
  %s56 = scalar_lea.smem %s0, 28
  %s57 = sld [smem:[%s56]]
  %s58 = scalar_lea.smem %s0, 29
  %s59 = sld [smem:[%s58]]
  %s60 = scalar_lea.smem %s0, 30
  %s61 = sld [smem:[%s60]]
  %s62 = scalar_lea.smem %s0, 31
  %s63 = sld [smem:[%s62]]
  %s64 = scalar_lea.smem %s0, 32
  %s65 = sld [smem:[%s64]]
  %s66 = scalar_lea.smem %s0, 33
  %s67 = sld [smem:[%s66]]
  %s68 = scalar_lea.smem %s0, 34
  %s69 = sld [smem:[%s68]]
  %s70 = scalar_lea.smem %s0, 35
  %s71 = sld [smem:[%s70]]
  %s72 = scalar_lea.smem %s0, 36
  %s73 = sld [smem:[%s72]]
  %s74 = scalar_lea.smem %s0, 37
  %s75 = sld [smem:[%s74]]
  %s76 = scalar_lea.smem %s0, 38
  %s77 = sld [smem:[%s76]]
  %s78 = scalar_lea.smem %s0, 39
  %s79 = sld [smem:[%s78]]
  %s80 = scalar_lea.smem %s0, 40
  %s81 = sld [smem:[%s80]]
  %s82 = scalar_lea.smem %s0, 41
  %s83 = sld [smem:[%s82]]
  %s84 = scalar_lea.smem %s0, 42
  %s85 = sld [smem:[%s84]]
  %s86 = scalar_lea.smem %s0, 43
  %s87 = sld [smem:[%s86]]
  %s88 = sld [smem:[#allocation0]]
  $region205: #{model_forward.1} parent=0
    _
  %s90 = ssub.s32 1, %s88
  %s91 = scalar_select 0, %s90, %s88
  loop: start=0, step=1, limit=4
  $region2: #{model_forward.1} parent=0 // loop_pre_header
    _
  $region3: #{model_forward.1} parent=0 // loop_header
    %s93 = sphi 0, %s97
    %p94 = scmp.ge.s32.totalorder %s93, 4
    %s103 = sphi 0, %s105
    %s106 = sphi 0, %s103
    %s107 = sphi 0, %s106
    %s123 = sphi 0, %s107
    %s127 = sphi 0, %s127
    %s129 = sphi 0, %s127
    %s130 = sphi 0, %s129
    %s144 = sphi 0, %s130
    %s148 = sphi 0, %s148
    %s150 = sphi 0, %s148
    %s151 = sphi 0, %s150
    %s165 = sphi 0, %s151
    %s169 = sphi 0, %s169
    %s171 = sphi 0, %s169
    %s172 = sphi 0, %s171
    %s186 = sphi 0, %s172
    %s190 = sphi 0, %s190
    %s192 = sphi 0, %s190
    %s193 = sphi 0, %s192
    %s207 = sphi 0, %s193
    %s211 = sphi 0, %s211
    %s213 = sphi 0, %s211
    %s214 = sphi 0, %s213
    %s228 = sphi 0, %s214
    %s232 = sphi 0, %s232
    %s234 = sphi 0, %s232
    %s235 = sphi 0, %s234
    %s249 = sphi 0, %s235
    %s253 = sphi 0, %s253
    %s255 = sphi 0, %s253
    %s256 = sphi 0, %s255
    %s270 = sphi 0, %s256
    %s274 = sphi 0, %s274
    %s276 = sphi 0, %s274
    %s277 = sphi 0, %s276
    %s291 = sphi 0, %s277
    %s295 = sphi 0, %s295
    %s297 = sphi 0, %s295
    %s298 = sphi 0, %s297
    %s312 = sphi 0, %s298
    %s316 = sphi 0, %s316
    %s318 = sphi 0, %s316
    %s319 = sphi 0, %s318
    %s333 = sphi 0, %s319
    %s337 = sphi 0, %s337
    %s339 = sphi 0, %s337
    %s340 = sphi 0, %s339
    %s354 = sphi 0, %s340
    %s358 = sphi 0, %s358
    %s360 = sphi 0, %s358
    %s361 = sphi 0, %s360
    %s375 = sphi 0, %s361
    %s379 = sphi 0, %s379
    %s381 = sphi 0, %s379
    %s382 = sphi 0, %s381
    %s396 = sphi 0, %s382
    %s400 = sphi 0, %s400
    %s402 = sphi 0, %s400
    %s403 = sphi 0, %s402
    %s417 = sphi 0, %s403
    %s421 = sphi 0, %s421
    %s423 = sphi 0, %s421
    %s424 = sphi 0, %s423
    %s438 = sphi 0, %s424
    %s442 = sphi 0, %s442
    %s444 = sphi 0, %s442
    %s445 = sphi 0, %s444
    %s459 = sphi 0, %s445
    %s463 = sphi 0, %s463
    %s465 = sphi 0, %s463
    %s466 = sphi 0, %s465
    %s480 = sphi 0, %s466
    %s484 = sphi 0, %s484
    %s486 = sphi 0, %s484
    %s487 = sphi 0, %s486
    %s501 = sphi 0, %s487
    %s505 = sphi 0, %s505
    %s507 = sphi 0, %s505
    %s508 = sphi 0, %s507
    %s522 = sphi 0, %s508
    %s526 = sphi 0, %s526
    %s528 = sphi 0, %s526
    %s529 = sphi 0, %s528
    %s543 = sphi 0, %s529
    %s547 = sphi 0, %s547
    %s549 = sphi 0, %s547
    %s550 = sphi 0, %s549
    %s564 = sphi 0, %s550
    %s568 = sphi 0, %s568
    %s570 = sphi 0, %s568
    %s571 = sphi 0, %s570
    %s585 = sphi 0, %s571
    %s589 = sphi 0, %s589
    %s591 = sphi 0, %s589
    %s592 = sphi 0, %s591
    %s606 = sphi 0, %s592
    %s610 = sphi 0, %s610
    %s612 = sphi 0, %s610
    %s613 = sphi 0, %s612
    %s627 = sphi 0, %s613
    %s631 = sphi 0, %s631
    %s633 = sphi 0, %s631
    %s634 = sphi 0, %s633
    %s648 = sphi 0, %s634
    %s652 = sphi 0, %s652
    %s654 = sphi 0, %s652
    %s655 = sphi 0, %s654
    %s669 = sphi 0, %s655
    %s673 = sphi 0, %s673
    %s675 = sphi 0, %s673
    %s676 = sphi 0, %s675
    %s690 = sphi 0, %s676
    %s694 = sphi 0, %s694
    %s696 = sphi 0, %s694
    %s697 = sphi 0, %s696
    %s711 = sphi 0, %s697
    %s715 = sphi 0, %s715
    %s717 = sphi 0, %s715
    %s718 = sphi 0, %s717
    %s732 = sphi 0, %s718
    %s736 = sphi 0, %s736
    %s738 = sphi 0, %s736
    %s739 = sphi 0, %s738
    %s753 = sphi 0, %s739
    %s757 = sphi 0, %s757
    %s759 = sphi 0, %s757
    %s760 = sphi 0, %s759
    %s774 = sphi 0, %s760
    %s778 = sphi 0, %s778
    %s780 = sphi 0, %s778
    %s781 = sphi 0, %s780
    %s795 = sphi 0, %s781
    %s799 = sphi 0, %s799
    %s801 = sphi 0, %s799
    %s802 = sphi 0, %s801
    %s816 = sphi 0, %s802
    %s820 = sphi 0, %s820
    %s822 = sphi 0, %s820
    %s823 = sphi 0, %s822
    %s837 = sphi 0, %s823
    %s841 = sphi 0, %s841
    %s843 = sphi 0, %s841
    %s844 = sphi 0, %s843
    %s858 = sphi 0, %s844
    %s862 = sphi 0, %s862
    %s864 = sphi 0, %s862
    %s865 = sphi 0, %s864
    %s879 = sphi 0, %s865
    %s883 = sphi 0, %s883
    %s885 = sphi 0, %s883
    %s886 = sphi 0, %s885
    %s900 = sphi 0, %s886
    %s904 = sphi 0, %s904
    %s906 = sphi 0, %s904
    %s907 = sphi 0, %s906
    %s921 = sphi 0, %s907
    %s925 = sphi 0, %s925
    %s927 = sphi 0, %s925
    %s928 = sphi 0, %s927
    %s942 = sphi 0, %s928
    %s946 = sphi 0, %s946
    %s948 = sphi 0, %s946
    %s949 = sphi 0, %s948
    %s963 = sphi 0, %s949
    %s967 = sphi 0, %s967
    %s969 = sphi 0, %s967
    %s970 = sphi 0, %s969
    %s984 = sphi 0, %s970
    %s988 = sphi 0, %s988
    %s990 = sphi 0, %s988
    %s991 = sphi 0, %s990
    %s1005 = sphi 0, %s991
    %s1011 = sphi 0, %s1013
    %s1014 = sphi 0, %s1011
    %s1015 = sphi 0, %s1014
    %s1031 = sphi 0, %s1015
  $region4: #{model_forward.1} parent=0 // loop_header_branch
    %96 = sbr.rel (%p94) target = $region8
  $region5: #{model_forward.1} parent=0 // loop_body
    %s98 = ssub.s32 %s93, 1
    %s99 = ssub.s32 %s93, 2
    %s100 = sadd.s32 %s93, 1
    %s101 = ssub.s32 %s93, %s100
    %p102 = scmp.eq.s32.totalorder %s101, 0
    %s104 = sadd.s32 %s103, 1
    %s105 = scalar_select %p102, %s103, %s104
    %p108 = pneg %p102
    %p109 = scmp.eq.s32.totalorder %s93, 1
    %p110 = por %p108, %p109
    %p111 = scmp.ne.s32.totalorder %s103, %s106
    %p112 = scmp.eq.s32.totalorder %s93, 0
    %p113 = por %p111, %p112
    %p114 = scmp.ne.s32.totalorder %s103, %s106
    %p115 = scmp.eq.s32.totalorder %s98, 1
    %p116 = por %p114, %p115
    %p117 = scmp.ne.s32.totalorder %s106, %s107
    %p118 = scmp.eq.s32.totalorder %s98, 0
    %p119 = por %p117, %p118
    %p120 = scmp.ne.s32.totalorder %s106, %s107
    %p121 = scmp.eq.s32.totalorder %s99, 1
    %p122 = por %p120, %p121
    %p124 = scmp.ne.s32.totalorder %s107, %s123
    %p125 = scmp.eq.s32.totalorder %s99, 0
    %p126 = por %p124, %p125
    %s128 = sadd.s32 %s127, 1
    %p131 = scmp.eq.s32.totalorder %s93, 1
    %p132 = scmp.ne.s32.totalorder %s127, %s129
    %p133 = scmp.eq.s32.totalorder %s93, 0
    %p134 = por %p132, %p133
    %p135 = scmp.ne.s32.totalorder %s127, %s129
    %p136 = scmp.eq.s32.totalorder %s98, 1
    %p137 = por %p135, %p136
    %p138 = scmp.ne.s32.totalorder %s129, %s130
    %p139 = scmp.eq.s32.totalorder %s98, 0
    %p140 = por %p138, %p139
    %p141 = scmp.ne.s32.totalorder %s129, %s130
    %p142 = scmp.eq.s32.totalorder %s99, 1
    %p143 = por %p141, %p142
    %p145 = scmp.ne.s32.totalorder %s130, %s144
    %p146 = scmp.eq.s32.totalorder %s99, 0
    %p147 = por %p145, %p146
    %s149 = sadd.s32 %s148, 1
    %p152 = scmp.eq.s32.totalorder %s93, 1
    %p153 = scmp.ne.s32.totalorder %s148, %s150
    %p154 = scmp.eq.s32.totalorder %s93, 0
    %p155 = por %p153, %p154
    %p156 = scmp.ne.s32.totalorder %s148, %s150
    %p157 = scmp.eq.s32.totalorder %s98, 1
    %p158 = por %p156, %p157
    %p159 = scmp.ne.s32.totalorder %s150, %s151
    %p160 = scmp.eq.s32.totalorder %s98, 0
    %p161 = por %p159, %p160
    %p162 = scmp.ne.s32.totalorder %s150, %s151
    %p163 = scmp.eq.s32.totalorder %s99, 1
    %p164 = por %p162, %p163
    %p166 = scmp.ne.s32.totalorder %s151, %s165
    %p167 = scmp.eq.s32.totalorder %s99, 0
    %p168 = por %p166, %p167
    %s170 = sadd.s32 %s169, 1
    %p173 = scmp.eq.s32.totalorder %s93, 1
    %p174 = scmp.ne.s32.totalorder %s169, %s171
    %p175 = scmp.eq.s32.totalorder %s93, 0
    %p176 = por %p174, %p175
    %p177 = scmp.ne.s32.totalorder %s169, %s171
    %p178 = scmp.eq.s32.totalorder %s98, 1
    %p179 = por %p177, %p178
    %p180 = scmp.ne.s32.totalorder %s171, %s172
    %p181 = scmp.eq.s32.totalorder %s98, 0
    %p182 = por %p180, %p181
    %p183 = scmp.ne.s32.totalorder %s171, %s172
    %p184 = scmp.eq.s32.totalorder %s99, 1
    %p185 = por %p183, %p184
    %p187 = scmp.ne.s32.totalorder %s172, %s186
    %p188 = scmp.eq.s32.totalorder %s99, 0
    %p189 = por %p187, %p188
    %s191 = sadd.s32 %s190, 1
    %p194 = scmp.eq.s32.totalorder %s93, 1
    %p195 = scmp.ne.s32.totalorder %s190, %s192
    %p196 = scmp.eq.s32.totalorder %s93, 0
    %p197 = por %p195, %p196
    %p198 = scmp.ne.s32.totalorder %s190, %s192
    %p199 = scmp.eq.s32.totalorder %s98, 1
    %p200 = por %p198, %p199
    %p201 = scmp.ne.s32.totalorder %s192, %s193
    %p202 = scmp.eq.s32.totalorder %s98, 0
    %p203 = por %p201, %p202
    %p204 = scmp.ne.s32.totalorder %s192, %s193
    %p205 = scmp.eq.s32.totalorder %s99, 1
    %p206 = por %p204, %p205
    %p208 = scmp.ne.s32.totalorder %s193, %s207
    %p209 = scmp.eq.s32.totalorder %s99, 0
    %p210 = por %p208, %p209
    %s212 = sadd.s32 %s211, 1
    %p215 = scmp.eq.s32.totalorder %s93, 1
    %p216 = scmp.ne.s32.totalorder %s211, %s213
    %p217 = scmp.eq.s32.totalorder %s93, 0
    %p218 = por %p216, %p217
    %p219 = scmp.ne.s32.totalorder %s211, %s213
    %p220 = scmp.eq.s32.totalorder %s98, 1
    %p221 = por %p219, %p220
    %p222 = scmp.ne.s32.totalorder %s213, %s214
    %p223 = scmp.eq.s32.totalorder %s98, 0
    %p224 = por %p222, %p223
    %p225 = scmp.ne.s32.totalorder %s213, %s214
    %p226 = scmp.eq.s32.totalorder %s99, 1
    %p227 = por %p225, %p226
    %p229 = scmp.ne.s32.totalorder %s214, %s228
    %p230 = scmp.eq.s32.totalorder %s99, 0
    %p231 = por %p229, %p230
    %s233 = sadd.s32 %s232, 1
    %p236 = scmp.eq.s32.totalorder %s93, 1
    %p237 = scmp.ne.s32.totalorder %s232, %s234
    %p238 = scmp.eq.s32.totalorder %s93, 0
    %p239 = por %p237, %p238
    %p240 = scmp.ne.s32.totalorder %s232, %s234
    %p241 = scmp.eq.s32.totalorder %s98, 1
    %p242 = por %p240, %p241
    %p243 = scmp.ne.s32.totalorder %s234, %s235
    %p244 = scmp.eq.s32.totalorder %s98, 0
    %p245 = por %p243, %p244
    %p246 = scmp.ne.s32.totalorder %s234, %s235
    %p247 = scmp.eq.s32.totalorder %s99, 1
    %p248 = por %p246, %p247
    %p250 = scmp.ne.s32.totalorder %s235, %s249
    %p251 = scmp.eq.s32.totalorder %s99, 0
    %p252 = por %p250, %p251
    %s254 = sadd.s32 %s253, 1
    %p257 = scmp.eq.s32.totalorder %s93, 1
    %p258 = scmp.ne.s32.totalorder %s253, %s255
    %p259 = scmp.eq.s32.totalorder %s93, 0
    %p260 = por %p258, %p259
    %p261 = scmp.ne.s32.totalorder %s253, %s255
    %p262 = scmp.eq.s32.totalorder %s98, 1
    %p263 = por %p261, %p262
    %p264 = scmp.ne.s32.totalorder %s255, %s256
    %p265 = scmp.eq.s32.totalorder %s98, 0
    %p266 = por %p264, %p265
    %p267 = scmp.ne.s32.totalorder %s255, %s256
    %p268 = scmp.eq.s32.totalorder %s99, 1
    %p269 = por %p267, %p268
    %p271 = scmp.ne.s32.totalorder %s256, %s270
    %p272 = scmp.eq.s32.totalorder %s99, 0
    %p273 = por %p271, %p272
    %s275 = sadd.s32 %s274, 1
    %p278 = scmp.eq.s32.totalorder %s93, 1
    %p279 = scmp.ne.s32.totalorder %s274, %s276
    %p280 = scmp.eq.s32.totalorder %s93, 0
    %p281 = por %p279, %p280
    %p282 = scmp.ne.s32.totalorder %s274, %s276
    %p283 = scmp.eq.s32.totalorder %s98, 1
    %p284 = por %p282, %p283
    %p285 = scmp.ne.s32.totalorder %s276, %s277
    %p286 = scmp.eq.s32.totalorder %s98, 0
    %p287 = por %p285, %p286
    %p288 = scmp.ne.s32.totalorder %s276, %s277
    %p289 = scmp.eq.s32.totalorder %s99, 1
    %p290 = por %p288, %p289
    %p292 = scmp.ne.s32.totalorder %s277, %s291
    %p293 = scmp.eq.s32.totalorder %s99, 0
    %p294 = por %p292, %p293
    %s296 = sadd.s32 %s295, 1
    %p299 = scmp.eq.s32.totalorder %s93, 1
    %p300 = scmp.ne.s32.totalorder %s295, %s297
    %p301 = scmp.eq.s32.totalorder %s93, 0
    %p302 = por %p300, %p301
    %p303 = scmp.ne.s32.totalorder %s295, %s297
    %p304 = scmp.eq.s32.totalorder %s98, 1
    %p305 = por %p303, %p304
    %p306 = scmp.ne.s32.totalorder %s297, %s298
    %p307 = scmp.eq.s32.totalorder %s98, 0
    %p308 = por %p306, %p307
    %p309 = scmp.ne.s32.totalorder %s297, %s298
    %p310 = scmp.eq.s32.totalorder %s99, 1
    %p311 = por %p309, %p310
    %p313 = scmp.ne.s32.totalorder %s298, %s312
    %p314 = scmp.eq.s32.totalorder %s99, 0
    %p315 = por %p313, %p314
    %s317 = sadd.s32 %s316, 1
    %p320 = scmp.eq.s32.totalorder %s93, 1
    %p321 = scmp.ne.s32.totalorder %s316, %s318
    %p322 = scmp.eq.s32.totalorder %s93, 0
    %p323 = por %p321, %p322
    %p324 = scmp.ne.s32.totalorder %s316, %s318
    %p325 = scmp.eq.s32.totalorder %s98, 1
    %p326 = por %p324, %p325
    %p327 = scmp.ne.s32.totalorder %s318, %s319
    %p328 = scmp.eq.s32.totalorder %s98, 0
    %p329 = por %p327, %p328
    %p330 = scmp.ne.s32.totalorder %s318, %s319
    %p331 = scmp.eq.s32.totalorder %s99, 1
    %p332 = por %p330, %p331
    %p334 = scmp.ne.s32.totalorder %s319, %s333
    %p335 = scmp.eq.s32.totalorder %s99, 0
    %p336 = por %p334, %p335
    %s338 = sadd.s32 %s337, 1
    %p341 = scmp.eq.s32.totalorder %s93, 1
    %p342 = scmp.ne.s32.totalorder %s337, %s339
    %p343 = scmp.eq.s32.totalorder %s93, 0
    %p344 = por %p342, %p343
    %p345 = scmp.ne.s32.totalorder %s337, %s339
    %p346 = scmp.eq.s32.totalorder %s98, 1
    %p347 = por %p345, %p346
    %p348 = scmp.ne.s32.totalorder %s339, %s340
    %p349 = scmp.eq.s32.totalorder %s98, 0
    %p350 = por %p348, %p349
    %p351 = scmp.ne.s32.totalorder %s339, %s340
    %p352 = scmp.eq.s32.totalorder %s99, 1
    %p353 = por %p351, %p352
    %p355 = scmp.ne.s32.totalorder %s340, %s354
    %p356 = scmp.eq.s32.totalorder %s99, 0
    %p357 = por %p355, %p356
    %s359 = sadd.s32 %s358, 1
    %p362 = scmp.eq.s32.totalorder %s93, 1
    %p363 = scmp.ne.s32.totalorder %s358, %s360
    %p364 = scmp.eq.s32.totalorder %s93, 0
    %p365 = por %p363, %p364
    %p366 = scmp.ne.s32.totalorder %s358, %s360
    %p367 = scmp.eq.s32.totalorder %s98, 1
    %p368 = por %p366, %p367
    %p369 = scmp.ne.s32.totalorder %s360, %s361
    %p370 = scmp.eq.s32.totalorder %s98, 0
    %p371 = por %p369, %p370
    %p372 = scmp.ne.s32.totalorder %s360, %s361
    %p373 = scmp.eq.s32.totalorder %s99, 1
    %p374 = por %p372, %p373
    %p376 = scmp.ne.s32.totalorder %s361, %s375
    %p377 = scmp.eq.s32.totalorder %s99, 0
    %p378 = por %p376, %p377
    %s380 = sadd.s32 %s379, 1
    %p383 = scmp.eq.s32.totalorder %s93, 1
    %p384 = scmp.ne.s32.totalorder %s379, %s381
    %p385 = scmp.eq.s32.totalorder %s93, 0
    %p386 = por %p384, %p385
    %p387 = scmp.ne.s32.totalorder %s379, %s381
    %p388 = scmp.eq.s32.totalorder %s98, 1
    %p389 = por %p387, %p388
    %p390 = scmp.ne.s32.totalorder %s381, %s382
    %p391 = scmp.eq.s32.totalorder %s98, 0
    %p392 = por %p390, %p391
    %p393 = scmp.ne.s32.totalorder %s381, %s382
    %p394 = scmp.eq.s32.totalorder %s99, 1
    %p395 = por %p393, %p394
    %p397 = scmp.ne.s32.totalorder %s382, %s396
    %p398 = scmp.eq.s32.totalorder %s99, 0
    %p399 = por %p397, %p398
    %s401 = sadd.s32 %s400, 1
    %p404 = scmp.eq.s32.totalorder %s93, 1
    %p405 = scmp.ne.s32.totalorder %s400, %s402
    %p406 = scmp.eq.s32.totalorder %s93, 0
    %p407 = por %p405, %p406
    %p408 = scmp.ne.s32.totalorder %s400, %s402
    %p409 = scmp.eq.s32.totalorder %s98, 1
    %p410 = por %p408, %p409
    %p411 = scmp.ne.s32.totalorder %s402, %s403
    %p412 = scmp.eq.s32.totalorder %s98, 0
    %p413 = por %p411, %p412
    %p414 = scmp.ne.s32.totalorder %s402, %s403
    %p415 = scmp.eq.s32.totalorder %s99, 1
    %p416 = por %p414, %p415
    %p418 = scmp.ne.s32.totalorder %s403, %s417
    %p419 = scmp.eq.s32.totalorder %s99, 0
    %p420 = por %p418, %p419
    %s422 = sadd.s32 %s421, 1
    %p425 = scmp.eq.s32.totalorder %s93, 1
    %p426 = scmp.ne.s32.totalorder %s421, %s423
    %p427 = scmp.eq.s32.totalorder %s93, 0
    %p428 = por %p426, %p427
    %p429 = scmp.ne.s32.totalorder %s421, %s423
    %p430 = scmp.eq.s32.totalorder %s98, 1
    %p431 = por %p429, %p430
    %p432 = scmp.ne.s32.totalorder %s423, %s424
    %p433 = scmp.eq.s32.totalorder %s98, 0
    %p434 = por %p432, %p433
    %p435 = scmp.ne.s32.totalorder %s423, %s424
    %p436 = scmp.eq.s32.totalorder %s99, 1
    %p437 = por %p435, %p436
    %p439 = scmp.ne.s32.totalorder %s424, %s438
    %p440 = scmp.eq.s32.totalorder %s99, 0
    %p441 = por %p439, %p440
    %s443 = sadd.s32 %s442, 1
    %p446 = scmp.eq.s32.totalorder %s93, 1
    %p447 = scmp.ne.s32.totalorder %s442, %s444
    %p448 = scmp.eq.s32.totalorder %s93, 0
    %p449 = por %p447, %p448
    %p450 = scmp.ne.s32.totalorder %s442, %s444
    %p451 = scmp.eq.s32.totalorder %s98, 1
    %p452 = por %p450, %p451
    %p453 = scmp.ne.s32.totalorder %s444, %s445
    %p454 = scmp.eq.s32.totalorder %s98, 0
    %p455 = por %p453, %p454
    %p456 = scmp.ne.s32.totalorder %s444, %s445
    %p457 = scmp.eq.s32.totalorder %s99, 1
    %p458 = por %p456, %p457
    %p460 = scmp.ne.s32.totalorder %s445, %s459
    %p461 = scmp.eq.s32.totalorder %s99, 0
    %p462 = por %p460, %p461
    %s464 = sadd.s32 %s463, 1
    %p467 = scmp.eq.s32.totalorder %s93, 1
    %p468 = scmp.ne.s32.totalorder %s463, %s465
    %p469 = scmp.eq.s32.totalorder %s93, 0
    %p470 = por %p468, %p469
    %p471 = scmp.ne.s32.totalorder %s463, %s465
    %p472 = scmp.eq.s32.totalorder %s98, 1
    %p473 = por %p471, %p472
    %p474 = scmp.ne.s32.totalorder %s465, %s466
    %p475 = scmp.eq.s32.totalorder %s98, 0
    %p476 = por %p474, %p475
    %p477 = scmp.ne.s32.totalorder %s465, %s466
    %p478 = scmp.eq.s32.totalorder %s99, 1
    %p479 = por %p477, %p478
    %p481 = scmp.ne.s32.totalorder %s466, %s480
    %p482 = scmp.eq.s32.totalorder %s99, 0
    %p483 = por %p481, %p482
    %s485 = sadd.s32 %s484, 1
    %p488 = scmp.eq.s32.totalorder %s93, 1
    %p489 = scmp.ne.s32.totalorder %s484, %s486
    %p490 = scmp.eq.s32.totalorder %s93, 0
    %p491 = por %p489, %p490
    %p492 = scmp.ne.s32.totalorder %s484, %s486
    %p493 = scmp.eq.s32.totalorder %s98, 1
    %p494 = por %p492, %p493
    %p495 = scmp.ne.s32.totalorder %s486, %s487
    %p496 = scmp.eq.s32.totalorder %s98, 0
    %p497 = por %p495, %p496
    %p498 = scmp.ne.s32.totalorder %s486, %s487
    %p499 = scmp.eq.s32.totalorder %s99, 1
    %p500 = por %p498, %p499
    %p502 = scmp.ne.s32.totalorder %s487, %s501
    %p503 = scmp.eq.s32.totalorder %s99, 0
    %p504 = por %p502, %p503
    %s506 = sadd.s32 %s505, 1
    %p509 = scmp.eq.s32.totalorder %s93, 1
    %p510 = scmp.ne.s32.totalorder %s505, %s507
    %p511 = scmp.eq.s32.totalorder %s93, 0
    %p512 = por %p510, %p511
    %p513 = scmp.ne.s32.totalorder %s505, %s507
    %p514 = scmp.eq.s32.totalorder %s98, 1
    %p515 = por %p513, %p514
    %p516 = scmp.ne.s32.totalorder %s507, %s508
    %p517 = scmp.eq.s32.totalorder %s98, 0
    %p518 = por %p516, %p517
    %p519 = scmp.ne.s32.totalorder %s507, %s508
    %p520 = scmp.eq.s32.totalorder %s99, 1
    %p521 = por %p519, %p520
    %p523 = scmp.ne.s32.totalorder %s508, %s522
    %p524 = scmp.eq.s32.totalorder %s99, 0
    %p525 = por %p523, %p524
    %s527 = sadd.s32 %s526, 1
    %p530 = scmp.eq.s32.totalorder %s93, 1
    %p531 = scmp.ne.s32.totalorder %s526, %s528
    %p532 = scmp.eq.s32.totalorder %s93, 0
    %p533 = por %p531, %p532
    %p534 = scmp.ne.s32.totalorder %s526, %s528
    %p535 = scmp.eq.s32.totalorder %s98, 1
    %p536 = por %p534, %p535
    %p537 = scmp.ne.s32.totalorder %s528, %s529
    %p538 = scmp.eq.s32.totalorder %s98, 0
    %p539 = por %p537, %p538
    %p540 = scmp.ne.s32.totalorder %s528, %s529
    %p541 = scmp.eq.s32.totalorder %s99, 1
    %p542 = por %p540, %p541
    %p544 = scmp.ne.s32.totalorder %s529, %s543
    %p545 = scmp.eq.s32.totalorder %s99, 0
    %p546 = por %p544, %p545
    %s548 = sadd.s32 %s547, 1
    %p551 = scmp.eq.s32.totalorder %s93, 1
    %p552 = scmp.ne.s32.totalorder %s547, %s549
    %p553 = scmp.eq.s32.totalorder %s93, 0
    %p554 = por %p552, %p553
    %p555 = scmp.ne.s32.totalorder %s547, %s549
    %p556 = scmp.eq.s32.totalorder %s98, 1
    %p557 = por %p555, %p556
    %p558 = scmp.ne.s32.totalorder %s549, %s550
    %p559 = scmp.eq.s32.totalorder %s98, 0
    %p560 = por %p558, %p559
    %p561 = scmp.ne.s32.totalorder %s549, %s550
    %p562 = scmp.eq.s32.totalorder %s99, 1
    %p563 = por %p561, %p562
    %p565 = scmp.ne.s32.totalorder %s550, %s564
    %p566 = scmp.eq.s32.totalorder %s99, 0
    %p567 = por %p565, %p566
    %s569 = sadd.s32 %s568, 1
    %p572 = scmp.eq.s32.totalorder %s93, 1
    %p573 = scmp.ne.s32.totalorder %s568, %s570
    %p574 = scmp.eq.s32.totalorder %s93, 0
    %p575 = por %p573, %p574
    %p576 = scmp.ne.s32.totalorder %s568, %s570
    %p577 = scmp.eq.s32.totalorder %s98, 1
    %p578 = por %p576, %p577
    %p579 = scmp.ne.s32.totalorder %s570, %s571
    %p580 = scmp.eq.s32.totalorder %s98, 0
    %p581 = por %p579, %p580
    %p582 = scmp.ne.s32.totalorder %s570, %s571
    %p583 = scmp.eq.s32.totalorder %s99, 1
    %p584 = por %p582, %p583
    %p586 = scmp.ne.s32.totalorder %s571, %s585
    %p587 = scmp.eq.s32.totalorder %s99, 0
    %p588 = por %p586, %p587
    %s590 = sadd.s32 %s589, 1
    %p593 = scmp.eq.s32.totalorder %s93, 1
    %p594 = scmp.ne.s32.totalorder %s589, %s591
    %p595 = scmp.eq.s32.totalorder %s93, 0
    %p596 = por %p594, %p595
    %p597 = scmp.ne.s32.totalorder %s589, %s591
    %p598 = scmp.eq.s32.totalorder %s98, 1
    %p599 = por %p597, %p598
    %p600 = scmp.ne.s32.totalorder %s591, %s592
    %p601 = scmp.eq.s32.totalorder %s98, 0
    %p602 = por %p600, %p601
    %p603 = scmp.ne.s32.totalorder %s591, %s592
    %p604 = scmp.eq.s32.totalorder %s99, 1
    %p605 = por %p603, %p604
    %p607 = scmp.ne.s32.totalorder %s592, %s606
    %p608 = scmp.eq.s32.totalorder %s99, 0
    %p609 = por %p607, %p608
    %s611 = sadd.s32 %s610, 1
    %p614 = scmp.eq.s32.totalorder %s93, 1
    %p615 = scmp.ne.s32.totalorder %s610, %s612
    %p616 = scmp.eq.s32.totalorder %s93, 0
    %p617 = por %p615, %p616
    %p618 = scmp.ne.s32.totalorder %s610, %s612
    %p619 = scmp.eq.s32.totalorder %s98, 1
    %p620 = por %p618, %p619
    %p621 = scmp.ne.s32.totalorder %s612, %s613
    %p622 = scmp.eq.s32.totalorder %s98, 0
    %p623 = por %p621, %p622
    %p624 = scmp.ne.s32.totalorder %s612, %s613
    %p625 = scmp.eq.s32.totalorder %s99, 1
    %p626 = por %p624, %p625
    %p628 = scmp.ne.s32.totalorder %s613, %s627
    %p629 = scmp.eq.s32.totalorder %s99, 0
    %p630 = por %p628, %p629
    %s632 = sadd.s32 %s631, 1
    %p635 = scmp.eq.s32.totalorder %s93, 1
    %p636 = scmp.ne.s32.totalorder %s631, %s633
    %p637 = scmp.eq.s32.totalorder %s93, 0
    %p638 = por %p636, %p637
    %p639 = scmp.ne.s32.totalorder %s631, %s633
    %p640 = scmp.eq.s32.totalorder %s98, 1
    %p641 = por %p639, %p640
    %p642 = scmp.ne.s32.totalorder %s633, %s634
    %p643 = scmp.eq.s32.totalorder %s98, 0
    %p644 = por %p642, %p643
    %p645 = scmp.ne.s32.totalorder %s633, %s634
    %p646 = scmp.eq.s32.totalorder %s99, 1
    %p647 = por %p645, %p646
    %p649 = scmp.ne.s32.totalorder %s634, %s648
    %p650 = scmp.eq.s32.totalorder %s99, 0
    %p651 = por %p649, %p650
    %s653 = sadd.s32 %s652, 1
    %p656 = scmp.eq.s32.totalorder %s93, 1
    %p657 = scmp.ne.s32.totalorder %s652, %s654
    %p658 = scmp.eq.s32.totalorder %s93, 0
    %p659 = por %p657, %p658
    %p660 = scmp.ne.s32.totalorder %s652, %s654
    %p661 = scmp.eq.s32.totalorder %s98, 1
    %p662 = por %p660, %p661
    %p663 = scmp.ne.s32.totalorder %s654, %s655
    %p664 = scmp.eq.s32.totalorder %s98, 0
    %p665 = por %p663, %p664
    %p666 = scmp.ne.s32.totalorder %s654, %s655
    %p667 = scmp.eq.s32.totalorder %s99, 1
    %p668 = por %p666, %p667
    %p670 = scmp.ne.s32.totalorder %s655, %s669
    %p671 = scmp.eq.s32.totalorder %s99, 0
    %p672 = por %p670, %p671
    %s674 = sadd.s32 %s673, 1
    %p677 = scmp.eq.s32.totalorder %s93, 1
    %p678 = scmp.ne.s32.totalorder %s673, %s675
    %p679 = scmp.eq.s32.totalorder %s93, 0
    %p680 = por %p678, %p679
    %p681 = scmp.ne.s32.totalorder %s673, %s675
    %p682 = scmp.eq.s32.totalorder %s98, 1
    %p683 = por %p681, %p682
    %p684 = scmp.ne.s32.totalorder %s675, %s676
    %p685 = scmp.eq.s32.totalorder %s98, 0
    %p686 = por %p684, %p685
    %p687 = scmp.ne.s32.totalorder %s675, %s676
    %p688 = scmp.eq.s32.totalorder %s99, 1
    %p689 = por %p687, %p688
    %p691 = scmp.ne.s32.totalorder %s676, %s690
    %p692 = scmp.eq.s32.totalorder %s99, 0
    %p693 = por %p691, %p692
    %s695 = sadd.s32 %s694, 1
    %p698 = scmp.eq.s32.totalorder %s93, 1
    %p699 = scmp.ne.s32.totalorder %s694, %s696
    %p700 = scmp.eq.s32.totalorder %s93, 0
    %p701 = por %p699, %p700
    %p702 = scmp.ne.s32.totalorder %s694, %s696
    %p703 = scmp.eq.s32.totalorder %s98, 1
    %p704 = por %p702, %p703
    %p705 = scmp.ne.s32.totalorder %s696, %s697
    %p706 = scmp.eq.s32.totalorder %s98, 0
    %p707 = por %p705, %p706
    %p708 = scmp.ne.s32.totalorder %s696, %s697
    %p709 = scmp.eq.s32.totalorder %s99, 1
    %p710 = por %p708, %p709
    %p712 = scmp.ne.s32.totalorder %s697, %s711
    %p713 = scmp.eq.s32.totalorder %s99, 0
    %p714 = por %p712, %p713
    %s716 = sadd.s32 %s715, 1
    %p719 = scmp.eq.s32.totalorder %s93, 1
    %p720 = scmp.ne.s32.totalorder %s715, %s717
    %p721 = scmp.eq.s32.totalorder %s93, 0
    %p722 = por %p720, %p721
    %p723 = scmp.ne.s32.totalorder %s715, %s717
    %p724 = scmp.eq.s32.totalorder %s98, 1
    %p725 = por %p723, %p724
    %p726 = scmp.ne.s32.totalorder %s717, %s718
    %p727 = scmp.eq.s32.totalorder %s98, 0
    %p728 = por %p726, %p727
    %p729 = scmp.ne.s32.totalorder %s717, %s718
    %p730 = scmp.eq.s32.totalorder %s99, 1
    %p731 = por %p729, %p730
    %p733 = scmp.ne.s32.totalorder %s718, %s732
    %p734 = scmp.eq.s32.totalorder %s99, 0
    %p735 = por %p733, %p734
    %s737 = sadd.s32 %s736, 1
    %p740 = scmp.eq.s32.totalorder %s93, 1
    %p741 = scmp.ne.s32.totalorder %s736, %s738
    %p742 = scmp.eq.s32.totalorder %s93, 0
    %p743 = por %p741, %p742
    %p744 = scmp.ne.s32.totalorder %s736, %s738
    %p745 = scmp.eq.s32.totalorder %s98, 1
    %p746 = por %p744, %p745
    %p747 = scmp.ne.s32.totalorder %s738, %s739
    %p748 = scmp.eq.s32.totalorder %s98, 0
    %p749 = por %p747, %p748
    %p750 = scmp.ne.s32.totalorder %s738, %s739
    %p751 = scmp.eq.s32.totalorder %s99, 1
    %p752 = por %p750, %p751
    %p754 = scmp.ne.s32.totalorder %s739, %s753
    %p755 = scmp.eq.s32.totalorder %s99, 0
    %p756 = por %p754, %p755
    %s758 = sadd.s32 %s757, 1
    %p761 = scmp.eq.s32.totalorder %s93, 1
    %p762 = scmp.ne.s32.totalorder %s757, %s759
    %p763 = scmp.eq.s32.totalorder %s93, 0
    %p764 = por %p762, %p763
    %p765 = scmp.ne.s32.totalorder %s757, %s759
    %p766 = scmp.eq.s32.totalorder %s98, 1
    %p767 = por %p765, %p766
    %p768 = scmp.ne.s32.totalorder %s759, %s760
    %p769 = scmp.eq.s32.totalorder %s98, 0
    %p770 = por %p768, %p769
    %p771 = scmp.ne.s32.totalorder %s759, %s760
    %p772 = scmp.eq.s32.totalorder %s99, 1
    %p773 = por %p771, %p772
    %p775 = scmp.ne.s32.totalorder %s760, %s774
    %p776 = scmp.eq.s32.totalorder %s99, 0
    %p777 = por %p775, %p776
    %s779 = sadd.s32 %s778, 1
    %p782 = scmp.eq.s32.totalorder %s93, 1
    %p783 = scmp.ne.s32.totalorder %s778, %s780
    %p784 = scmp.eq.s32.totalorder %s93, 0
    %p785 = por %p783, %p784
    %p786 = scmp.ne.s32.totalorder %s778, %s780
    %p787 = scmp.eq.s32.totalorder %s98, 1
    %p788 = por %p786, %p787
    %p789 = scmp.ne.s32.totalorder %s780, %s781
    %p790 = scmp.eq.s32.totalorder %s98, 0
    %p791 = por %p789, %p790
    %p792 = scmp.ne.s32.totalorder %s780, %s781
    %p793 = scmp.eq.s32.totalorder %s99, 1
    %p794 = por %p792, %p793
    %p796 = scmp.ne.s32.totalorder %s781, %s795
    %p797 = scmp.eq.s32.totalorder %s99, 0
    %p798 = por %p796, %p797
    %s800 = sadd.s32 %s799, 1
    %p803 = scmp.eq.s32.totalorder %s93, 1
    %p804 = scmp.ne.s32.totalorder %s799, %s801
    %p805 = scmp.eq.s32.totalorder %s93, 0
    %p806 = por %p804, %p805
    %p807 = scmp.ne.s32.totalorder %s799, %s801
    %p808 = scmp.eq.s32.totalorder %s98, 1
    %p809 = por %p807, %p808
    %p810 = scmp.ne.s32.totalorder %s801, %s802
    %p811 = scmp.eq.s32.totalorder %s98, 0
    %p812 = por %p810, %p811
    %p813 = scmp.ne.s32.totalorder %s801, %s802
    %p814 = scmp.eq.s32.totalorder %s99, 1
    %p815 = por %p813, %p814
    %p817 = scmp.ne.s32.totalorder %s802, %s816
    %p818 = scmp.eq.s32.totalorder %s99, 0
    %p819 = por %p817, %p818
    %s821 = sadd.s32 %s820, 1
    %p824 = scmp.eq.s32.totalorder %s93, 1
    %p825 = scmp.ne.s32.totalorder %s820, %s822
    %p826 = scmp.eq.s32.totalorder %s93, 0
    %p827 = por %p825, %p826
    %p828 = scmp.ne.s32.totalorder %s820, %s822
    %p829 = scmp.eq.s32.totalorder %s98, 1
    %p830 = por %p828, %p829
    %p831 = scmp.ne.s32.totalorder %s822, %s823
    %p832 = scmp.eq.s32.totalorder %s98, 0
    %p833 = por %p831, %p832
    %p834 = scmp.ne.s32.totalorder %s822, %s823
    %p835 = scmp.eq.s32.totalorder %s99, 1
    %p836 = por %p834, %p835
    %p838 = scmp.ne.s32.totalorder %s823, %s837
    %p839 = scmp.eq.s32.totalorder %s99, 0
    %p840 = por %p838, %p839
    %s842 = sadd.s32 %s841, 1
    %p845 = scmp.eq.s32.totalorder %s93, 1
    %p846 = scmp.ne.s32.totalorder %s841, %s843
    %p847 = scmp.eq.s32.totalorder %s93, 0
    %p848 = por %p846, %p847
    %p849 = scmp.ne.s32.totalorder %s841, %s843
    %p850 = scmp.eq.s32.totalorder %s98, 1
    %p851 = por %p849, %p850
    %p852 = scmp.ne.s32.totalorder %s843, %s844
    %p853 = scmp.eq.s32.totalorder %s98, 0
    %p854 = por %p852, %p853
    %p855 = scmp.ne.s32.totalorder %s843, %s844
    %p856 = scmp.eq.s32.totalorder %s99, 1
    %p857 = por %p855, %p856
    %p859 = scmp.ne.s32.totalorder %s844, %s858
    %p860 = scmp.eq.s32.totalorder %s99, 0
    %p861 = por %p859, %p860
    %s863 = sadd.s32 %s862, 1
    %p866 = scmp.eq.s32.totalorder %s93, 1
    %p867 = scmp.ne.s32.totalorder %s862, %s864
    %p868 = scmp.eq.s32.totalorder %s93, 0
    %p869 = por %p867, %p868
    %p870 = scmp.ne.s32.totalorder %s862, %s864
    %p871 = scmp.eq.s32.totalorder %s98, 1
    %p872 = por %p870, %p871
    %p873 = scmp.ne.s32.totalorder %s864, %s865
    %p874 = scmp.eq.s32.totalorder %s98, 0
    %p875 = por %p873, %p874
    %p876 = scmp.ne.s32.totalorder %s864, %s865
    %p877 = scmp.eq.s32.totalorder %s99, 1
    %p878 = por %p876, %p877
    %p880 = scmp.ne.s32.totalorder %s865, %s879
    %p881 = scmp.eq.s32.totalorder %s99, 0
    %p882 = por %p880, %p881
    %s884 = sadd.s32 %s883, 1
    %p887 = scmp.eq.s32.totalorder %s93, 1
    %p888 = scmp.ne.s32.totalorder %s883, %s885
    %p889 = scmp.eq.s32.totalorder %s93, 0
    %p890 = por %p888, %p889
    %p891 = scmp.ne.s32.totalorder %s883, %s885
    %p892 = scmp.eq.s32.totalorder %s98, 1
    %p893 = por %p891, %p892
    %p894 = scmp.ne.s32.totalorder %s885, %s886
    %p895 = scmp.eq.s32.totalorder %s98, 0
    %p896 = por %p894, %p895
    %p897 = scmp.ne.s32.totalorder %s885, %s886
    %p898 = scmp.eq.s32.totalorder %s99, 1
    %p899 = por %p897, %p898
    %p901 = scmp.ne.s32.totalorder %s886, %s900
    %p902 = scmp.eq.s32.totalorder %s99, 0
    %p903 = por %p901, %p902
    %s905 = sadd.s32 %s904, 1
    %p908 = scmp.eq.s32.totalorder %s93, 1
    %p909 = scmp.ne.s32.totalorder %s904, %s906
    %p910 = scmp.eq.s32.totalorder %s93, 0
    %p911 = por %p909, %p910
    %p912 = scmp.ne.s32.totalorder %s904, %s906
    %p913 = scmp.eq.s32.totalorder %s98, 1
    %p914 = por %p912, %p913
    %p915 = scmp.ne.s32.totalorder %s906, %s907
    %p916 = scmp.eq.s32.totalorder %s98, 0
    %p917 = por %p915, %p916
    %p918 = scmp.ne.s32.totalorder %s906, %s907
    %p919 = scmp.eq.s32.totalorder %s99, 1
    %p920 = por %p918, %p919
    %p922 = scmp.ne.s32.totalorder %s907, %s921
    %p923 = scmp.eq.s32.totalorder %s99, 0
    %p924 = por %p922, %p923
    %s926 = sadd.s32 %s925, 1
    %p929 = scmp.eq.s32.totalorder %s93, 1
    %p930 = scmp.ne.s32.totalorder %s925, %s927
    %p931 = scmp.eq.s32.totalorder %s93, 0
    %p932 = por %p930, %p931
    %p933 = scmp.ne.s32.totalorder %s925, %s927
    %p934 = scmp.eq.s32.totalorder %s98, 1
    %p935 = por %p933, %p934
    %p936 = scmp.ne.s32.totalorder %s927, %s928
    %p937 = scmp.eq.s32.totalorder %s98, 0
    %p938 = por %p936, %p937
    %p939 = scmp.ne.s32.totalorder %s927, %s928
    %p940 = scmp.eq.s32.totalorder %s99, 1
    %p941 = por %p939, %p940
    %p943 = scmp.ne.s32.totalorder %s928, %s942
    %p944 = scmp.eq.s32.totalorder %s99, 0
    %p945 = por %p943, %p944
    %s947 = sadd.s32 %s946, 1
    %p950 = scmp.eq.s32.totalorder %s93, 1
    %p951 = scmp.ne.s32.totalorder %s946, %s948
    %p952 = scmp.eq.s32.totalorder %s93, 0
    %p953 = por %p951, %p952
    %p954 = scmp.ne.s32.totalorder %s946, %s948
    %p955 = scmp.eq.s32.totalorder %s98, 1
    %p956 = por %p954, %p955
    %p957 = scmp.ne.s32.totalorder %s948, %s949
    %p958 = scmp.eq.s32.totalorder %s98, 0
    %p959 = por %p957, %p958
    %p960 = scmp.ne.s32.totalorder %s948, %s949
    %p961 = scmp.eq.s32.totalorder %s99, 1
    %p962 = por %p960, %p961
    %p964 = scmp.ne.s32.totalorder %s949, %s963
    %p965 = scmp.eq.s32.totalorder %s99, 0
    %p966 = por %p964, %p965
    %s968 = sadd.s32 %s967, 1
    %p971 = scmp.eq.s32.totalorder %s93, 1
    %p972 = scmp.ne.s32.totalorder %s967, %s969
    %p973 = scmp.eq.s32.totalorder %s93, 0
    %p974 = por %p972, %p973
    %p975 = scmp.ne.s32.totalorder %s967, %s969
    %p976 = scmp.eq.s32.totalorder %s98, 1
    %p977 = por %p975, %p976
    %p978 = scmp.ne.s32.totalorder %s969, %s970
    %p979 = scmp.eq.s32.totalorder %s98, 0
    %p980 = por %p978, %p979
    %p981 = scmp.ne.s32.totalorder %s969, %s970
    %p982 = scmp.eq.s32.totalorder %s99, 1
    %p983 = por %p981, %p982
    %p985 = scmp.ne.s32.totalorder %s970, %s984
    %p986 = scmp.eq.s32.totalorder %s99, 0
    %p987 = por %p985, %p986
    %s989 = sadd.s32 %s988, 1
    %p992 = scmp.eq.s32.totalorder %s93, 1
    %p993 = scmp.ne.s32.totalorder %s988, %s990
    %p994 = scmp.eq.s32.totalorder %s93, 0
    %p995 = por %p993, %p994
    %p996 = scmp.ne.s32.totalorder %s988, %s990
    %p997 = scmp.eq.s32.totalorder %s98, 1
    %p998 = por %p996, %p997
    %p999 = scmp.ne.s32.totalorder %s990, %s991
    %p1000 = scmp.eq.s32.totalorder %s98, 0
    %p1001 = por %p999, %p1000
    %p1002 = scmp.ne.s32.totalorder %s990, %s991
    %p1003 = scmp.eq.s32.totalorder %s99, 1
    %p1004 = por %p1002, %p1003
    %p1006 = scmp.ne.s32.totalorder %s991, %s1005
    %p1007 = scmp.eq.s32.totalorder %s99, 0
    %p1008 = por %p1006, %p1007
    %s1009 = ssub.s32 %s93, %s100
    %p1010 = scmp.eq.s32.totalorder %s1009, 0
    %s1012 = sadd.s32 %s1011, 1
    %s1013 = scalar_select %p1010, %s1011, %s1012
    %p1016 = pneg %p1010
    %p1017 = scmp.eq.s32.totalorder %s93, 1
    %p1018 = por %p1016, %p1017
    %p1019 = scmp.ne.s32.totalorder %s1011, %s1014
    %p1020 = scmp.eq.s32.totalorder %s93, 0
    %p1021 = por %p1019, %p1020
    %p1022 = scmp.ne.s32.totalorder %s1011, %s1014
    %p1023 = scmp.eq.s32.totalorder %s98, 1
    %p1024 = por %p1022, %p1023
    %p1025 = scmp.ne.s32.totalorder %s1014, %s1015
    %p1026 = scmp.eq.s32.totalorder %s98, 0
    %p1027 = por %p1025, %p1026
    %p1028 = scmp.ne.s32.totalorder %s1014, %s1015
    %p1029 = scmp.eq.s32.totalorder %s99, 1
    %p1030 = por %p1028, %p1029
    %p1032 = scmp.ne.s32.totalorder %s1015, %s1031
    %p1033 = scmp.eq.s32.totalorder %s99, 0
    %p1034 = por %p1032, %p1033
    %p1035 = scmp.le.s32.totalorder 1, %s93
    %p1036 = scmp.lt.s32.totalorder %s93, 3
    %p1037 = pnand %p1035, %p1036
    %p1038 = pneg %p1037
    // Predicated region
    $region9: #{model_forward.1} parent=5 // pred_check
      _
    $region10: #{model_forward.1} parent=5 // pred_check_branch
      %1040 = sbr.rel (%p1037) target = $region12
    $region11: #{model_forward.1} parent=5 // pred_region
      %s1041 = ssub.s32 %s93, 1
      // Predicated region
      $region13: #{model_forward.1} parent=11 // pred_check
        %p1042 = pneg %p140
      $region14: #{model_forward.1} parent=11 // pred_check_branch
        %1044 = sbr.rel (%p1042) target = $region16
      $region15: #{model_forward.1} parent=11 // pred_region
        _
      $region16: #{model_forward.1} parent=11 // pred_fallthru
        _
      // Predicated region
      $region17: #{model_forward.1} parent=11 // pred_check
        %p1045 = pneg %p161
      $region18: #{model_forward.1} parent=11 // pred_check_branch
        %1047 = sbr.rel (%p1045) target = $region20
      $region19: #{model_forward.1} parent=11 // pred_region
        _
      $region20: #{model_forward.1} parent=11 // pred_fallthru
        _
      // Predicated region
      $region21: #{model_forward.1} parent=11 // pred_check
        %p1048 = pneg %p182
      $region22: #{model_forward.1} parent=11 // pred_check_branch
        %1050 = sbr.rel (%p1048) target = $region24
      $region23: #{model_forward.1} parent=11 // pred_region
        _
      $region24: #{model_forward.1} parent=11 // pred_fallthru
        _
      // Predicated region
      $region25: #{model_forward.1} parent=11 // pred_check
        %p1051 = pneg %p203
      $region26: #{model_forward.1} parent=11 // pred_check_branch
        %1053 = sbr.rel (%p1051) target = $region28
      $region27: #{model_forward.1} parent=11 // pred_region
        _
      $region28: #{model_forward.1} parent=11 // pred_fallthru
        _
      // Predicated region
      $region29: #{model_forward.1} parent=11 // pred_check
        %p1054 = pneg %p224
      $region30: #{model_forward.1} parent=11 // pred_check_branch
        %1056 = sbr.rel (%p1054) target = $region32
      $region31: #{model_forward.1} parent=11 // pred_region
        _
      $region32: #{model_forward.1} parent=11 // pred_fallthru
        _
      // Predicated region
      $region33: #{model_forward.1} parent=11 // pred_check
        %p1057 = pneg %p245
      $region34: #{model_forward.1} parent=11 // pred_check_branch
        %1059 = sbr.rel (%p1057) target = $region36
      $region35: #{model_forward.1} parent=11 // pred_region
        _
      $region36: #{model_forward.1} parent=11 // pred_fallthru
        _
      // Predicated region
      $region37: #{model_forward.1} parent=11 // pred_check
        %p1060 = pneg %p266
      $region38: #{model_forward.1} parent=11 // pred_check_branch
        %1062 = sbr.rel (%p1060) target = $region40
      $region39: #{model_forward.1} parent=11 // pred_region
        _
      $region40: #{model_forward.1} parent=11 // pred_fallthru
        _
      // Predicated region
      $region41: #{model_forward.1} parent=11 // pred_check
        %p1063 = pneg %p287
      $region42: #{model_forward.1} parent=11 // pred_check_branch
        %1065 = sbr.rel (%p1063) target = $region44
      $region43: #{model_forward.1} parent=11 // pred_region
        _
      $region44: #{model_forward.1} parent=11 // pred_fallthru
        _
      // Predicated region
      $region45: #{model_forward.1} parent=11 // pred_check
        %p1066 = pneg %p308
      $region46: #{model_forward.1} parent=11 // pred_check_branch
        %1068 = sbr.rel (%p1066) target = $region48
      $region47: #{model_forward.1} parent=11 // pred_region
        _
      $region48: #{model_forward.1} parent=11 // pred_fallthru
        _
      // Predicated region
      $region49: #{model_forward.1} parent=11 // pred_check
        %p1069 = pneg %p329
      $region50: #{model_forward.1} parent=11 // pred_check_branch
        %1071 = sbr.rel (%p1069) target = $region52
      $region51: #{model_forward.1} parent=11 // pred_region
        _
      $region52: #{model_forward.1} parent=11 // pred_fallthru
        _
      // Predicated region
      $region53: #{model_forward.1} parent=11 // pred_check
        %p1072 = pneg %p350
      $region54: #{model_forward.1} parent=11 // pred_check_branch
        %1074 = sbr.rel (%p1072) target = $region56
      $region55: #{model_forward.1} parent=11 // pred_region
        _
      $region56: #{model_forward.1} parent=11 // pred_fallthru
        _
      // Predicated region
      $region57: #{model_forward.1} parent=11 // pred_check
        %p1075 = pneg %p371
      $region58: #{model_forward.1} parent=11 // pred_check_branch
        %1077 = sbr.rel (%p1075) target = $region60
      $region59: #{model_forward.1} parent=11 // pred_region
        _
      $region60: #{model_forward.1} parent=11 // pred_fallthru
        _
      // Predicated region
      $region61: #{model_forward.1} parent=11 // pred_check
        %p1078 = pneg %p392
      $region62: #{model_forward.1} parent=11 // pred_check_branch
        %1080 = sbr.rel (%p1078) target = $region64
      $region63: #{model_forward.1} parent=11 // pred_region
        _
      $region64: #{model_forward.1} parent=11 // pred_fallthru
        _
      // Predicated region
      $region65: #{model_forward.1} parent=11 // pred_check
        %p1081 = pneg %p413
      $region66: #{model_forward.1} parent=11 // pred_check_branch
        %1083 = sbr.rel (%p1081) target = $region68
      $region67: #{model_forward.1} parent=11 // pred_region
        _
      $region68: #{model_forward.1} parent=11 // pred_fallthru
        _
      // Predicated region
      $region69: #{model_forward.1} parent=11 // pred_check
        %p1084 = pneg %p434
      $region70: #{model_forward.1} parent=11 // pred_check_branch
        %1086 = sbr.rel (%p1084) target = $region72
      $region71: #{model_forward.1} parent=11 // pred_region
        _
      $region72: #{model_forward.1} parent=11 // pred_fallthru
        _
      // Predicated region
      $region73: #{model_forward.1} parent=11 // pred_check
        %p1087 = pneg %p455
      $region74: #{model_forward.1} parent=11 // pred_check_branch
        %1089 = sbr.rel (%p1087) target = $region76
      $region75: #{model_forward.1} parent=11 // pred_region
        _
      $region76: #{model_forward.1} parent=11 // pred_fallthru
        _
      // Predicated region
      $region77: #{model_forward.1} parent=11 // pred_check
        %p1090 = pneg %p476
      $region78: #{model_forward.1} parent=11 // pred_check_branch
        %1092 = sbr.rel (%p1090) target = $region80
      $region79: #{model_forward.1} parent=11 // pred_region
        _
      $region80: #{model_forward.1} parent=11 // pred_fallthru
        _
      // Predicated region
      $region81: #{model_forward.1} parent=11 // pred_check
        %p1093 = pneg %p497
      $region82: #{model_forward.1} parent=11 // pred_check_branch
        %1095 = sbr.rel (%p1093) target = $region84
      $region83: #{model_forward.1} parent=11 // pred_region
        _
      $region84: #{model_forward.1} parent=11 // pred_fallthru
        _
      // Predicated region
      $region85: #{model_forward.1} parent=11 // pred_check
        %p1096 = pneg %p518
      $region86: #{model_forward.1} parent=11 // pred_check_branch
        %1098 = sbr.rel (%p1096) target = $region88
      $region87: #{model_forward.1} parent=11 // pred_region
        _
      $region88: #{model_forward.1} parent=11 // pred_fallthru
        _
      // Predicated region
      $region89: #{model_forward.1} parent=11 // pred_check
        %p1099 = pneg %p539
      $region90: #{model_forward.1} parent=11 // pred_check_branch
        %1101 = sbr.rel (%p1099) target = $region92
      $region91: #{model_forward.1} parent=11 // pred_region
        _
      $region92: #{model_forward.1} parent=11 // pred_fallthru
        _
      // Predicated region
      $region93: #{model_forward.1} parent=11 // pred_check
        %p1102 = pneg %p560
      $region94: #{model_forward.1} parent=11 // pred_check_branch
        %1104 = sbr.rel (%p1102) target = $region96
      $region95: #{model_forward.1} parent=11 // pred_region
        _
      $region96: #{model_forward.1} parent=11 // pred_fallthru
        _
      // Predicated region
      $region97: #{model_forward.1} parent=11 // pred_check
        %p1105 = pneg %p581
      $region98: #{model_forward.1} parent=11 // pred_check_branch
        %1107 = sbr.rel (%p1105) target = $region100
      $region99: #{model_forward.1} parent=11 // pred_region
        _
      $region100: #{model_forward.1} parent=11 // pred_fallthru
        _
      // Predicated region
      $region101: #{model_forward.1} parent=11 // pred_check
        %p1108 = pneg %p602
      $region102: #{model_forward.1} parent=11 // pred_check_branch
        %1110 = sbr.rel (%p1108) target = $region104
      $region103: #{model_forward.1} parent=11 // pred_region
        _
      $region104: #{model_forward.1} parent=11 // pred_fallthru
        _
      // Predicated region
      $region105: #{model_forward.1} parent=11 // pred_check
        %p1111 = pneg %p623
      $region106: #{model_forward.1} parent=11 // pred_check_branch
        %1113 = sbr.rel (%p1111) target = $region108
      $region107: #{model_forward.1} parent=11 // pred_region
        _
      $region108: #{model_forward.1} parent=11 // pred_fallthru
        _
      // Predicated region
      $region109: #{model_forward.1} parent=11 // pred_check
        %p1114 = pneg %p644
      $region110: #{model_forward.1} parent=11 // pred_check_branch
        %1116 = sbr.rel (%p1114) target = $region112
      $region111: #{model_forward.1} parent=11 // pred_region
        _
      $region112: #{model_forward.1} parent=11 // pred_fallthru
        _
      // Predicated region
      $region113: #{model_forward.1} parent=11 // pred_check
        %p1117 = pneg %p665
      $region114: #{model_forward.1} parent=11 // pred_check_branch
        %1119 = sbr.rel (%p1117) target = $region116
      $region115: #{model_forward.1} parent=11 // pred_region
        _
      $region116: #{model_forward.1} parent=11 // pred_fallthru
        _
      // Predicated region
      $region117: #{model_forward.1} parent=11 // pred_check
        %p1120 = pneg %p686
      $region118: #{model_forward.1} parent=11 // pred_check_branch
        %1122 = sbr.rel (%p1120) target = $region120
      $region119: #{model_forward.1} parent=11 // pred_region
        _
      $region120: #{model_forward.1} parent=11 // pred_fallthru
        _
      // Predicated region
      $region121: #{model_forward.1} parent=11 // pred_check
        %p1123 = pneg %p707
      $region122: #{model_forward.1} parent=11 // pred_check_branch
        %1125 = sbr.rel (%p1123) target = $region124
      $region123: #{model_forward.1} parent=11 // pred_region
        _
      $region124: #{model_forward.1} parent=11 // pred_fallthru
        _
      // Predicated region
      $region125: #{model_forward.1} parent=11 // pred_check
        %p1126 = pneg %p728
      $region126: #{model_forward.1} parent=11 // pred_check_branch
        %1128 = sbr.rel (%p1126) target = $region128
      $region127: #{model_forward.1} parent=11 // pred_region
        _
      $region128: #{model_forward.1} parent=11 // pred_fallthru
        _
      // Predicated region
      $region129: #{model_forward.1} parent=11 // pred_check
        %p1129 = pneg %p749
      $region130: #{model_forward.1} parent=11 // pred_check_branch
        %1131 = sbr.rel (%p1129) target = $region132
      $region131: #{model_forward.1} parent=11 // pred_region
        _
      $region132: #{model_forward.1} parent=11 // pred_fallthru
        _
      // Predicated region
      $region133: #{model_forward.1} parent=11 // pred_check
        %p1132 = pneg %p770
      $region134: #{model_forward.1} parent=11 // pred_check_branch
        %1134 = sbr.rel (%p1132) target = $region136
      $region135: #{model_forward.1} parent=11 // pred_region
        _
      $region136: #{model_forward.1} parent=11 // pred_fallthru
        _
      // Predicated region
      $region137: #{model_forward.1} parent=11 // pred_check
        %p1135 = pneg %p791
      $region138: #{model_forward.1} parent=11 // pred_check_branch
        %1137 = sbr.rel (%p1135) target = $region140
      $region139: #{model_forward.1} parent=11 // pred_region
        _
      $region140: #{model_forward.1} parent=11 // pred_fallthru
        _
      // Predicated region
      $region141: #{model_forward.1} parent=11 // pred_check
        %p1138 = pneg %p812
      $region142: #{model_forward.1} parent=11 // pred_check_branch
        %1140 = sbr.rel (%p1138) target = $region144
      $region143: #{model_forward.1} parent=11 // pred_region
        _
      $region144: #{model_forward.1} parent=11 // pred_fallthru
        _
      // Predicated region
      $region145: #{model_forward.1} parent=11 // pred_check
        %p1141 = pneg %p833
      $region146: #{model_forward.1} parent=11 // pred_check_branch
        %1143 = sbr.rel (%p1141) target = $region148
      $region147: #{model_forward.1} parent=11 // pred_region
        _
      $region148: #{model_forward.1} parent=11 // pred_fallthru
        _
      // Predicated region
      $region149: #{model_forward.1} parent=11 // pred_check
        %p1144 = pneg %p854
      $region150: #{model_forward.1} parent=11 // pred_check_branch
        %1146 = sbr.rel (%p1144) target = $region152
      $region151: #{model_forward.1} parent=11 // pred_region
        _
      $region152: #{model_forward.1} parent=11 // pred_fallthru
        _
      // Predicated region
      $region153: #{model_forward.1} parent=11 // pred_check
        %p1147 = pneg %p875
      $region154: #{model_forward.1} parent=11 // pred_check_branch
        %1149 = sbr.rel (%p1147) target = $region156
      $region155: #{model_forward.1} parent=11 // pred_region
        _
      $region156: #{model_forward.1} parent=11 // pred_fallthru
        _
      // Predicated region
      $region157: #{model_forward.1} parent=11 // pred_check
        %p1150 = pneg %p896
      $region158: #{model_forward.1} parent=11 // pred_check_branch
        %1152 = sbr.rel (%p1150) target = $region160
      $region159: #{model_forward.1} parent=11 // pred_region
        _
      $region160: #{model_forward.1} parent=11 // pred_fallthru
        _
      // Predicated region
      $region161: #{model_forward.1} parent=11 // pred_check
        %p1153 = pneg %p917
      $region162: #{model_forward.1} parent=11 // pred_check_branch
        %1155 = sbr.rel (%p1153) target = $region164
      $region163: #{model_forward.1} parent=11 // pred_region
        _
      $region164: #{model_forward.1} parent=11 // pred_fallthru
        _
      // Predicated region
      $region165: #{model_forward.1} parent=11 // pred_check
        %p1156 = pneg %p938
      $region166: #{model_forward.1} parent=11 // pred_check_branch
        %1158 = sbr.rel (%p1156) target = $region168
      $region167: #{model_forward.1} parent=11 // pred_region
        _
      $region168: #{model_forward.1} parent=11 // pred_fallthru
        _
      // Predicated region
      $region169: #{model_forward.1} parent=11 // pred_check
        %p1159 = pneg %p959
      $region170: #{model_forward.1} parent=11 // pred_check_branch
        %1161 = sbr.rel (%p1159) target = $region172
      $region171: #{model_forward.1} parent=11 // pred_region
        _
      $region172: #{model_forward.1} parent=11 // pred_fallthru
        _
      // Predicated region
      $region173: #{model_forward.1} parent=11 // pred_check
        %p1162 = pneg %p980
      $region174: #{model_forward.1} parent=11 // pred_check_branch
        %1164 = sbr.rel (%p1162) target = $region176
      $region175: #{model_forward.1} parent=11 // pred_region
        _
      $region176: #{model_forward.1} parent=11 // pred_fallthru
        _
      // Predicated region
      $region177: #{model_forward.1} parent=11 // pred_check
        %p1165 = pneg %p1001
      $region178: #{model_forward.1} parent=11 // pred_check_branch
        %1167 = sbr.rel (%p1165) target = $region180
      $region179: #{model_forward.1} parent=11 // pred_region
        _
      $region180: #{model_forward.1} parent=11 // pred_fallthru
        _
    $region12: #{model_forward.1} parent=5 // pred_fallthru
      _
    %p1168 = scmp.lt.s32.totalorder %s93, 2
    // Predicated region
    $region181: #{model_forward.1} parent=5 // pred_check
      %p1169 = pneg %p1168
    $region182: #{model_forward.1} parent=5 // pred_check_branch
      %1171 = sbr.rel (%p1169) target = $region184
    $region183: #{model_forward.1} parent=5 // pred_region
      // Predicated region
      $region185: #{model_forward.1} parent=183 // pred_check
        %p1172 = pneg %p113
      $region186: #{model_forward.1} parent=183 // pred_check_branch
        %1174 = sbr.rel (%p1172) target = $region188
      $region187: #{model_forward.1} parent=183 // pred_region
        %p1175 = scmp.lt.s32.totalorder %s93, 1
        %s1176 = scalar_select %p1175, %s93, 1
        %s1177 = smul.addr %s1176, 8
        %s1178 = scalar_lea.vmem %s1, %s1177
      $region188: #{model_forward.1} parent=183 // pred_fallthru
        _
    $region184: #{model_forward.1} parent=5 // pred_fallthru
      _
    %p1179 = scmp.le.s32.totalorder 1, %s93
    %p1180 = scmp.lt.s32.totalorder %s93, 3
    %p1181 = pnand %p1179, %p1180
    %p1182 = pneg %p1181
    // Predicated region
    $region189: #{model_forward.1} parent=5 // pred_check
      _
    $region190: #{model_forward.1} parent=5 // pred_check_branch
      %1184 = sbr.rel (%p1181) target = $region192
    $region191: #{model_forward.1} parent=5 // pred_region
      %s1185 = ssub.s32 %s93, 1
      %p1186 = scmp.lt.s32.totalorder %s98, 1
      %s1187 = scalar_select %p1186, %s98, 1
      %s1188 = smul.addr %s1187, 8
      %s1189 = scalar_lea.vmem %s1, %s1188
      %p1190 = pneg %p119
      %p1191 = pneg %p116
      %p1192 = pneg %p140
      %p1193 = pneg %p137
      %p1194 = pneg %p161
      %p1195 = pneg %p158
      %p1196 = pneg %p182
      %p1197 = pneg %p179
      %p1198 = pneg %p203
      %p1199 = pneg %p200
      %p1200 = pneg %p224
      %p1201 = pneg %p221
      %p1202 = pneg %p245
      %p1203 = pneg %p242
      %p1204 = pneg %p266
      %p1205 = pneg %p263
      %p1206 = pneg %p287
      %p1207 = pneg %p284
      %p1208 = pneg %p308
      %p1209 = pneg %p305
      %p1210 = pneg %p329
      %p1211 = pneg %p326
      %p1212 = pneg %p350
      %p1213 = pneg %p347
      %p1214 = pneg %p371
      %p1215 = pneg %p368
      %p1216 = pneg %p392
      %p1217 = pneg %p389
      %p1218 = pneg %p413
      %p1219 = pneg %p410
      %p1220 = pneg %p434
      %p1221 = pneg %p431
      %p1222 = pneg %p455
      %p1223 = pneg %p452
      %p1224 = pneg %p476
      %p1225 = pneg %p473
      %p1226 = pneg %p497
      %p1227 = pneg %p494
      %p1228 = pneg %p518
      %p1229 = pneg %p515
      %p1230 = pneg %p539
      %p1231 = pneg %p536
      %p1232 = pneg %p560
      %p1233 = pneg %p557
      %p1234 = pneg %p581
      %p1235 = pneg %p578
      %p1236 = pneg %p602
      %p1237 = pneg %p599
      %p1238 = pneg %p623
      %p1239 = pneg %p620
      %p1240 = pneg %p644
      %p1241 = pneg %p641
      %p1242 = pneg %p665
      %p1243 = pneg %p662
      %p1244 = pneg %p686
      %p1245 = pneg %p683
      %p1246 = pneg %p707
      %p1247 = pneg %p704
      %p1248 = pneg %p728
      %p1249 = pneg %p725
      %p1250 = pneg %p749
      %p1251 = pneg %p746
      %p1252 = pneg %p770
      %p1253 = pneg %p767
      %p1254 = pneg %p791
      %p1255 = pneg %p788
      %p1256 = pneg %p812
      %p1257 = pneg %p809
      %p1258 = pneg %p833
      %p1259 = pneg %p830
      %p1260 = pneg %p854
      %p1261 = pneg %p851
      %p1262 = pneg %p875
      %p1263 = pneg %p872
      %p1264 = pneg %p896
      %p1265 = pneg %p893
      %p1266 = pneg %p917
      %p1267 = pneg %p914
      %p1268 = pneg %p938
      %p1269 = pneg %p935
      %p1270 = pneg %p959
      %p1271 = pneg %p956
      %p1272 = pneg %p980
      %p1273 = pneg %p977
      %p1274 = pneg %p1001
      %p1275 = pneg %p998
      %p1276 = pneg %p1027
      %p1277 = pneg %p1024
      %p1278 = scmp.lt.s32.totalorder %s98, 1
      %s1279 = scalar_select %p1278, %s98, 1
      %s1280 = smul.addr %s1279, 8
      %s1281 = scalar_lea.vmem %s87, %s1280
      %p1282 = scmp.lt.s32.totalorder %s98, 1
      %s1283 = scalar_select %p1282, %s98, 1
      %s1284 = smul.addr %s1283, 8
      %s1285 = scalar_lea.vmem %s1, %s1284
      %p1286 = scmp.lt.s32.totalorder %s98, 1
      %s1287 = scalar_select %p1286, %s98, 1
      %s1288 = smul.addr %s1287, 8
      %s1289 = scalar_lea.vmem %s87, %s1288
      %v1290 = vld [vmem:[%s1285] sm:$0x7f]
      %vm1291 = vcmask 129024
      %v1292 = vsel %vm1291, %v1290, 0.0
      %1293 = vadd.xlane.f32.xlu0 %v1292
      %v1294 = vpop.xlane.xlu0 %1293
      %v1295 = vrcp.pop 16.0
      %v1296 = vmul.f32 %v1294, %v1295
      %v1297 = vsub.f32 %v1290, %v1296
      %v1298 = vmul.f32 %v1297, %v1297
      %v1299 = vsel %vm1291, %v1298, 0.0
      %1300 = vadd.xlane.f32.xlu0 %v1299
      %v1301 = vpop.xlane.xlu0 %1300
      %v1302 = vmul.f32 %v1301, %v1295
      %v1303 = vadd.f32 %v1302, 1e-05
      %v1304 = vrsqrt.pop %v1303
      %v1305 = vmul.f32 %v1303, %v1304
      %vm1306 = vcmp.eq.f32.partialorder %v1303, inf
      %v1307 = vsel %vm1306, %v1303, %v1305
      %vm1308 = vcmp.eq.f32.partialorder %v1303, 0.0
      %v1309 = vand.u32 %v1303, 2147483648
      %v1310 = vsel %vm1308, %v1309, %v1307
      %v1311 = vrcp.pop %v1310
      %v1312 = vmul.f32 %v1297, %v1311
      %v1313 = vld [vmem:[%s7] sm:$0xff]
      %v1314 = vld [vmem:[%s7 + $0x8] sm:$0xff]
      %v1315 = vld [vmem:[%s7 + $0x10] sm:$0xff]
      %v1316 = vld [vmem:[%s7 + $0x18] sm:$0xff]
      %v1317 = vld [vmem:[%s9] sm:$0x3]
      %v1319 = vlaneseq
      %v1320 = vshrl.u32 %v1319, 7
      %v1321 = vsub.s32 0, %v1320
      %v1322 = vrot.slane %v1317, %v1321
      %v1323 = vlaneseq
      %v1324 = vshrl.u32 %v1323, 7
      %v1325 = vsub.s32 1, %v1324
      %v1326 = vrot.slane %v1317, %v1325
      %vm1329 = vcmask 130048
      %v1331 = vsel %vm1329, %v1312, 0
      %1333 = vmatprep.subr.mxu0 %v1314
      %1334 = vmatpush1.msra.mxu0 %v1313
      %1335 = vmatprep.subr.mxu0 %v1316
      %1336 = vmatpush1.msra.mxu0 %v1315
      %1337 = vmatprep.subr.mxu0 0.0
      %1338 = vmatpush1.msra.mxu0 0.0
      %1339 = vmatprep.subr.mxu0 0.0
      %1340 = vmatpush1.msra.mxu0 0.0
      %1341 = vmatprep.subr.mxu0 0.0
      %1342 = vmatpush1.msra.mxu0 0.0
      %1343 = vmatprep.subr.mxu0 0.0
      %1344 = vmatpush1.msra.mxu0 0.0
      %1345 = vmatprep.subr.mxu0 0.0
      %1346 = vmatpush1.msra.mxu0 0.0
      %1347 = vmatprep.subr.mxu0 0.0
      %1348 = vmatpush1.msra.mxu0 0.0
      %1349 = vmatprep.subr.mxu0 0.0
      %1350 = vmatpush1.msra.mxu0 0.0
      %1351 = vmatprep.subr.mxu0 0.0
      %1352 = vmatpush1.msra.mxu0 0.0
      %1353 = vmatprep.subr.mxu0 0.0
      %1354 = vmatpush1.msra.mxu0 0.0
      %1355 = vmatprep.subr.mxu0 0.0
      %1356 = vmatpush1.msra.mxu0 0.0
      %1357 = vmatprep.subr.mxu0 0.0
      %1358 = vmatpush1.msra.mxu0 0.0
      %1359 = vmatprep.subr.mxu0 0.0
      %1360 = vmatpush1.msra.mxu0 0.0
      %1361 = vmatprep.subr.mxu0 0.0
      %1362 = vmatpush1.msra.mxu0 0.0
      %1363 = vmatprep.subr.mxu0 0.0
      %1364 = vmatpush1.msra.mxu0 0.0
      %1365 = vmatprep.subr.mxu0 0.0
      %1366 = vmatpush1.msra.mxu0 0.0
      %1367 = vmatprep.subr.mxu0 0.0
      %1368 = vmatpush1.msra.mxu0 0.0
      %1369 = vmatprep.subr.mxu0 0.0
      %1370 = vmatpush1.msra.mxu0 0.0
      %1371 = vmatprep.subr.mxu0 0.0
      %1372 = vmatpush1.msra.mxu0 0.0
      %1373 = vmatprep.subr.mxu0 0.0
      %1374 = vmatpush1.msra.mxu0 0.0
      %1375 = vmatprep.subr.mxu0 0.0
      %1376 = vmatpush1.msra.mxu0 0.0
      %1377 = vmatprep.subr.mxu0 0.0
      %1378 = vmatpush1.msra.mxu0 0.0
      %1379 = vmatprep.subr.mxu0 0.0
      %1380 = vmatpush1.msra.mxu0 0.0
      %1381 = vmatprep.subr.mxu0 0.0
      %1382 = vmatpush1.msra.mxu0 0.0
      %1383 = vmatprep.subr.mxu0 0.0
      %1384 = vmatpush1.msra.mxu0 0.0
      %1385 = vmatprep.subr.mxu0 0.0
      %1386 = vmatpush1.msra.mxu0 0.0
      %1387 = vmatprep.subr.mxu0 0.0
      %1388 = vmatpush1.msra.mxu0 0.0
      %1389 = vmatprep.subr.mxu0 0.0
      %1390 = vmatpush1.msra.mxu0 0.0
      %1391 = vmatprep.subr.mxu0 0.0
      %1392 = vmatpush1.msra.mxu0 0.0
      %1393 = vmatprep.subr.mxu0 0.0
      %1394 = vmatpush1.msra.mxu0 0.0
      %1395 = vmatprep.subr.mxu0 0.0
      %1396 = vmatpush1.msra.mxu0 0.0
      %1397 = vmatprep.mubr.f32.mxu0 0.0
      %1398 = vmatmul.mubr.f32.gmra.mrb[0].mxu0 %v1331
      %v1399 = vpop.f32.mrb[0].mxu0
      %v1400 = vadd.f32 %v1322, %v1399
      %v1401 = vpop.f32.mrb[0].mxu0
      %v1402 = vadd.f32 %v1326, %v1401
      %1403 = vdwg.mxu0
      %vm1404 = vcmp.gt.f32.partialorder %v1400, 0.0
      %vm1405 = vcmp.gt.f32.partialorder %v1402, 0.0
      %v1406 = vmul.f32 %v1400, 0.1
      %v1407 = vmul.f32 %v1402, 0.1
      %v1408 = vsel %vm1404, %v1400, %v1406
      %v1409 = vsel %vm1405, %v1402, %v1407
      %v1410 = vld [vmem:[%s13] sm:$0xff]
      %v1411 = vld [vmem:[%s13 + $0x8] sm:$0xff]
      %v1412 = vld [vmem:[%s11] sm:$0xff]
      %v1413 = vld [vmem:[%s11 + $0x8] sm:$0xff]
      %v1414 = vld [vmem:[%s11 + $0x10] sm:$0xff]
      %v1415 = vld [vmem:[%s11 + $0x18] sm:$0xff]
      %v1416 = vld [vmem:[%s11 + $0x20] sm:$0xff]
      %v1417 = vld [vmem:[%s11 + $0x28] sm:$0xff]
      %v1418 = vld [vmem:[%s11 + $0x30] sm:$0xff]
      %v1419 = vld [vmem:[%s11 + $0x38] sm:$0xff]
      %v1420 = vld [vmem:[%s11 + $0x40] sm:$0xff]
      %v1421 = vld [vmem:[%s11 + $0x48] sm:$0xff]
      %v1422 = vld [vmem:[%s11 + $0x50] sm:$0xff]
      %v1423 = vld [vmem:[%s11 + $0x58] sm:$0xff]
      %v1424 = vld [vmem:[%s11 + $0x60] sm:$0xff]
      %v1425 = vld [vmem:[%s11 + $0x68] sm:$0xff]
      %v1426 = vld [vmem:[%s11 + $0x70] sm:$0xff]
      %v1427 = vld [vmem:[%s11 + $0x78] sm:$0xff]
      %v1428 = vld [vmem:[%s11 + $0x80] sm:$0xff]
      %v1429 = vld [vmem:[%s11 + $0x88] sm:$0xff]
      %v1430 = vld [vmem:[%s11 + $0x90] sm:$0xff]
      %v1431 = vld [vmem:[%s11 + $0x98] sm:$0xff]
      %v1432 = vld [vmem:[%s11 + $0xa0] sm:$0xff]
      %v1433 = vld [vmem:[%s11 + $0xa8] sm:$0xff]
      %v1434 = vld [vmem:[%s11 + $0xb0] sm:$0xff]
      %v1435 = vld [vmem:[%s11 + $0xb8] sm:$0xff]
      %vm1436 = vcmask 523264
      %v1438 = vsel %vm1436, %v1409, 0
      %1440 = vmatprep.subr.mxu0 0.0
      %1441 = vmatpush1.msra.mxu0 %v1412
      %1442 = vmatprep.subr.mxu0 0.0
      %1443 = vmatpush1.msra.mxu0 %v1413
      %1444 = vmatprep.subr.mxu0 0.0
      %1445 = vmatpush1.msra.mxu0 %v1414
      %1446 = vmatprep.subr.mxu0 0.0
      %1447 = vmatpush1.msra.mxu0 %v1415
      %1448 = vmatprep.subr.mxu0 0.0
      %1449 = vmatpush1.msra.mxu0 %v1416
      %1450 = vmatprep.subr.mxu0 0.0
      %1451 = vmatpush1.msra.mxu0 %v1417
      %1452 = vmatprep.subr.mxu0 0.0
      %1453 = vmatpush1.msra.mxu0 %v1418
      %1454 = vmatprep.subr.mxu0 0.0
      %1455 = vmatpush1.msra.mxu0 %v1419
      %1456 = vmatprep.subr.mxu0 0.0
      %1457 = vmatpush1.msra.mxu0 %v1420
      %1458 = vmatprep.subr.mxu0 0.0
      %1459 = vmatpush1.msra.mxu0 %v1421
      %1460 = vmatprep.subr.mxu0 0.0
      %1461 = vmatpush1.msra.mxu0 %v1422
      %1462 = vmatprep.subr.mxu0 0.0
      %1463 = vmatpush1.msra.mxu0 %v1423
      %1464 = vmatprep.subr.mxu0 0.0
      %1465 = vmatpush1.msra.mxu0 %v1424
      %1466 = vmatprep.subr.mxu0 0.0
      %1467 = vmatpush1.msra.mxu0 %v1425
      %1468 = vmatprep.subr.mxu0 0.0
      %1469 = vmatpush1.msra.mxu0 %v1426
      %1470 = vmatprep.subr.mxu0 0.0
      %1471 = vmatpush1.msra.mxu0 %v1427
      %1472 = vmatprep.subr.mxu0 0.0
      %1473 = vmatpush1.msra.mxu0 %v1428
      %1474 = vmatprep.subr.mxu0 0.0
      %1475 = vmatpush1.msra.mxu0 %v1429
      %1476 = vmatprep.subr.mxu0 0.0
      %1477 = vmatpush1.msra.mxu0 %v1430
      %1478 = vmatprep.subr.mxu0 0.0
      %1479 = vmatpush1.msra.mxu0 %v1431
      %1480 = vmatprep.subr.mxu0 0.0
      %1481 = vmatpush1.msra.mxu0 %v1432
      %1482 = vmatprep.subr.mxu0 0.0
      %1483 = vmatpush1.msra.mxu0 %v1433
      %1484 = vmatprep.subr.mxu0 0.0
      %1485 = vmatpush1.msra.mxu0 %v1434
      %1486 = vmatprep.subr.mxu0 0.0
      %1487 = vmatpush1.msra.mxu0 %v1435
      %1488 = vmatprep.subr.mxu0 0.0
      %1489 = vmatpush1.msra.mxu0 0.0
      %1490 = vmatprep.subr.mxu0 0.0
      %1491 = vmatpush1.msra.mxu0 0.0
      %1492 = vmatprep.subr.mxu0 0.0
      %1493 = vmatpush1.msra.mxu0 0.0
      %1494 = vmatprep.subr.mxu0 0.0
      %1495 = vmatpush1.msra.mxu0 0.0
      %1496 = vmatprep.subr.mxu0 0.0
      %1497 = vmatpush1.msra.mxu0 0.0
      %1498 = vmatprep.subr.mxu0 0.0
      %1499 = vmatpush1.msra.mxu0 0.0
      %1500 = vmatprep.subr.mxu0 0.0
      %1501 = vmatpush1.msra.mxu0 0.0
      %1502 = vmatprep.subr.mxu0 0.0
      %1503 = vmatpush1.msra.mxu0 0.0
      %1504 = vmatprep.mubr.f32.mxu0 %v1438
      %1505 = vmatmul.mubr.f32.gmra.mrb[0].mxu0 %v1408
      %v1506 = vpop.f32.mrb[0].mxu0
      %v1507 = vadd.f32 0.0, %v1506
      %v1508 = vpop.f32.mrb[0].mxu0
      %1509 = vdwg.mxu0
      %1510 = vmatprep.subr.mxu0 0.0
      %1511 = vmatpush1.msra.mxu0 %v1410
      %1512 = vmatprep.subr.mxu0 0.0
      %1513 = vmatpush1.msra.mxu0 %v1411
      %1514 = vmatprep.subr.mxu0 0.0
      %1515 = vmatpush1.msra.mxu0 0.0
      %1516 = vmatprep.subr.mxu0 0.0
      %1517 = vmatpush1.msra.mxu0 0.0
      %1518 = vmatprep.subr.mxu0 0.0
      %1519 = vmatpush1.msra.mxu0 0.0
      %1520 = vmatprep.subr.mxu0 0.0
      %1521 = vmatpush1.msra.mxu0 0.0
      %1522 = vmatprep.subr.mxu0 0.0
      %1523 = vmatpush1.msra.mxu0 0.0
      %1524 = vmatprep.subr.mxu0 0.0
      %1525 = vmatpush1.msra.mxu0 0.0
      %1526 = vmatprep.subr.mxu0 0.0
      %1527 = vmatpush1.msra.mxu0 0.0
      %1528 = vmatprep.subr.mxu0 0.0
      %1529 = vmatpush1.msra.mxu0 0.0
      %1530 = vmatprep.subr.mxu0 0.0
      %1531 = vmatpush1.msra.mxu0 0.0
      %1532 = vmatprep.subr.mxu0 0.0
      %1533 = vmatpush1.msra.mxu0 0.0
      %1534 = vmatprep.subr.mxu0 0.0
      %1535 = vmatpush1.msra.mxu0 0.0
      %1536 = vmatprep.subr.mxu0 0.0
      %1537 = vmatpush1.msra.mxu0 0.0
      %1538 = vmatprep.subr.mxu0 0.0
      %1539 = vmatpush1.msra.mxu0 0.0
      %1540 = vmatprep.subr.mxu0 0.0
      %1541 = vmatpush1.msra.mxu0 0.0
      %1542 = vmatprep.subr.mxu0 0.0
      %1543 = vmatpush1.msra.mxu0 0.0
      %1544 = vmatprep.subr.mxu0 0.0
      %1545 = vmatpush1.msra.mxu0 0.0
      %1546 = vmatprep.subr.mxu0 0.0
      %1547 = vmatpush1.msra.mxu0 0.0
      %1548 = vmatprep.subr.mxu0 0.0
      %1549 = vmatpush1.msra.mxu0 0.0
      %1550 = vmatprep.subr.mxu0 0.0
      %1551 = vmatpush1.msra.mxu0 0.0
      %1552 = vmatprep.subr.mxu0 0.0
      %1553 = vmatpush1.msra.mxu0 0.0
      %1554 = vmatprep.subr.mxu0 0.0
      %1555 = vmatpush1.msra.mxu0 0.0
      %1556 = vmatprep.subr.mxu0 0.0
      %1557 = vmatpush1.msra.mxu0 0.0
      %1558 = vmatprep.subr.mxu0 0.0
      %1559 = vmatpush1.msra.mxu0 0.0
      %1560 = vmatprep.subr.mxu0 0.0
      %1561 = vmatpush1.msra.mxu0 0.0
      %1562 = vmatprep.subr.mxu0 0.0
      %1563 = vmatpush1.msra.mxu0 0.0
      %1564 = vmatprep.subr.mxu0 0.0
      %1565 = vmatpush1.msra.mxu0 0.0
      %1566 = vmatprep.subr.mxu0 0.0
      %1567 = vmatpush1.msra.mxu0 0.0
      %1568 = vmatprep.subr.mxu0 0.0
      %1569 = vmatpush1.msra.mxu0 0.0
      %1570 = vmatprep.subr.mxu0 0.0
      %1571 = vmatpush1.msra.mxu0 0.0
      %1572 = vmatprep.subr.mxu0 0.0
      %1573 = vmatpush1.msra.mxu0 0.0
      %1574 = vmatprep.mubr.f32.mxu0 0.0
      %1575 = vmatmul.mubr.f32.gmra.mrb[0].mxu0 %v1331
      %v1576 = vpop.f32.mrb[0].mxu0
      %v1577 = vadd.f32 %v1507, %v1576
      %v1578 = vpop.f32.mrb[0].mxu0
      %1579 = vdwg.mxu0
      %v1580 = vld [vmem:[%s15] sm:$0x1]
      %v1582 = vlaneseq
      %v1583 = vshrl.u32 %v1582, 7
      %v1584 = vsub.s32 0, %v1583
      %v1585 = vrot.slane %v1580, %v1584
      %v1587 = vadd.f32 %v1577, %v1585
      %v1588 = vld [vmem:[%s17] sm:$0xff]
      %v1589 = vld [vmem:[%s17 + $0x8] sm:$0xff]
      %v1590 = vld [vmem:[%s17 + $0x10] sm:$0xff]
      %v1591 = vld [vmem:[%s17 + $0x18] sm:$0xff]
      %v1592 = vld [vmem:[%s19] sm:$0x3]
      %v1594 = vlaneseq
      %v1595 = vshrl.u32 %v1594, 7
      %v1596 = vsub.s32 0, %v1595
      %v1597 = vrot.slane %v1592, %v1596
      %v1598 = vlaneseq
      %v1599 = vshrl.u32 %v1598, 7
      %v1600 = vsub.s32 1, %v1599
      %v1601 = vrot.slane %v1592, %v1600
      %v1605 = vsel %vm1329, %v1587, 0
      %1607 = vmatprep.subr.mxu0 %v1589
      %1608 = vmatpush1.msra.mxu0 %v1588
      %1609 = vmatprep.subr.mxu0 %v1591
      %1610 = vmatpush1.msra.mxu0 %v1590
      %1611 = vmatprep.subr.mxu0 0.0
      %1612 = vmatpush1.msra.mxu0 0.0
      %1613 = vmatprep.subr.mxu0 0.0
      %1614 = vmatpush1.msra.mxu0 0.0
      %1615 = vmatprep.subr.mxu0 0.0
      %1616 = vmatpush1.msra.mxu0 0.0
      %1617 = vmatprep.subr.mxu0 0.0
      %1618 = vmatpush1.msra.mxu0 0.0
      %1619 = vmatprep.subr.mxu0 0.0
      %1620 = vmatpush1.msra.mxu0 0.0
      %1621 = vmatprep.subr.mxu0 0.0
      %1622 = vmatpush1.msra.mxu0 0.0
      %1623 = vmatprep.subr.mxu0 0.0
      %1624 = vmatpush1.msra.mxu0 0.0
      %1625 = vmatprep.subr.mxu0 0.0
      %1626 = vmatpush1.msra.mxu0 0.0
      %1627 = vmatprep.subr.mxu0 0.0
      %1628 = vmatpush1.msra.mxu0 0.0
      %1629 = vmatprep.subr.mxu0 0.0
      %1630 = vmatpush1.msra.mxu0 0.0
      %1631 = vmatprep.subr.mxu0 0.0
      %1632 = vmatpush1.msra.mxu0 0.0
      %1633 = vmatprep.subr.mxu0 0.0
      %1634 = vmatpush1.msra.mxu0 0.0
      %1635 = vmatprep.subr.mxu0 0.0
      %1636 = vmatpush1.msra.mxu0 0.0
      %1637 = vmatprep.subr.mxu0 0.0
      %1638 = vmatpush1.msra.mxu0 0.0
      %1639 = vmatprep.subr.mxu0 0.0
      %1640 = vmatpush1.msra.mxu0 0.0
      %1641 = vmatprep.subr.mxu0 0.0
      %1642 = vmatpush1.msra.mxu0 0.0
      %1643 = vmatprep.subr.mxu0 0.0
      %1644 = vmatpush1.msra.mxu0 0.0
      %1645 = vmatprep.subr.mxu0 0.0
      %1646 = vmatpush1.msra.mxu0 0.0
      %1647 = vmatprep.subr.mxu0 0.0
      %1648 = vmatpush1.msra.mxu0 0.0
      %1649 = vmatprep.subr.mxu0 0.0
      %1650 = vmatpush1.msra.mxu0 0.0
      %1651 = vmatprep.subr.mxu0 0.0
      %1652 = vmatpush1.msra.mxu0 0.0
      %1653 = vmatprep.subr.mxu0 0.0
      %1654 = vmatpush1.msra.mxu0 0.0
      %1655 = vmatprep.subr.mxu0 0.0
      %1656 = vmatpush1.msra.mxu0 0.0
      %1657 = vmatprep.subr.mxu0 0.0
      %1658 = vmatpush1.msra.mxu0 0.0
      %1659 = vmatprep.subr.mxu0 0.0
      %1660 = vmatpush1.msra.mxu0 0.0
      %1661 = vmatprep.subr.mxu0 0.0
      %1662 = vmatpush1.msra.mxu0 0.0
      %1663 = vmatprep.subr.mxu0 0.0
      %1664 = vmatpush1.msra.mxu0 0.0
      %1665 = vmatprep.subr.mxu0 0.0
      %1666 = vmatpush1.msra.mxu0 0.0
      %1667 = vmatprep.subr.mxu0 0.0
      %1668 = vmatpush1.msra.mxu0 0.0
      %1669 = vmatprep.subr.mxu0 0.0
      %1670 = vmatpush1.msra.mxu0 0.0
      %1671 = vmatprep.mubr.f32.mxu0 0.0
      %1672 = vmatmul.mubr.f32.gmra.mrb[0].mxu0 %v1605
      %v1673 = vpop.f32.mrb[0].mxu0
      %v1674 = vadd.f32 %v1597, %v1673
      %v1675 = vpop.f32.mrb[0].mxu0
      %v1676 = vadd.f32 %v1601, %v1675
      %1677 = vdwg.mxu0
      %vm1678 = vcmp.gt.f32.partialorder %v1674, 0.0
      %vm1679 = vcmp.gt.f32.partialorder %v1676, 0.0
      %v1680 = vmul.f32 %v1674, 0.1
      %v1681 = vmul.f32 %v1676, 0.1
      %v1682 = vsel %vm1678, %v1674, %v1680
      %v1683 = vsel %vm1679, %v1676, %v1681
      %v1684 = vld [vmem:[%s23] sm:$0xff]
      %v1685 = vld [vmem:[%s23 + $0x8] sm:$0xff]
      %v1686 = vld [vmem:[%s21] sm:$0xff]
      %v1687 = vld [vmem:[%s21 + $0x8] sm:$0xff]
      %v1688 = vld [vmem:[%s21 + $0x10] sm:$0xff]
      %v1689 = vld [vmem:[%s21 + $0x18] sm:$0xff]
      %v1690 = vld [vmem:[%s21 + $0x20] sm:$0xff]
      %v1691 = vld [vmem:[%s21 + $0x28] sm:$0xff]
      %v1692 = vld [vmem:[%s21 + $0x30] sm:$0xff]
      %v1693 = vld [vmem:[%s21 + $0x38] sm:$0xff]
      %v1694 = vld [vmem:[%s21 + $0x40] sm:$0xff]
      %v1695 = vld [vmem:[%s21 + $0x48] sm:$0xff]
      %v1696 = vld [vmem:[%s21 + $0x50] sm:$0xff]
      %v1697 = vld [vmem:[%s21 + $0x58] sm:$0xff]
      %v1698 = vld [vmem:[%s21 + $0x60] sm:$0xff]
      %v1699 = vld [vmem:[%s21 + $0x68] sm:$0xff]
      %v1700 = vld [vmem:[%s21 + $0x70] sm:$0xff]
      %v1701 = vld [vmem:[%s21 + $0x78] sm:$0xff]
      %v1702 = vld [vmem:[%s21 + $0x80] sm:$0xff]
      %v1703 = vld [vmem:[%s21 + $0x88] sm:$0xff]
      %v1704 = vld [vmem:[%s21 + $0x90] sm:$0xff]
      %v1705 = vld [vmem:[%s21 + $0x98] sm:$0xff]
      %v1706 = vld [vmem:[%s21 + $0xa0] sm:$0xff]
      %v1707 = vld [vmem:[%s21 + $0xa8] sm:$0xff]
      %v1708 = vld [vmem:[%s21 + $0xb0] sm:$0xff]
      %v1709 = vld [vmem:[%s21 + $0xb8] sm:$0xff]
      %v1711 = vsel %vm1436, %v1683, 0
      %1713 = vmatprep.subr.mxu0 0.0
      %1714 = vmatpush1.msra.mxu0 %v1686
      %1715 = vmatprep.subr.mxu0 0.0
      %1716 = vmatpush1.msra.mxu0 %v1687
      %1717 = vmatprep.subr.mxu0 0.0
      %1718 = vmatpush1.msra.mxu0 %v1688
      %1719 = vmatprep.subr.mxu0 0.0
      %1720 = vmatpush1.msra.mxu0 %v1689
      %1721 = vmatprep.subr.mxu0 0.0
      %1722 = vmatpush1.msra.mxu0 %v1690
      %1723 = vmatprep.subr.mxu0 0.0
      %1724 = vmatpush1.msra.mxu0 %v1691
      %1725 = vmatprep.subr.mxu0 0.0
      %1726 = vmatpush1.msra.mxu0 %v1692
      %1727 = vmatprep.subr.mxu0 0.0
      %1728 = vmatpush1.msra.mxu0 %v1693
      %1729 = vmatprep.subr.mxu0 0.0
      %1730 = vmatpush1.msra.mxu0 %v1694
      %1731 = vmatprep.subr.mxu0 0.0
      %1732 = vmatpush1.msra.mxu0 %v1695
      %1733 = vmatprep.subr.mxu0 0.0
      %1734 = vmatpush1.msra.mxu0 %v1696
      %1735 = vmatprep.subr.mxu0 0.0
      %1736 = vmatpush1.msra.mxu0 %v1697
      %1737 = vmatprep.subr.mxu0 0.0
      %1738 = vmatpush1.msra.mxu0 %v1698
      %1739 = vmatprep.subr.mxu0 0.0
      %1740 = vmatpush1.msra.mxu0 %v1699
      %1741 = vmatprep.subr.mxu0 0.0
      %1742 = vmatpush1.msra.mxu0 %v1700
      %1743 = vmatprep.subr.mxu0 0.0
      %1744 = vmatpush1.msra.mxu0 %v1701
      %1745 = vmatprep.subr.mxu0 0.0
      %1746 = vmatpush1.msra.mxu0 %v1702
      %1747 = vmatprep.subr.mxu0 0.0
      %1748 = vmatpush1.msra.mxu0 %v1703
      %1749 = vmatprep.subr.mxu0 0.0
      %1750 = vmatpush1.msra.mxu0 %v1704
      %1751 = vmatprep.subr.mxu0 0.0
      %1752 = vmatpush1.msra.mxu0 %v1705
      %1753 = vmatprep.subr.mxu0 0.0
      %1754 = vmatpush1.msra.mxu0 %v1706
      %1755 = vmatprep.subr.mxu0 0.0
      %1756 = vmatpush1.msra.mxu0 %v1707
      %1757 = vmatprep.subr.mxu0 0.0
      %1758 = vmatpush1.msra.mxu0 %v1708
      %1759 = vmatprep.subr.mxu0 0.0
      %1760 = vmatpush1.msra.mxu0 %v1709
      %1761 = vmatprep.subr.mxu0 0.0
      %1762 = vmatpush1.msra.mxu0 0.0
      %1763 = vmatprep.subr.mxu0 0.0
      %1764 = vmatpush1.msra.mxu0 0.0
      %1765 = vmatprep.subr.mxu0 0.0
      %1766 = vmatpush1.msra.mxu0 0.0
      %1767 = vmatprep.subr.mxu0 0.0
      %1768 = vmatpush1.msra.mxu0 0.0
      %1769 = vmatprep.subr.mxu0 0.0
      %1770 = vmatpush1.msra.mxu0 0.0
      %1771 = vmatprep.subr.mxu0 0.0
      %1772 = vmatpush1.msra.mxu0 0.0
      %1773 = vmatprep.subr.mxu0 0.0
      %1774 = vmatpush1.msra.mxu0 0.0
      %1775 = vmatprep.subr.mxu0 0.0
      %1776 = vmatpush1.msra.mxu0 0.0
      %1777 = vmatprep.mubr.f32.mxu0 %v1711
      %1778 = vmatmul.mubr.f32.gmra.mrb[0].mxu0 %v1682
      %v1779 = vpop.f32.mrb[0].mxu0
      %v1780 = vadd.f32 0.0, %v1779
      %v1781 = vpop.f32.mrb[0].mxu0
      %1782 = vdwg.mxu0
      %1783 = vmatprep.subr.mxu0 0.0
      %1784 = vmatpush1.msra.mxu0 %v1684
      %1785 = vmatprep.subr.mxu0 0.0
      %1786 = vmatpush1.msra.mxu0 %v1685
      %1787 = vmatprep.subr.mxu0 0.0
      %1788 = vmatpush1.msra.mxu0 0.0
      %1789 = vmatprep.subr.mxu0 0.0
      %1790 = vmatpush1.msra.mxu0 0.0
      %1791 = vmatprep.subr.mxu0 0.0
      %1792 = vmatpush1.msra.mxu0 0.0
      %1793 = vmatprep.subr.mxu0 0.0
      %1794 = vmatpush1.msra.mxu0 0.0
      %1795 = vmatprep.subr.mxu0 0.0
      %1796 = vmatpush1.msra.mxu0 0.0
      %1797 = vmatprep.subr.mxu0 0.0
      %1798 = vmatpush1.msra.mxu0 0.0
      %1799 = vmatprep.subr.mxu0 0.0
      %1800 = vmatpush1.msra.mxu0 0.0
      %1801 = vmatprep.subr.mxu0 0.0
      %1802 = vmatpush1.msra.mxu0 0.0
      %1803 = vmatprep.subr.mxu0 0.0
      %1804 = vmatpush1.msra.mxu0 0.0
      %1805 = vmatprep.subr.mxu0 0.0
      %1806 = vmatpush1.msra.mxu0 0.0
      %1807 = vmatprep.subr.mxu0 0.0
      %1808 = vmatpush1.msra.mxu0 0.0
      %1809 = vmatprep.subr.mxu0 0.0
      %1810 = vmatpush1.msra.mxu0 0.0
      %1811 = vmatprep.subr.mxu0 0.0
      %1812 = vmatpush1.msra.mxu0 0.0
      %1813 = vmatprep.subr.mxu0 0.0
      %1814 = vmatpush1.msra.mxu0 0.0
      %1815 = vmatprep.subr.mxu0 0.0
      %1816 = vmatpush1.msra.mxu0 0.0
      %1817 = vmatprep.subr.mxu0 0.0
      %1818 = vmatpush1.msra.mxu0 0.0
      %1819 = vmatprep.subr.mxu0 0.0
      %1820 = vmatpush1.msra.mxu0 0.0
      %1821 = vmatprep.subr.mxu0 0.0
      %1822 = vmatpush1.msra.mxu0 0.0
      %1823 = vmatprep.subr.mxu0 0.0
      %1824 = vmatpush1.msra.mxu0 0.0
      %1825 = vmatprep.subr.mxu0 0.0
      %1826 = vmatpush1.msra.mxu0 0.0
      %1827 = vmatprep.subr.mxu0 0.0
      %1828 = vmatpush1.msra.mxu0 0.0
      %1829 = vmatprep.subr.mxu0 0.0
      %1830 = vmatpush1.msra.mxu0 0.0
      %1831 = vmatprep.subr.mxu0 0.0
      %1832 = vmatpush1.msra.mxu0 0.0
      %1833 = vmatprep.subr.mxu0 0.0
      %1834 = vmatpush1.msra.mxu0 0.0
      %1835 = vmatprep.subr.mxu0 0.0
      %1836 = vmatpush1.msra.mxu0 0.0
      %1837 = vmatprep.subr.mxu0 0.0
      %1838 = vmatpush1.msra.mxu0 0.0
      %1839 = vmatprep.subr.mxu0 0.0
      %1840 = vmatpush1.msra.mxu0 0.0
      %1841 = vmatprep.subr.mxu0 0.0
      %1842 = vmatpush1.msra.mxu0 0.0
      %1843 = vmatprep.subr.mxu0 0.0
      %1844 = vmatpush1.msra.mxu0 0.0
      %1845 = vmatprep.subr.mxu0 0.0
      %1846 = vmatpush1.msra.mxu0 0.0
      %1847 = vmatprep.mubr.f32.mxu0 0.0
      %1848 = vmatmul.mubr.f32.gmra.mrb[0].mxu0 %v1605
      %v1849 = vpop.f32.mrb[0].mxu0
      %v1850 = vadd.f32 %v1780, %v1849
      %v1851 = vpop.f32.mrb[0].mxu0
      %1852 = vdwg.mxu0
      %v1853 = vld [vmem:[%s25] sm:$0x1]
      %v1855 = vlaneseq
      %v1856 = vshrl.u32 %v1855, 7
      %v1857 = vsub.s32 0, %v1856
      %v1858 = vrot.slane %v1853, %v1857
      %v1860 = vadd.f32 %v1850, %v1858
      %v1861 = vld [vmem:[%s3] sm:$0xff]
      %v1862 = vld [vmem:[%s3 + $0x8] sm:$0x1]
      %vm1863 = vcmask 56320
      %v1865 = vsel %vm1863, %v1861, 0
      %v1868 = vsel %vm1863, %v1862, 0
      %vm1870 = vcmask 1046528
      %v1872 = vsel %vm1870, %v1860, 0
      %1874 = vmatprep.subr.mxu0 0.0
      %1875 = vmatpush1.msra.mxu0 %v1872
      %1876 = vmatprep.subr.mxu0 0.0
      %1877 = vmatpush1.msra.mxu0 0.0
      %1878 = vmatprep.subr.mxu0 0.0
      %1879 = vmatpush1.msra.mxu0 0.0
      %1880 = vmatprep.subr.mxu0 0.0
      %1881 = vmatpush1.msra.mxu0 0.0
      %1882 = vmatprep.subr.mxu0 0.0
      %1883 = vmatpush1.msra.mxu0 0.0
      %1884 = vmatprep.subr.mxu0 0.0
      %1885 = vmatpush1.msra.mxu0 0.0
      %1886 = vmatprep.subr.mxu0 0.0
      %1887 = vmatpush1.msra.mxu0 0.0
      %1888 = vmatprep.subr.mxu0 0.0
      %1889 = vmatpush1.msra.mxu0 0.0
      %1890 = vmatprep.subr.mxu0 0.0
      %1891 = vmatpush1.msra.mxu0 0.0
      %1892 = vmatprep.subr.mxu0 0.0
      %1893 = vmatpush1.msra.mxu0 0.0
      %1894 = vmatprep.subr.mxu0 0.0
      %1895 = vmatpush1.msra.mxu0 0.0
      %1896 = vmatprep.subr.mxu0 0.0
      %1897 = vmatpush1.msra.mxu0 0.0
      %1898 = vmatprep.subr.mxu0 0.0
      %1899 = vmatpush1.msra.mxu0 0.0
      %1900 = vmatprep.subr.mxu0 0.0
      %1901 = vmatpush1.msra.mxu0 0.0
      %1902 = vmatprep.subr.mxu0 0.0
      %1903 = vmatpush1.msra.mxu0 0.0
      %1904 = vmatprep.subr.mxu0 0.0
      %1905 = vmatpush1.msra.mxu0 0.0
      %1906 = vmatprep.subr.mxu0 0.0
      %1907 = vmatpush1.msra.mxu0 0.0
      %1908 = vmatprep.subr.mxu0 0.0
      %1909 = vmatpush1.msra.mxu0 0.0
      %1910 = vmatprep.subr.mxu0 0.0
      %1911 = vmatpush1.msra.mxu0 0.0
      %1912 = vmatprep.subr.mxu0 0.0
      %1913 = vmatpush1.msra.mxu0 0.0
      %1914 = vmatprep.subr.mxu0 0.0
      %1915 = vmatpush1.msra.mxu0 0.0
      %1916 = vmatprep.subr.mxu0 0.0
      %1917 = vmatpush1.msra.mxu0 0.0
      %1918 = vmatprep.subr.mxu0 0.0
      %1919 = vmatpush1.msra.mxu0 0.0
      %1920 = vmatprep.subr.mxu0 0.0
      %1921 = vmatpush1.msra.mxu0 0.0
      %1922 = vmatprep.subr.mxu0 0.0
      %1923 = vmatpush1.msra.mxu0 0.0
      %1924 = vmatprep.subr.mxu0 0.0
      %1925 = vmatpush1.msra.mxu0 0.0
      %1926 = vmatprep.subr.mxu0 0.0
      %1927 = vmatpush1.msra.mxu0 0.0
      %1928 = vmatprep.subr.mxu0 0.0
      %1929 = vmatpush1.msra.mxu0 0.0
      %1930 = vmatprep.subr.mxu0 0.0
      %1931 = vmatpush1.msra.mxu0 0.0
      %1932 = vmatprep.subr.mxu0 0.0
      %1933 = vmatpush1.msra.mxu0 0.0
      %1934 = vmatprep.subr.mxu0 0.0
      %1935 = vmatpush1.msra.mxu0 0.0
      %1936 = vmatprep.subr.mxu0 0.0
      %1937 = vmatpush1.msra.mxu0 0.0
      %1938 = vmatprep.mubr.f32.mxu0 0.0
      %1939 = vmatmul.mubr.f32.gmra.mrb[0].mxu0 %v1865
      %v1940 = vpop.f32.mrb[0].mxu0
      %v1941 = vadd.f32 0.0, %v1940
      %v1942 = vpop.f32.mrb[0].mxu0
      %1943 = vmatprep.mubr.f32.mxu0 0.0
      %1944 = vmatmul.mubr.f32.gmra.mrb[0].mxu0 %v1868
      %v1945 = vpop.f32.mrb[0].mxu0
      %v1946 = vadd.f32 0.0, %v1945
      %v1947 = vpop.f32.mrb[0].mxu0
      %1948 = vdwg.mxu0
      %v1949 = vld [vmem:[%s27] sm:$0xff]
      %v1950 = vld [vmem:[%s27 + $0x8] sm:$0xff]
      %v1951 = vld [vmem:[%s27 + $0x10] sm:$0xff]
      %v1952 = vld [vmem:[%s27 + $0x18] sm:$0xff]
      %v1953 = vld [vmem:[%s27 + $0x20] sm:$0xf]
      %v1954 = vld [vmem:[%s29] sm:$0xff]
      %v1955 = vld [vmem:[%s29 + $0x8] sm:$0xff]
      %v1956 = vld [vmem:[%s29 + $0x10] sm:$0xff]
      %v1957 = vld [vmem:[%s29 + $0x18] sm:$0xff]
      %v1958 = vld [vmem:[%s29 + $0x20] sm:$0xf]
      %1960 = vset.pattern.permute.xlu0 0
      %1961 = vperm.xlu0 %1960, %v1954
      %v1962 = vpop.permute.xlu0 %1961
      %1965 = vset.pattern.permute.xlu0 0
      %1966 = vperm.xlu0 %1965, %v1955
      %v1967 = vpop.permute.xlu0 %1966
      %1970 = vset.pattern.permute.xlu0 0
      %1971 = vperm.xlu0 %1970, %v1956
      %v1972 = vpop.permute.xlu0 %1971
      %1975 = vset.pattern.permute.xlu0 0
      %1976 = vperm.xlu0 %1975, %v1957
      %v1977 = vpop.permute.xlu0 %1976
      %1980 = vset.pattern.permute.xlu0 0
      %1981 = vperm.xlu0 %1980, %v1958
      %v1982 = vpop.permute.xlu0 %1981
      %vm1984 = vcmask 72704
      %v1986 = vsel %vm1984, %v1949, 0
      %v1989 = vsel %vm1984, %v1950, 0
      %v1992 = vsel %vm1984, %v1951, 0
      %v1995 = vsel %vm1984, %v1952, 0
      %v1998 = vsel %vm1984, %v1953, 0
      %vm2000 = vcmask 1040384
      %v2002 = vsel %vm2000, %v1946, 0
      %2004 = vmatprep.subr.mxu0 0.0
      %2005 = vmatpush1.msra.mxu0 %v1941
      %2006 = vmatprep.subr.mxu0 0.0
      %2007 = vmatpush1.msra.mxu0 %v2002
      %2008 = vmatprep.subr.mxu0 0.0
      %2009 = vmatpush1.msra.mxu0 0.0
      %2010 = vmatprep.subr.mxu0 0.0
      %2011 = vmatpush1.msra.mxu0 0.0
      %2012 = vmatprep.subr.mxu0 0.0
      %2013 = vmatpush1.msra.mxu0 0.0
      %2014 = vmatprep.subr.mxu0 0.0
      %2015 = vmatpush1.msra.mxu0 0.0
      %2016 = vmatprep.subr.mxu0 0.0
      %2017 = vmatpush1.msra.mxu0 0.0
      %2018 = vmatprep.subr.mxu0 0.0
      %2019 = vmatpush1.msra.mxu0 0.0
      %2020 = vmatprep.subr.mxu0 0.0
      %2021 = vmatpush1.msra.mxu0 0.0
      %2022 = vmatprep.subr.mxu0 0.0
      %2023 = vmatpush1.msra.mxu0 0.0
      %2024 = vmatprep.subr.mxu0 0.0
      %2025 = vmatpush1.msra.mxu0 0.0
      %2026 = vmatprep.subr.mxu0 0.0
      %2027 = vmatpush1.msra.mxu0 0.0
      %2028 = vmatprep.subr.mxu0 0.0
      %2029 = vmatpush1.msra.mxu0 0.0
      %2030 = vmatprep.subr.mxu0 0.0
      %2031 = vmatpush1.msra.mxu0 0.0
      %2032 = vmatprep.subr.mxu0 0.0
      %2033 = vmatpush1.msra.mxu0 0.0
      %2034 = vmatprep.subr.mxu0 0.0
      %2035 = vmatpush1.msra.mxu0 0.0
      %2036 = vmatprep.subr.mxu0 0.0
      %2037 = vmatpush1.msra.mxu0 0.0
      %2038 = vmatprep.subr.mxu0 0.0
      %2039 = vmatpush1.msra.mxu0 0.0
      %2040 = vmatprep.subr.mxu0 0.0
      %2041 = vmatpush1.msra.mxu0 0.0
      %2042 = vmatprep.subr.mxu0 0.0
      %2043 = vmatpush1.msra.mxu0 0.0
      %2044 = vmatprep.subr.mxu0 0.0
      %2045 = vmatpush1.msra.mxu0 0.0
      %2046 = vmatprep.subr.mxu0 0.0
      %2047 = vmatpush1.msra.mxu0 0.0
      %2048 = vmatprep.subr.mxu0 0.0
      %2049 = vmatpush1.msra.mxu0 0.0
      %2050 = vmatprep.subr.mxu0 0.0
      %2051 = vmatpush1.msra.mxu0 0.0
      %2052 = vmatprep.subr.mxu0 0.0
      %2053 = vmatpush1.msra.mxu0 0.0
      %2054 = vmatprep.subr.mxu0 0.0
      %2055 = vmatpush1.msra.mxu0 0.0
      %2056 = vmatprep.subr.mxu0 0.0
      %2057 = vmatpush1.msra.mxu0 0.0
      %2058 = vmatprep.subr.mxu0 0.0
      %2059 = vmatpush1.msra.mxu0 0.0
      %2060 = vmatprep.subr.mxu0 0.0
      %2061 = vmatpush1.msra.mxu0 0.0
      %2062 = vmatprep.subr.mxu0 0.0
      %2063 = vmatpush1.msra.mxu0 0.0
      %2064 = vmatprep.subr.mxu0 0.0
      %2065 = vmatpush1.msra.mxu0 0.0
      %2066 = vmatprep.subr.mxu0 0.0
      %2067 = vmatpush1.msra.mxu0 0.0
      %2068 = vmatprep.mubr.f32.mxu0 0.0
      %2069 = vmatmul.mubr.f32.gmra.mrb[0].mxu0 %v1986
      %v2070 = vpop.f32.mrb[0].mxu0
      %v2071 = vadd.f32 %v1962, %v2070
      %v2072 = vpop.f32.mrb[0].mxu0
      %2073 = vmatprep.mubr.f32.mxu0 0.0
      %2074 = vmatmul.mubr.f32.gmra.mrb[0].mxu0 %v1989
      %v2075 = vpop.f32.mrb[0].mxu0
      %v2076 = vadd.f32 %v1967, %v2075
      %v2077 = vpop.f32.mrb[0].mxu0
      %2078 = vmatprep.mubr.f32.mxu0 0.0
      %2079 = vmatmul.mubr.f32.gmra.mrb[0].mxu0 %v1992
      %v2080 = vpop.f32.mrb[0].mxu0
      %v2081 = vadd.f32 %v1972, %v2080
      %v2082 = vpop.f32.mrb[0].mxu0
      %2083 = vmatprep.mubr.f32.mxu0 0.0
      %2084 = vmatmul.mubr.f32.gmra.mrb[0].mxu0 %v1995
      %v2085 = vpop.f32.mrb[0].mxu0
      %v2086 = vadd.f32 %v1977, %v2085
      %v2087 = vpop.f32.mrb[0].mxu0
      %2088 = vmatprep.mubr.f32.mxu0 0.0
      %2089 = vmatmul.mubr.f32.gmra.mrb[0].mxu0 %v1998
      %v2090 = vpop.f32.mrb[0].mxu0
      %v2091 = vadd.f32 %v1982, %v2090
      %v2092 = vpop.f32.mrb[0].mxu0
      %2093 = vdwg.mxu0
      %vm2094 = vcmp.gt.f32.partialorder %v2071, 0.0
      %vm2095 = vcmp.gt.f32.partialorder %v2076, 0.0
      %vm2096 = vcmp.gt.f32.partialorder %v2081, 0.0
      %vm2097 = vcmp.gt.f32.partialorder %v2086, 0.0
      %vm2098 = vcmp.gt.f32.partialorder %v2091, 0.0
      %v2099 = vmul.f32 %v2071, 0.1
      %v2100 = vmul.f32 %v2076, 0.1
      %v2101 = vmul.f32 %v2081, 0.1
      %v2102 = vmul.f32 %v2086, 0.1
      %v2103 = vmul.f32 %v2091, 0.1
      %v2104 = vsel %vm2094, %v2071, %v2099
      %v2105 = vsel %vm2095, %v2076, %v2100
      %v2106 = vsel %vm2096, %v2081, %v2101
      %v2107 = vsel %vm2097, %v2086, %v2102
      %v2108 = vsel %vm2098, %v2091, %v2103
      %v2109 = vld [vmem:[%s31] sm:$0xff]
      %v2110 = vld [vmem:[%s31 + $0x8] sm:$0x1]
      %vm2111 = vcmask 293888
      %v2113 = vsel %vm2111, %v2109, 0
      %v2116 = vsel %vm2111, %v2110, 0
      %vm2118 = vcmask 1043456
      %v2120 = vsel %vm2118, %v2108, 0
      %2122 = vmatprep.subr.mxu0 0.0
      %2123 = vmatpush1.msra.mxu0 %v2104
      %2124 = vmatprep.subr.mxu0 0.0
      %2125 = vmatpush1.msra.mxu0 %v2105
      %2126 = vmatprep.subr.mxu0 0.0
      %2127 = vmatpush1.msra.mxu0 %v2106
      %2128 = vmatprep.subr.mxu0 0.0
      %2129 = vmatpush1.msra.mxu0 %v2107
      %2130 = vmatprep.subr.mxu0 0.0
      %2131 = vmatpush1.msra.mxu0 %v2120
      %2132 = vmatprep.subr.mxu0 0.0
      %2133 = vmatpush1.msra.mxu0 0.0
      %2134 = vmatprep.subr.mxu0 0.0
      %2135 = vmatpush1.msra.mxu0 0.0
      %2136 = vmatprep.subr.mxu0 0.0
      %2137 = vmatpush1.msra.mxu0 0.0
      %2138 = vmatprep.subr.mxu0 0.0
      %2139 = vmatpush1.msra.mxu0 0.0
      %2140 = vmatprep.subr.mxu0 0.0
      %2141 = vmatpush1.msra.mxu0 0.0
      %2142 = vmatprep.subr.mxu0 0.0
      %2143 = vmatpush1.msra.mxu0 0.0
      %2144 = vmatprep.subr.mxu0 0.0
      %2145 = vmatpush1.msra.mxu0 0.0
      %2146 = vmatprep.subr.mxu0 0.0
      %2147 = vmatpush1.msra.mxu0 0.0
      %2148 = vmatprep.subr.mxu0 0.0
      %2149 = vmatpush1.msra.mxu0 0.0
      %2150 = vmatprep.subr.mxu0 0.0
      %2151 = vmatpush1.msra.mxu0 0.0
      %2152 = vmatprep.subr.mxu0 0.0
      %2153 = vmatpush1.msra.mxu0 0.0
      %2154 = vmatprep.subr.mxu0 0.0
      %2155 = vmatpush1.msra.mxu0 0.0
      %2156 = vmatprep.subr.mxu0 0.0
      %2157 = vmatpush1.msra.mxu0 0.0
      %2158 = vmatprep.subr.mxu0 0.0
      %2159 = vmatpush1.msra.mxu0 0.0
      %2160 = vmatprep.subr.mxu0 0.0
      %2161 = vmatpush1.msra.mxu0 0.0
      %2162 = vmatprep.subr.mxu0 0.0
      %2163 = vmatpush1.msra.mxu0 0.0
      %2164 = vmatprep.subr.mxu0 0.0
      %2165 = vmatpush1.msra.mxu0 0.0
      %2166 = vmatprep.subr.mxu0 0.0
      %2167 = vmatpush1.msra.mxu0 0.0
      %2168 = vmatprep.subr.mxu0 0.0
      %2169 = vmatpush1.msra.mxu0 0.0
      %2170 = vmatprep.subr.mxu0 0.0
      %2171 = vmatpush1.msra.mxu0 0.0
      %2172 = vmatprep.subr.mxu0 0.0
      %2173 = vmatpush1.msra.mxu0 0.0
      %2174 = vmatprep.subr.mxu0 0.0
      %2175 = vmatpush1.msra.mxu0 0.0
      %2176 = vmatprep.subr.mxu0 0.0
      %2177 = vmatpush1.msra.mxu0 0.0
      %2178 = vmatprep.subr.mxu0 0.0
      %2179 = vmatpush1.msra.mxu0 0.0
      %2180 = vmatprep.subr.mxu0 0.0
      %2181 = vmatpush1.msra.mxu0 0.0
      %2182 = vmatprep.subr.mxu0 0.0
      %2183 = vmatpush1.msra.mxu0 0.0
      %2184 = vmatprep.subr.mxu0 0.0
      %2185 = vmatpush1.msra.mxu0 0.0
      %2186 = vmatprep.mubr.f32.mxu0 0.0
      %2187 = vmatmul.mubr.f32.gmra.mrb[0].mxu0 %v2113
      %v2188 = vpop.f32.mrb[0].mxu0
      %v2189 = vadd.f32 0.0, %v2188
      %v2190 = vpop.f32.mrb[0].mxu0
      %2191 = vmatprep.mubr.f32.mxu0 0.0
      %2192 = vmatmul.mubr.f32.gmra.mrb[0].mxu0 %v2116
      %v2193 = vpop.f32.mrb[0].mxu0
      %v2194 = vadd.f32 0.0, %v2193
      %v2195 = vpop.f32.mrb[0].mxu0
      %2196 = vdwg.mxu0
      %v2197 = vadd.f32 %v1941, %v2189
      %v2198 = vadd.f32 %v1946, %v2194
      %v2199 = vld [vmem:[%s33] sm:$0xff]
      %v2200 = vld [vmem:[%s33 + $0x8] sm:$0x1]
      %2202 = vset.pattern.permute.xlu0 0
      %2203 = vperm.xlu0 %2202, %v2199
      %v2204 = vpop.permute.xlu0 %2203
      %2207 = vset.pattern.permute.xlu0 0
      %2208 = vperm.xlu0 %2207, %v2200
      %v2209 = vpop.permute.xlu0 %2208
      %v2211 = vadd.f32 %v2197, %v2204
      %v2212 = vadd.f32 %v2198, %v2209
      %v2213 = vld [vmem:[%s35] sm:$0xff]
      %v2214 = vld [vmem:[%s35 + $0x8] sm:$0xff]
      %v2215 = vld [vmem:[%s35 + $0x10] sm:$0xff]
      %v2216 = vld [vmem:[%s35 + $0x18] sm:$0xff]
      %v2217 = vld [vmem:[%s35 + $0x20] sm:$0xf]
      %v2218 = vld [vmem:[%s37] sm:$0xff]
      %v2219 = vld [vmem:[%s37 + $0x8] sm:$0xff]
      %v2220 = vld [vmem:[%s37 + $0x10] sm:$0xff]
      %v2221 = vld [vmem:[%s37 + $0x18] sm:$0xff]
      %v2222 = vld [vmem:[%s37 + $0x20] sm:$0xf]
      %2224 = vset.pattern.permute.xlu0 0
      %2225 = vperm.xlu0 %2224, %v2218
      %v2226 = vpop.permute.xlu0 %2225
      %2229 = vset.pattern.permute.xlu0 0
      %2230 = vperm.xlu0 %2229, %v2219
      %v2231 = vpop.permute.xlu0 %2230
      %2234 = vset.pattern.permute.xlu0 0
      %2235 = vperm.xlu0 %2234, %v2220
      %v2236 = vpop.permute.xlu0 %2235
      %2239 = vset.pattern.permute.xlu0 0
      %2240 = vperm.xlu0 %2239, %v2221
      %v2241 = vpop.permute.xlu0 %2240
      %2244 = vset.pattern.permute.xlu0 0
      %2245 = vperm.xlu0 %2244, %v2222
      %v2246 = vpop.permute.xlu0 %2245
      %v2249 = vsel %vm1984, %v2213, 0
      %v2252 = vsel %vm1984, %v2214, 0
      %v2255 = vsel %vm1984, %v2215, 0
      %v2258 = vsel %vm1984, %v2216, 0
      %v2261 = vsel %vm1984, %v2217, 0
      %v2264 = vsel %vm2000, %v2212, 0
      %2266 = vmatprep.subr.mxu0 0.0
      %2267 = vmatpush1.msra.mxu0 %v2211
      %2268 = vmatprep.subr.mxu0 0.0
      %2269 = vmatpush1.msra.mxu0 %v2264
      %2270 = vmatprep.subr.mxu0 0.0
      %2271 = vmatpush1.msra.mxu0 0.0
      %2272 = vmatprep.subr.mxu0 0.0
      %2273 = vmatpush1.msra.mxu0 0.0
      %2274 = vmatprep.subr.mxu0 0.0
      %2275 = vmatpush1.msra.mxu0 0.0
      %2276 = vmatprep.subr.mxu0 0.0
      %2277 = vmatpush1.msra.mxu0 0.0
      %2278 = vmatprep.subr.mxu0 0.0
      %2279 = vmatpush1.msra.mxu0 0.0
      %2280 = vmatprep.subr.mxu0 0.0
      %2281 = vmatpush1.msra.mxu0 0.0
      %2282 = vmatprep.subr.mxu0 0.0
      %2283 = vmatpush1.msra.mxu0 0.0
      %2284 = vmatprep.subr.mxu0 0.0
      %2285 = vmatpush1.msra.mxu0 0.0
      %2286 = vmatprep.subr.mxu0 0.0
      %2287 = vmatpush1.msra.mxu0 0.0
      %2288 = vmatprep.subr.mxu0 0.0
      %2289 = vmatpush1.msra.mxu0 0.0
      %2290 = vmatprep.subr.mxu0 0.0
      %2291 = vmatpush1.msra.mxu0 0.0
      %2292 = vmatprep.subr.mxu0 0.0
      %2293 = vmatpush1.msra.mxu0 0.0
      %2294 = vmatprep.subr.mxu0 0.0
      %2295 = vmatpush1.msra.mxu0 0.0
      %2296 = vmatprep.subr.mxu0 0.0
      %2297 = vmatpush1.msra.mxu0 0.0
      %2298 = vmatprep.subr.mxu0 0.0
      %2299 = vmatpush1.msra.mxu0 0.0
      %2300 = vmatprep.subr.mxu0 0.0
      %2301 = vmatpush1.msra.mxu0 0.0
      %2302 = vmatprep.subr.mxu0 0.0
      %2303 = vmatpush1.msra.mxu0 0.0
      %2304 = vmatprep.subr.mxu0 0.0
      %2305 = vmatpush1.msra.mxu0 0.0
      %2306 = vmatprep.subr.mxu0 0.0
      %2307 = vmatpush1.msra.mxu0 0.0
      %2308 = vmatprep.subr.mxu0 0.0
      %2309 = vmatpush1.msra.mxu0 0.0
      %2310 = vmatprep.subr.mxu0 0.0
      %2311 = vmatpush1.msra.mxu0 0.0
      %2312 = vmatprep.subr.mxu0 0.0
      %2313 = vmatpush1.msra.mxu0 0.0
      %2314 = vmatprep.subr.mxu0 0.0
      %2315 = vmatpush1.msra.mxu0 0.0
      %2316 = vmatprep.subr.mxu0 0.0
      %2317 = vmatpush1.msra.mxu0 0.0
      %2318 = vmatprep.subr.mxu0 0.0
      %2319 = vmatpush1.msra.mxu0 0.0
      %2320 = vmatprep.subr.mxu0 0.0
      %2321 = vmatpush1.msra.mxu0 0.0
      %2322 = vmatprep.subr.mxu0 0.0
      %2323 = vmatpush1.msra.mxu0 0.0
      %2324 = vmatprep.subr.mxu0 0.0
      %2325 = vmatpush1.msra.mxu0 0.0
      %2326 = vmatprep.subr.mxu0 0.0
      %2327 = vmatpush1.msra.mxu0 0.0
      %2328 = vmatprep.subr.mxu0 0.0
      %2329 = vmatpush1.msra.mxu0 0.0
      %2330 = vmatprep.mubr.f32.mxu0 0.0
      %2331 = vmatmul.mubr.f32.gmra.mrb[0].mxu0 %v2249
      %v2332 = vpop.f32.mrb[0].mxu0
      %v2333 = vadd.f32 %v2226, %v2332
      %v2334 = vpop.f32.mrb[0].mxu0
      %2335 = vmatprep.mubr.f32.mxu0 0.0
      %2336 = vmatmul.mubr.f32.gmra.mrb[0].mxu0 %v2252
      %v2337 = vpop.f32.mrb[0].mxu0
      %v2338 = vadd.f32 %v2231, %v2337
      %v2339 = vpop.f32.mrb[0].mxu0
      %2340 = vmatprep.mubr.f32.mxu0 0.0
      %2341 = vmatmul.mubr.f32.gmra.mrb[0].mxu0 %v2255
      %v2342 = vpop.f32.mrb[0].mxu0
      %v2343 = vadd.f32 %v2236, %v2342
      %v2344 = vpop.f32.mrb[0].mxu0
      %2345 = vmatprep.mubr.f32.mxu0 0.0
      %2346 = vmatmul.mubr.f32.gmra.mrb[0].mxu0 %v2258
      %v2347 = vpop.f32.mrb[0].mxu0
      %v2348 = vadd.f32 %v2241, %v2347
      %v2349 = vpop.f32.mrb[0].mxu0
      %2350 = vmatprep.mubr.f32.mxu0 0.0
      %2351 = vmatmul.mubr.f32.gmra.mrb[0].mxu0 %v2261
      %v2352 = vpop.f32.mrb[0].mxu0
      %v2353 = vadd.f32 %v2246, %v2352
      %v2354 = vpop.f32.mrb[0].mxu0
      %2355 = vdwg.mxu0
      %vm2356 = vcmp.gt.f32.partialorder %v2333, 0.0
      %vm2357 = vcmp.gt.f32.partialorder %v2338, 0.0
      %vm2358 = vcmp.gt.f32.partialorder %v2343, 0.0
      %vm2359 = vcmp.gt.f32.partialorder %v2348, 0.0
      %vm2360 = vcmp.gt.f32.partialorder %v2353, 0.0
      %v2361 = vmul.f32 %v2333, 0.1
      %v2362 = vmul.f32 %v2338, 0.1
      %v2363 = vmul.f32 %v2343, 0.1
      %v2364 = vmul.f32 %v2348, 0.1
      %v2365 = vmul.f32 %v2353, 0.1
      %v2366 = vsel %vm2356, %v2333, %v2361
      %v2367 = vsel %vm2357, %v2338, %v2362
      %v2368 = vsel %vm2358, %v2343, %v2363
      %v2369 = vsel %vm2359, %v2348, %v2364
      %v2370 = vsel %vm2360, %v2353, %v2365
      %v2371 = vld [vmem:[%s39] sm:$0xff]
      %v2372 = vld [vmem:[%s39 + $0x8] sm:$0x1]
      %v2374 = vsel %vm2111, %v2371, 0
      %v2377 = vsel %vm2111, %v2372, 0
      %v2380 = vsel %vm2118, %v2370, 0
      %2382 = vmatprep.subr.mxu0 0.0
      %2383 = vmatpush1.msra.mxu0 %v2366
      %2384 = vmatprep.subr.mxu0 0.0
      %2385 = vmatpush1.msra.mxu0 %v2367
      %2386 = vmatprep.subr.mxu0 0.0
      %2387 = vmatpush1.msra.mxu0 %v2368
      %2388 = vmatprep.subr.mxu0 0.0
      %2389 = vmatpush1.msra.mxu0 %v2369
      %2390 = vmatprep.subr.mxu0 0.0
      %2391 = vmatpush1.msra.mxu0 %v2380
      %2392 = vmatprep.subr.mxu0 0.0
      %2393 = vmatpush1.msra.mxu0 0.0
      %2394 = vmatprep.subr.mxu0 0.0
      %2395 = vmatpush1.msra.mxu0 0.0
      %2396 = vmatprep.subr.mxu0 0.0
      %2397 = vmatpush1.msra.mxu0 0.0
      %2398 = vmatprep.subr.mxu0 0.0
      %2399 = vmatpush1.msra.mxu0 0.0
      %2400 = vmatprep.subr.mxu0 0.0
      %2401 = vmatpush1.msra.mxu0 0.0
      %2402 = vmatprep.subr.mxu0 0.0
      %2403 = vmatpush1.msra.mxu0 0.0
      %2404 = vmatprep.subr.mxu0 0.0
      %2405 = vmatpush1.msra.mxu0 0.0
      %2406 = vmatprep.subr.mxu0 0.0
      %2407 = vmatpush1.msra.mxu0 0.0
      %2408 = vmatprep.subr.mxu0 0.0
      %2409 = vmatpush1.msra.mxu0 0.0
      %2410 = vmatprep.subr.mxu0 0.0
      %2411 = vmatpush1.msra.mxu0 0.0
      %2412 = vmatprep.subr.mxu0 0.0
      %2413 = vmatpush1.msra.mxu0 0.0
      %2414 = vmatprep.subr.mxu0 0.0
      %2415 = vmatpush1.msra.mxu0 0.0
      %2416 = vmatprep.subr.mxu0 0.0
      %2417 = vmatpush1.msra.mxu0 0.0
      %2418 = vmatprep.subr.mxu0 0.0
      %2419 = vmatpush1.msra.mxu0 0.0
      %2420 = vmatprep.subr.mxu0 0.0
      %2421 = vmatpush1.msra.mxu0 0.0
      %2422 = vmatprep.subr.mxu0 0.0
      %2423 = vmatpush1.msra.mxu0 0.0
      %2424 = vmatprep.subr.mxu0 0.0
      %2425 = vmatpush1.msra.mxu0 0.0
      %2426 = vmatprep.subr.mxu0 0.0
      %2427 = vmatpush1.msra.mxu0 0.0
      %2428 = vmatprep.subr.mxu0 0.0
      %2429 = vmatpush1.msra.mxu0 0.0
      %2430 = vmatprep.subr.mxu0 0.0
      %2431 = vmatpush1.msra.mxu0 0.0
      %2432 = vmatprep.subr.mxu0 0.0
      %2433 = vmatpush1.msra.mxu0 0.0
      %2434 = vmatprep.subr.mxu0 0.0
      %2435 = vmatpush1.msra.mxu0 0.0
      %2436 = vmatprep.subr.mxu0 0.0
      %2437 = vmatpush1.msra.mxu0 0.0
      %2438 = vmatprep.subr.mxu0 0.0
      %2439 = vmatpush1.msra.mxu0 0.0
      %2440 = vmatprep.subr.mxu0 0.0
      %2441 = vmatpush1.msra.mxu0 0.0
      %2442 = vmatprep.subr.mxu0 0.0
      %2443 = vmatpush1.msra.mxu0 0.0
      %2444 = vmatprep.subr.mxu0 0.0
      %2445 = vmatpush1.msra.mxu0 0.0
      %2446 = vmatprep.mubr.f32.mxu0 0.0
      %2447 = vmatmul.mubr.f32.gmra.mrb[0].mxu0 %v2374
      %v2448 = vpop.f32.mrb[0].mxu0
      %v2449 = vadd.f32 0.0, %v2448
      %v2450 = vpop.f32.mrb[0].mxu0
      %2451 = vmatprep.mubr.f32.mxu0 0.0
      %2452 = vmatmul.mubr.f32.gmra.mrb[0].mxu0 %v2377
      %v2453 = vpop.f32.mrb[0].mxu0
      %v2454 = vadd.f32 0.0, %v2453
      %v2455 = vpop.f32.mrb[0].mxu0
      %2456 = vdwg.mxu0
      %v2457 = vadd.f32 %v2211, %v2449
      %v2458 = vadd.f32 %v2212, %v2454
      %v2459 = vld [vmem:[%s41] sm:$0xff]
      %v2460 = vld [vmem:[%s41 + $0x8] sm:$0x1]
      %2462 = vset.pattern.permute.xlu0 0
      %2463 = vperm.xlu0 %2462, %v2459
      %v2464 = vpop.permute.xlu0 %2463
      %2467 = vset.pattern.permute.xlu0 0
      %2468 = vperm.xlu0 %2467, %v2460
      %v2469 = vpop.permute.xlu0 %2468
      %v2471 = vadd.f32 %v2457, %v2464
      %v2472 = vadd.f32 %v2458, %v2469
      %v2473 = vld [vmem:[%s5] sm:$0x7f]
      %v2475 = vsel %vm1984, %v2473, 0
      %v2478 = vsel %vm2000, %v2472, 0
      %2480 = vmatprep.subr.mxu0 0.0
      %2481 = vmatpush1.msra.mxu0 %v2471
      %2482 = vmatprep.subr.mxu0 0.0
      %2483 = vmatpush1.msra.mxu0 %v2478
      %2484 = vmatprep.subr.mxu0 0.0
      %2485 = vmatpush1.msra.mxu0 0.0
      %2486 = vmatprep.subr.mxu0 0.0
      %2487 = vmatpush1.msra.mxu0 0.0
      %2488 = vmatprep.subr.mxu0 0.0
      %2489 = vmatpush1.msra.mxu0 0.0
      %2490 = vmatprep.subr.mxu0 0.0
      %2491 = vmatpush1.msra.mxu0 0.0
      %2492 = vmatprep.subr.mxu0 0.0
      %2493 = vmatpush1.msra.mxu0 0.0
      %2494 = vmatprep.subr.mxu0 0.0
      %2495 = vmatpush1.msra.mxu0 0.0
      %2496 = vmatprep.subr.mxu0 0.0
      %2497 = vmatpush1.msra.mxu0 0.0
      %2498 = vmatprep.subr.mxu0 0.0
      %2499 = vmatpush1.msra.mxu0 0.0
      %2500 = vmatprep.subr.mxu0 0.0
      %2501 = vmatpush1.msra.mxu0 0.0
      %2502 = vmatprep.subr.mxu0 0.0
      %2503 = vmatpush1.msra.mxu0 0.0
      %2504 = vmatprep.subr.mxu0 0.0
      %2505 = vmatpush1.msra.mxu0 0.0
      %2506 = vmatprep.subr.mxu0 0.0
      %2507 = vmatpush1.msra.mxu0 0.0
      %2508 = vmatprep.subr.mxu0 0.0
      %2509 = vmatpush1.msra.mxu0 0.0
      %2510 = vmatprep.subr.mxu0 0.0
      %2511 = vmatpush1.msra.mxu0 0.0
      %2512 = vmatprep.subr.mxu0 0.0
      %2513 = vmatpush1.msra.mxu0 0.0
      %2514 = vmatprep.subr.mxu0 0.0
      %2515 = vmatpush1.msra.mxu0 0.0
      %2516 = vmatprep.subr.mxu0 0.0
      %2517 = vmatpush1.msra.mxu0 0.0
      %2518 = vmatprep.subr.mxu0 0.0
      %2519 = vmatpush1.msra.mxu0 0.0
      %2520 = vmatprep.subr.mxu0 0.0
      %2521 = vmatpush1.msra.mxu0 0.0
      %2522 = vmatprep.subr.mxu0 0.0
      %2523 = vmatpush1.msra.mxu0 0.0
      %2524 = vmatprep.subr.mxu0 0.0
      %2525 = vmatpush1.msra.mxu0 0.0
      %2526 = vmatprep.subr.mxu0 0.0
      %2527 = vmatpush1.msra.mxu0 0.0
      %2528 = vmatprep.subr.mxu0 0.0
      %2529 = vmatpush1.msra.mxu0 0.0
      %2530 = vmatprep.subr.mxu0 0.0
      %2531 = vmatpush1.msra.mxu0 0.0
      %2532 = vmatprep.subr.mxu0 0.0
      %2533 = vmatpush1.msra.mxu0 0.0
      %2534 = vmatprep.subr.mxu0 0.0
      %2535 = vmatpush1.msra.mxu0 0.0
      %2536 = vmatprep.subr.mxu0 0.0
      %2537 = vmatpush1.msra.mxu0 0.0
      %2538 = vmatprep.subr.mxu0 0.0
      %2539 = vmatpush1.msra.mxu0 0.0
      %2540 = vmatprep.subr.mxu0 0.0
      %2541 = vmatpush1.msra.mxu0 0.0
      %2542 = vmatprep.subr.mxu0 0.0
      %2543 = vmatpush1.msra.mxu0 0.0
      %2544 = vmatprep.mubr.f32.mxu0 0.0
      %2545 = vmatmul.mubr.f32.gmra.mrb[0].mxu0 %v2475
      %v2546 = vpop.f32.mrb[0].mxu0
      %v2547 = vadd.f32 0.0, %v2546
      %v2548 = vpop.f32.mrb[0].mxu0
      %2549 = vdwg.mxu0
      %v2550 = vld [vmem:[%s43] sm:$0xff]
      %v2551 = vld [vmem:[%s43 + $0x8] sm:$0xff]
      %v2552 = vld [vmem:[%s45] sm:$0x1]
      %v2554 = vlaneseq
      %v2555 = vshrl.u32 %v2554, 7
      %v2556 = vsub.s32 0, %v2555
      %v2557 = vrot.slane %v2552, %v2556
      %v2560 = vsel %vm1329, %v2547, 0
      %2562 = vmatprep.subr.mxu0 0.0
      %2563 = vmatpush1.msra.mxu0 %v2550
      %2564 = vmatprep.subr.mxu0 0.0
      %2565 = vmatpush1.msra.mxu0 %v2551
      %2566 = vmatprep.subr.mxu0 0.0
      %2567 = vmatpush1.msra.mxu0 0.0
      %2568 = vmatprep.subr.mxu0 0.0
      %2569 = vmatpush1.msra.mxu0 0.0
      %2570 = vmatprep.subr.mxu0 0.0
      %2571 = vmatpush1.msra.mxu0 0.0
      %2572 = vmatprep.subr.mxu0 0.0
      %2573 = vmatpush1.msra.mxu0 0.0
      %2574 = vmatprep.subr.mxu0 0.0
      %2575 = vmatpush1.msra.mxu0 0.0
      %2576 = vmatprep.subr.mxu0 0.0
      %2577 = vmatpush1.msra.mxu0 0.0
      %2578 = vmatprep.subr.mxu0 0.0
      %2579 = vmatpush1.msra.mxu0 0.0
      %2580 = vmatprep.subr.mxu0 0.0
      %2581 = vmatpush1.msra.mxu0 0.0
      %2582 = vmatprep.subr.mxu0 0.0
      %2583 = vmatpush1.msra.mxu0 0.0
      %2584 = vmatprep.subr.mxu0 0.0
      %2585 = vmatpush1.msra.mxu0 0.0
      %2586 = vmatprep.subr.mxu0 0.0
      %2587 = vmatpush1.msra.mxu0 0.0
      %2588 = vmatprep.subr.mxu0 0.0
      %2589 = vmatpush1.msra.mxu0 0.0
      %2590 = vmatprep.subr.mxu0 0.0
      %2591 = vmatpush1.msra.mxu0 0.0
      %2592 = vmatprep.subr.mxu0 0.0
      %2593 = vmatpush1.msra.mxu0 0.0
      %2594 = vmatprep.subr.mxu0 0.0
      %2595 = vmatpush1.msra.mxu0 0.0
      %2596 = vmatprep.subr.mxu0 0.0
      %2597 = vmatpush1.msra.mxu0 0.0
      %2598 = vmatprep.subr.mxu0 0.0
      %2599 = vmatpush1.msra.mxu0 0.0
      %2600 = vmatprep.subr.mxu0 0.0
      %2601 = vmatpush1.msra.mxu0 0.0
      %2602 = vmatprep.subr.mxu0 0.0
      %2603 = vmatpush1.msra.mxu0 0.0
      %2604 = vmatprep.subr.mxu0 0.0
      %2605 = vmatpush1.msra.mxu0 0.0
      %2606 = vmatprep.subr.mxu0 0.0
      %2607 = vmatpush1.msra.mxu0 0.0
      %2608 = vmatprep.subr.mxu0 0.0
      %2609 = vmatpush1.msra.mxu0 0.0
      %2610 = vmatprep.subr.mxu0 0.0
      %2611 = vmatpush1.msra.mxu0 0.0
      %2612 = vmatprep.subr.mxu0 0.0
      %2613 = vmatpush1.msra.mxu0 0.0
      %2614 = vmatprep.subr.mxu0 0.0
      %2615 = vmatpush1.msra.mxu0 0.0
      %2616 = vmatprep.subr.mxu0 0.0
      %2617 = vmatpush1.msra.mxu0 0.0
      %2618 = vmatprep.subr.mxu0 0.0
      %2619 = vmatpush1.msra.mxu0 0.0
      %2620 = vmatprep.subr.mxu0 0.0
      %2621 = vmatpush1.msra.mxu0 0.0
      %2622 = vmatprep.subr.mxu0 0.0
      %2623 = vmatpush1.msra.mxu0 0.0
      %2624 = vmatprep.subr.mxu0 0.0
      %2625 = vmatpush1.msra.mxu0 0.0
      %2626 = vmatprep.mubr.f32.mxu0 0.0
      %2627 = vmatmul.mubr.f32.gmra.mrb[0].mxu0 %v2560
      %v2628 = vpop.f32.mrb[0].mxu0
      %v2629 = vadd.f32 %v2557, %v2628
      %v2630 = vpop.f32.mrb[0].mxu0
      %2631 = vdwg.mxu0
      %v2632 = vld [vmem:[%s47] sm:$0xff]
      %v2633 = vld [vmem:[%s47 + $0x8] sm:$0xff]
      %v2634 = vld [vmem:[%s47 + $0x10] sm:$0xff]
      %v2635 = vld [vmem:[%s47 + $0x18] sm:$0xff]
      %v2636 = vld [vmem:[%s49] sm:$0x3]
      %v2638 = vlaneseq
      %v2639 = vshrl.u32 %v2638, 7
      %v2640 = vsub.s32 0, %v2639
      %v2641 = vrot.slane %v2636, %v2640
      %v2642 = vlaneseq
      %v2643 = vshrl.u32 %v2642, 7
      %v2644 = vsub.s32 1, %v2643
      %v2645 = vrot.slane %v2636, %v2644
      %2648 = vmatprep.subr.mxu0 %v2633
      %2649 = vmatpush1.msra.mxu0 %v2632
      %2650 = vmatprep.subr.mxu0 %v2635
      %2651 = vmatpush1.msra.mxu0 %v2634
      %2652 = vmatprep.subr.mxu0 0.0
      %2653 = vmatpush1.msra.mxu0 0.0
      %2654 = vmatprep.subr.mxu0 0.0
      %2655 = vmatpush1.msra.mxu0 0.0
      %2656 = vmatprep.subr.mxu0 0.0
      %2657 = vmatpush1.msra.mxu0 0.0
      %2658 = vmatprep.subr.mxu0 0.0
      %2659 = vmatpush1.msra.mxu0 0.0
      %2660 = vmatprep.subr.mxu0 0.0
      %2661 = vmatpush1.msra.mxu0 0.0
      %2662 = vmatprep.subr.mxu0 0.0
      %2663 = vmatpush1.msra.mxu0 0.0
      %2664 = vmatprep.subr.mxu0 0.0
      %2665 = vmatpush1.msra.mxu0 0.0
      %2666 = vmatprep.subr.mxu0 0.0
      %2667 = vmatpush1.msra.mxu0 0.0
      %2668 = vmatprep.subr.mxu0 0.0
      %2669 = vmatpush1.msra.mxu0 0.0
      %2670 = vmatprep.subr.mxu0 0.0
      %2671 = vmatpush1.msra.mxu0 0.0
      %2672 = vmatprep.subr.mxu0 0.0
      %2673 = vmatpush1.msra.mxu0 0.0
      %2674 = vmatprep.subr.mxu0 0.0
      %2675 = vmatpush1.msra.mxu0 0.0
      %2676 = vmatprep.subr.mxu0 0.0
      %2677 = vmatpush1.msra.mxu0 0.0
      %2678 = vmatprep.subr.mxu0 0.0
      %2679 = vmatpush1.msra.mxu0 0.0
      %2680 = vmatprep.subr.mxu0 0.0
      %2681 = vmatpush1.msra.mxu0 0.0
      %2682 = vmatprep.subr.mxu0 0.0
      %2683 = vmatpush1.msra.mxu0 0.0
      %2684 = vmatprep.subr.mxu0 0.0
      %2685 = vmatpush1.msra.mxu0 0.0
      %2686 = vmatprep.subr.mxu0 0.0
      %2687 = vmatpush1.msra.mxu0 0.0
      %2688 = vmatprep.subr.mxu0 0.0
      %2689 = vmatpush1.msra.mxu0 0.0
      %2690 = vmatprep.subr.mxu0 0.0
      %2691 = vmatpush1.msra.mxu0 0.0
      %2692 = vmatprep.subr.mxu0 0.0
      %2693 = vmatpush1.msra.mxu0 0.0
      %2694 = vmatprep.subr.mxu0 0.0
      %2695 = vmatpush1.msra.mxu0 0.0
      %2696 = vmatprep.subr.mxu0 0.0
      %2697 = vmatpush1.msra.mxu0 0.0
      %2698 = vmatprep.subr.mxu0 0.0
      %2699 = vmatpush1.msra.mxu0 0.0
      %2700 = vmatprep.subr.mxu0 0.0
      %2701 = vmatpush1.msra.mxu0 0.0
      %2702 = vmatprep.subr.mxu0 0.0
      %2703 = vmatpush1.msra.mxu0 0.0
      %2704 = vmatprep.subr.mxu0 0.0
      %2705 = vmatpush1.msra.mxu0 0.0
      %2706 = vmatprep.subr.mxu0 0.0
      %2707 = vmatpush1.msra.mxu0 0.0
      %2708 = vmatprep.subr.mxu0 0.0
      %2709 = vmatpush1.msra.mxu0 0.0
      %2710 = vmatprep.subr.mxu0 0.0
      %2711 = vmatpush1.msra.mxu0 0.0
      %2712 = vmatprep.mubr.f32.mxu0 0.0
      %2713 = vmatmul.mubr.f32.gmra.mrb[0].mxu0 %v1331
      %v2714 = vpop.f32.mrb[0].mxu0
      %v2715 = vadd.f32 %v2641, %v2714
      %v2716 = vpop.f32.mrb[0].mxu0
      %v2717 = vadd.f32 %v2645, %v2716
      %2718 = vdwg.mxu0
      %vm2719 = vcmp.gt.f32.partialorder %v2715, 0.0
      %vm2720 = vcmp.gt.f32.partialorder %v2717, 0.0
      %v2721 = vmul.f32 %v2715, 0.1
      %v2722 = vmul.f32 %v2717, 0.1
      %v2723 = vsel %vm2719, %v2715, %v2721
      %v2724 = vsel %vm2720, %v2717, %v2722
      %v2725 = vld [vmem:[%s53] sm:$0xff]
      %v2726 = vld [vmem:[%s53 + $0x8] sm:$0xff]
      %v2727 = vld [vmem:[%s51] sm:$0xff]
      %v2728 = vld [vmem:[%s51 + $0x8] sm:$0xff]
      %v2729 = vld [vmem:[%s51 + $0x10] sm:$0xff]
      %v2730 = vld [vmem:[%s51 + $0x18] sm:$0xff]
      %v2731 = vld [vmem:[%s51 + $0x20] sm:$0xff]
      %v2732 = vld [vmem:[%s51 + $0x28] sm:$0xff]
      %v2733 = vld [vmem:[%s51 + $0x30] sm:$0xff]
      %v2734 = vld [vmem:[%s51 + $0x38] sm:$0xff]
      %v2735 = vld [vmem:[%s51 + $0x40] sm:$0xff]
      %v2736 = vld [vmem:[%s51 + $0x48] sm:$0xff]
      %v2737 = vld [vmem:[%s51 + $0x50] sm:$0xff]
      %v2738 = vld [vmem:[%s51 + $0x58] sm:$0xff]
      %v2739 = vld [vmem:[%s51 + $0x60] sm:$0xff]
      %v2740 = vld [vmem:[%s51 + $0x68] sm:$0xff]
      %v2741 = vld [vmem:[%s51 + $0x70] sm:$0xff]
      %v2742 = vld [vmem:[%s51 + $0x78] sm:$0xff]
      %v2743 = vld [vmem:[%s51 + $0x80] sm:$0xff]
      %v2744 = vld [vmem:[%s51 + $0x88] sm:$0xff]
      %v2745 = vld [vmem:[%s51 + $0x90] sm:$0xff]
      %v2746 = vld [vmem:[%s51 + $0x98] sm:$0xff]
      %vm2747 = vcmask 261120
      %v2749 = vsel %vm2747, %v2724, 0
      %2751 = vmatprep.subr.mxu0 0.0
      %2752 = vmatpush1.msra.mxu0 %v2727
      %2753 = vmatprep.subr.mxu0 0.0
      %2754 = vmatpush1.msra.mxu0 %v2728
      %2755 = vmatprep.subr.mxu0 0.0
      %2756 = vmatpush1.msra.mxu0 %v2729
      %2757 = vmatprep.subr.mxu0 0.0
      %2758 = vmatpush1.msra.mxu0 %v2730
      %2759 = vmatprep.subr.mxu0 0.0
      %2760 = vmatpush1.msra.mxu0 %v2731
      %2761 = vmatprep.subr.mxu0 0.0
      %2762 = vmatpush1.msra.mxu0 %v2732
      %2763 = vmatprep.subr.mxu0 0.0
      %2764 = vmatpush1.msra.mxu0 %v2733
      %2765 = vmatprep.subr.mxu0 0.0
      %2766 = vmatpush1.msra.mxu0 %v2734
      %2767 = vmatprep.subr.mxu0 0.0
      %2768 = vmatpush1.msra.mxu0 %v2735
      %2769 = vmatprep.subr.mxu0 0.0
      %2770 = vmatpush1.msra.mxu0 %v2736
      %2771 = vmatprep.subr.mxu0 0.0
      %2772 = vmatpush1.msra.mxu0 %v2737
      %2773 = vmatprep.subr.mxu0 0.0
      %2774 = vmatpush1.msra.mxu0 %v2738
      %2775 = vmatprep.subr.mxu0 0.0
      %2776 = vmatpush1.msra.mxu0 %v2739
      %2777 = vmatprep.subr.mxu0 0.0
      %2778 = vmatpush1.msra.mxu0 %v2740
      %2779 = vmatprep.subr.mxu0 0.0
      %2780 = vmatpush1.msra.mxu0 %v2741
      %2781 = vmatprep.subr.mxu0 0.0
      %2782 = vmatpush1.msra.mxu0 %v2742
      %2783 = vmatprep.subr.mxu0 0.0
      %2784 = vmatpush1.msra.mxu0 %v2743
      %2785 = vmatprep.subr.mxu0 0.0
      %2786 = vmatpush1.msra.mxu0 %v2744
      %2787 = vmatprep.subr.mxu0 0.0
      %2788 = vmatpush1.msra.mxu0 %v2745
      %2789 = vmatprep.subr.mxu0 0.0
      %2790 = vmatpush1.msra.mxu0 %v2746
      %2791 = vmatprep.subr.mxu0 0.0
      %2792 = vmatpush1.msra.mxu0 0.0
      %2793 = vmatprep.subr.mxu0 0.0
      %2794 = vmatpush1.msra.mxu0 0.0
      %2795 = vmatprep.subr.mxu0 0.0
      %2796 = vmatpush1.msra.mxu0 0.0
      %2797 = vmatprep.subr.mxu0 0.0
      %2798 = vmatpush1.msra.mxu0 0.0
      %2799 = vmatprep.subr.mxu0 0.0
      %2800 = vmatpush1.msra.mxu0 0.0
      %2801 = vmatprep.subr.mxu0 0.0
      %2802 = vmatpush1.msra.mxu0 0.0
      %2803 = vmatprep.subr.mxu0 0.0
      %2804 = vmatpush1.msra.mxu0 0.0
      %2805 = vmatprep.subr.mxu0 0.0
      %2806 = vmatpush1.msra.mxu0 0.0
      %2807 = vmatprep.subr.mxu0 0.0
      %2808 = vmatpush1.msra.mxu0 0.0
      %2809 = vmatprep.subr.mxu0 0.0
      %2810 = vmatpush1.msra.mxu0 0.0
      %2811 = vmatprep.subr.mxu0 0.0
      %2812 = vmatpush1.msra.mxu0 0.0
      %2813 = vmatprep.subr.mxu0 0.0
      %2814 = vmatpush1.msra.mxu0 0.0
      %2815 = vmatprep.mubr.f32.mxu0 %v2749
      %2816 = vmatmul.mubr.f32.gmra.mrb[0].mxu0 %v2723
      %v2817 = vpop.f32.mrb[0].mxu0
      %v2818 = vadd.f32 0.0, %v2817
      %v2819 = vpop.f32.mrb[0].mxu0
      %2820 = vdwg.mxu0
      %2821 = vmatprep.subr.mxu0 0.0
      %2822 = vmatpush1.msra.mxu0 %v2725
      %2823 = vmatprep.subr.mxu0 0.0
      %2824 = vmatpush1.msra.mxu0 %v2726
      %2825 = vmatprep.subr.mxu0 0.0
      %2826 = vmatpush1.msra.mxu0 0.0
      %2827 = vmatprep.subr.mxu0 0.0
      %2828 = vmatpush1.msra.mxu0 0.0
      %2829 = vmatprep.subr.mxu0 0.0
      %2830 = vmatpush1.msra.mxu0 0.0
      %2831 = vmatprep.subr.mxu0 0.0
      %2832 = vmatpush1.msra.mxu0 0.0
      %2833 = vmatprep.subr.mxu0 0.0
      %2834 = vmatpush1.msra.mxu0 0.0
      %2835 = vmatprep.subr.mxu0 0.0
      %2836 = vmatpush1.msra.mxu0 0.0
      %2837 = vmatprep.subr.mxu0 0.0
      %2838 = vmatpush1.msra.mxu0 0.0
      %2839 = vmatprep.subr.mxu0 0.0
      %2840 = vmatpush1.msra.mxu0 0.0
      %2841 = vmatprep.subr.mxu0 0.0
      %2842 = vmatpush1.msra.mxu0 0.0
      %2843 = vmatprep.subr.mxu0 0.0
      %2844 = vmatpush1.msra.mxu0 0.0
      %2845 = vmatprep.subr.mxu0 0.0
      %2846 = vmatpush1.msra.mxu0 0.0
      %2847 = vmatprep.subr.mxu0 0.0
      %2848 = vmatpush1.msra.mxu0 0.0
      %2849 = vmatprep.subr.mxu0 0.0
      %2850 = vmatpush1.msra.mxu0 0.0
      %2851 = vmatprep.subr.mxu0 0.0
      %2852 = vmatpush1.msra.mxu0 0.0
      %2853 = vmatprep.subr.mxu0 0.0
      %2854 = vmatpush1.msra.mxu0 0.0
      %2855 = vmatprep.subr.mxu0 0.0
      %2856 = vmatpush1.msra.mxu0 0.0
      %2857 = vmatprep.subr.mxu0 0.0
      %2858 = vmatpush1.msra.mxu0 0.0
      %2859 = vmatprep.subr.mxu0 0.0
      %2860 = vmatpush1.msra.mxu0 0.0
      %2861 = vmatprep.subr.mxu0 0.0
      %2862 = vmatpush1.msra.mxu0 0.0
      %2863 = vmatprep.subr.mxu0 0.0
      %2864 = vmatpush1.msra.mxu0 0.0
      %2865 = vmatprep.subr.mxu0 0.0
      %2866 = vmatpush1.msra.mxu0 0.0
      %2867 = vmatprep.subr.mxu0 0.0
      %2868 = vmatpush1.msra.mxu0 0.0
      %2869 = vmatprep.subr.mxu0 0.0
      %2870 = vmatpush1.msra.mxu0 0.0
      %2871 = vmatprep.subr.mxu0 0.0
      %2872 = vmatpush1.msra.mxu0 0.0
      %2873 = vmatprep.subr.mxu0 0.0
      %2874 = vmatpush1.msra.mxu0 0.0
      %2875 = vmatprep.subr.mxu0 0.0
      %2876 = vmatpush1.msra.mxu0 0.0
      %2877 = vmatprep.subr.mxu0 0.0
      %2878 = vmatpush1.msra.mxu0 0.0
      %2879 = vmatprep.subr.mxu0 0.0
      %2880 = vmatpush1.msra.mxu0 0.0
      %2881 = vmatprep.subr.mxu0 0.0
      %2882 = vmatpush1.msra.mxu0 0.0
      %2883 = vmatprep.subr.mxu0 0.0
      %2884 = vmatpush1.msra.mxu0 0.0
      %2885 = vmatprep.mubr.f32.mxu0 0.0
      %2886 = vmatmul.mubr.f32.gmra.mrb[0].mxu0 %v1331
      %v2887 = vpop.f32.mrb[0].mxu0
      %v2888 = vadd.f32 %v2818, %v2887
      %v2889 = vpop.f32.mrb[0].mxu0
      %2890 = vdwg.mxu0
      %v2891 = vld [vmem:[%s55] sm:$0x1]
      %v2893 = vlaneseq
      %v2894 = vshrl.u32 %v2893, 7
      %v2895 = vsub.s32 0, %v2894
      %v2896 = vrot.slane %v2891, %v2895
      %v2898 = vadd.f32 %v2888, %v2896
      %v2899 = vld [vmem:[%s57] sm:$0xff]
      %v2900 = vld [vmem:[%s57 + $0x8] sm:$0xff]
      %v2901 = vld [vmem:[%s57 + $0x10] sm:$0xff]
      %v2902 = vld [vmem:[%s57 + $0x18] sm:$0xff]
      %v2903 = vld [vmem:[%s59] sm:$0x3]
      %v2905 = vlaneseq
      %v2906 = vshrl.u32 %v2905, 7
      %v2907 = vsub.s32 0, %v2906
      %v2908 = vrot.slane %v2903, %v2907
      %v2909 = vlaneseq
      %v2910 = vshrl.u32 %v2909, 7
      %v2911 = vsub.s32 1, %v2910
      %v2912 = vrot.slane %v2903, %v2911
      %v2916 = vsel %vm1329, %v2898, 0
      %2918 = vmatprep.subr.mxu0 %v2900
      %2919 = vmatpush1.msra.mxu0 %v2899
      %2920 = vmatprep.subr.mxu0 %v2902
      %2921 = vmatpush1.msra.mxu0 %v2901
      %2922 = vmatprep.subr.mxu0 0.0
      %2923 = vmatpush1.msra.mxu0 0.0
      %2924 = vmatprep.subr.mxu0 0.0
      %2925 = vmatpush1.msra.mxu0 0.0
      %2926 = vmatprep.subr.mxu0 0.0
      %2927 = vmatpush1.msra.mxu0 0.0
      %2928 = vmatprep.subr.mxu0 0.0
      %2929 = vmatpush1.msra.mxu0 0.0
      %2930 = vmatprep.subr.mxu0 0.0
      %2931 = vmatpush1.msra.mxu0 0.0
      %2932 = vmatprep.subr.mxu0 0.0
      %2933 = vmatpush1.msra.mxu0 0.0
      %2934 = vmatprep.subr.mxu0 0.0
      %2935 = vmatpush1.msra.mxu0 0.0
      %2936 = vmatprep.subr.mxu0 0.0
      %2937 = vmatpush1.msra.mxu0 0.0
      %2938 = vmatprep.subr.mxu0 0.0
      %2939 = vmatpush1.msra.mxu0 0.0
      %2940 = vmatprep.subr.mxu0 0.0
      %2941 = vmatpush1.msra.mxu0 0.0
      %2942 = vmatprep.subr.mxu0 0.0
      %2943 = vmatpush1.msra.mxu0 0.0
      %2944 = vmatprep.subr.mxu0 0.0
      %2945 = vmatpush1.msra.mxu0 0.0
      %2946 = vmatprep.subr.mxu0 0.0
      %2947 = vmatpush1.msra.mxu0 0.0
      %2948 = vmatprep.subr.mxu0 0.0
      %2949 = vmatpush1.msra.mxu0 0.0
      %2950 = vmatprep.subr.mxu0 0.0
      %2951 = vmatpush1.msra.mxu0 0.0
      %2952 = vmatprep.subr.mxu0 0.0
      %2953 = vmatpush1.msra.mxu0 0.0
      %2954 = vmatprep.subr.mxu0 0.0
      %2955 = vmatpush1.msra.mxu0 0.0
      %2956 = vmatprep.subr.mxu0 0.0
      %2957 = vmatpush1.msra.mxu0 0.0
      %2958 = vmatprep.subr.mxu0 0.0
      %2959 = vmatpush1.msra.mxu0 0.0
      %2960 = vmatprep.subr.mxu0 0.0
      %2961 = vmatpush1.msra.mxu0 0.0
      %2962 = vmatprep.subr.mxu0 0.0
      %2963 = vmatpush1.msra.mxu0 0.0
      %2964 = vmatprep.subr.mxu0 0.0
      %2965 = vmatpush1.msra.mxu0 0.0
      %2966 = vmatprep.subr.mxu0 0.0
      %2967 = vmatpush1.msra.mxu0 0.0
      %2968 = vmatprep.subr.mxu0 0.0
      %2969 = vmatpush1.msra.mxu0 0.0
      %2970 = vmatprep.subr.mxu0 0.0
      %2971 = vmatpush1.msra.mxu0 0.0
      %2972 = vmatprep.subr.mxu0 0.0
      %2973 = vmatpush1.msra.mxu0 0.0
      %2974 = vmatprep.subr.mxu0 0.0
      %2975 = vmatpush1.msra.mxu0 0.0
      %2976 = vmatprep.subr.mxu0 0.0
      %2977 = vmatpush1.msra.mxu0 0.0
      %2978 = vmatprep.subr.mxu0 0.0
      %2979 = vmatpush1.msra.mxu0 0.0
      %2980 = vmatprep.subr.mxu0 0.0
      %2981 = vmatpush1.msra.mxu0 0.0
      %2982 = vmatprep.mubr.f32.mxu0 0.0
      %2983 = vmatmul.mubr.f32.gmra.mrb[0].mxu0 %v2916
      %v2984 = vpop.f32.mrb[0].mxu0
      %v2985 = vadd.f32 %v2908, %v2984
      %v2986 = vpop.f32.mrb[0].mxu0
      %v2987 = vadd.f32 %v2912, %v2986
      %2988 = vdwg.mxu0
      %vm2989 = vcmp.gt.f32.partialorder %v2985, 0.0
      %vm2990 = vcmp.gt.f32.partialorder %v2987, 0.0
      %v2991 = vmul.f32 %v2985, 0.1
      %v2992 = vmul.f32 %v2987, 0.1
      %v2993 = vsel %vm2989, %v2985, %v2991
      %v2994 = vsel %vm2990, %v2987, %v2992
      %v2995 = vld [vmem:[%s63] sm:$0xff]
      %v2996 = vld [vmem:[%s63 + $0x8] sm:$0xff]
      %v2997 = vld [vmem:[%s61] sm:$0xff]
      %v2998 = vld [vmem:[%s61 + $0x8] sm:$0xff]
      %v2999 = vld [vmem:[%s61 + $0x10] sm:$0xff]
      %v3000 = vld [vmem:[%s61 + $0x18] sm:$0xff]
      %v3001 = vld [vmem:[%s61 + $0x20] sm:$0xff]
      %v3002 = vld [vmem:[%s61 + $0x28] sm:$0xff]
      %v3003 = vld [vmem:[%s61 + $0x30] sm:$0xff]
      %v3004 = vld [vmem:[%s61 + $0x38] sm:$0xff]
      %v3005 = vld [vmem:[%s61 + $0x40] sm:$0xff]
      %v3006 = vld [vmem:[%s61 + $0x48] sm:$0xff]
      %v3007 = vld [vmem:[%s61 + $0x50] sm:$0xff]
      %v3008 = vld [vmem:[%s61 + $0x58] sm:$0xff]
      %v3009 = vld [vmem:[%s61 + $0x60] sm:$0xff]
      %v3010 = vld [vmem:[%s61 + $0x68] sm:$0xff]
      %v3011 = vld [vmem:[%s61 + $0x70] sm:$0xff]
      %v3012 = vld [vmem:[%s61 + $0x78] sm:$0xff]
      %v3013 = vld [vmem:[%s61 + $0x80] sm:$0xff]
      %v3014 = vld [vmem:[%s61 + $0x88] sm:$0xff]
      %v3015 = vld [vmem:[%s61 + $0x90] sm:$0xff]
      %v3016 = vld [vmem:[%s61 + $0x98] sm:$0xff]
      %v3017 = vld [vmem:[%s61 + $0xa0] sm:$0xff]
      %v3018 = vld [vmem:[%s61 + $0xa8] sm:$0xff]
      %v3019 = vld [vmem:[%s61 + $0xb0] sm:$0xff]
      %v3020 = vld [vmem:[%s61 + $0xb8] sm:$0xff]
      %v3021 = vld [vmem:[%s61 + $0xc0] sm:$0xff]
      %v3022 = vld [vmem:[%s61 + $0xc8] sm:$0xff]
      %v3023 = vld [vmem:[%s61 + $0xd0] sm:$0xff]
      %v3024 = vld [vmem:[%s61 + $0xd8] sm:$0xff]
      %v3025 = vld [vmem:[%s61 + $0xe0] sm:$0xff]
      %v3026 = vld [vmem:[%s61 + $0xe8] sm:$0xff]
      %v3027 = vld [vmem:[%s61 + $0xf0] sm:$0xff]
      %v3028 = vld [vmem:[%s61 + $0xf8] sm:$0xff]
      %3029 = vmatprep.subr.mxu0 0.0
      %3030 = vmatpush1.msra.mxu0 %v2997
      %3031 = vmatprep.subr.mxu0 0.0
      %3032 = vmatpush1.msra.mxu0 %v2998
      %3033 = vmatprep.subr.mxu0 0.0
      %3034 = vmatpush1.msra.mxu0 %v2999
      %3035 = vmatprep.subr.mxu0 0.0
      %3036 = vmatpush1.msra.mxu0 %v3000
      %3037 = vmatprep.subr.mxu0 0.0
      %3038 = vmatpush1.msra.mxu0 %v3001
      %3039 = vmatprep.subr.mxu0 0.0
      %3040 = vmatpush1.msra.mxu0 %v3002
      %3041 = vmatprep.subr.mxu0 0.0
      %3042 = vmatpush1.msra.mxu0 %v3003
      %3043 = vmatprep.subr.mxu0 0.0
      %3044 = vmatpush1.msra.mxu0 %v3004
      %3045 = vmatprep.subr.mxu0 0.0
      %3046 = vmatpush1.msra.mxu0 %v3005
      %3047 = vmatprep.subr.mxu0 0.0
      %3048 = vmatpush1.msra.mxu0 %v3006
      %3049 = vmatprep.subr.mxu0 0.0
      %3050 = vmatpush1.msra.mxu0 %v3007
      %3051 = vmatprep.subr.mxu0 0.0
      %3052 = vmatpush1.msra.mxu0 %v3008
      %3053 = vmatprep.subr.mxu0 0.0
      %3054 = vmatpush1.msra.mxu0 %v3009
      %3055 = vmatprep.subr.mxu0 0.0
      %3056 = vmatpush1.msra.mxu0 %v3010
      %3057 = vmatprep.subr.mxu0 0.0
      %3058 = vmatpush1.msra.mxu0 %v3011
      %3059 = vmatprep.subr.mxu0 0.0
      %3060 = vmatpush1.msra.mxu0 %v3012
      %3061 = vmatprep.subr.mxu0 0.0
      %3062 = vmatpush1.msra.mxu0 %v3013
      %3063 = vmatprep.subr.mxu0 0.0
      %3064 = vmatpush1.msra.mxu0 %v3014
      %3065 = vmatprep.subr.mxu0 0.0
      %3066 = vmatpush1.msra.mxu0 %v3015
      %3067 = vmatprep.subr.mxu0 0.0
      %3068 = vmatpush1.msra.mxu0 %v3016
      %3069 = vmatprep.subr.mxu0 0.0
      %3070 = vmatpush1.msra.mxu0 %v3017
      %3071 = vmatprep.subr.mxu0 0.0
      %3072 = vmatpush1.msra.mxu0 %v3018
      %3073 = vmatprep.subr.mxu0 0.0
      %3074 = vmatpush1.msra.mxu0 %v3019
      %3075 = vmatprep.subr.mxu0 0.0
      %3076 = vmatpush1.msra.mxu0 %v3020
      %3077 = vmatprep.subr.mxu0 0.0
      %3078 = vmatpush1.msra.mxu0 %v3021
      %3079 = vmatprep.subr.mxu0 0.0
      %3080 = vmatpush1.msra.mxu0 %v3022
      %3081 = vmatprep.subr.mxu0 0.0
      %3082 = vmatpush1.msra.mxu0 %v3023
      %3083 = vmatprep.subr.mxu0 0.0
      %3084 = vmatpush1.msra.mxu0 %v3024
      %3085 = vmatprep.subr.mxu0 0.0
      %3086 = vmatpush1.msra.mxu0 %v3025
      %3087 = vmatprep.subr.mxu0 0.0
      %3088 = vmatpush1.msra.mxu0 %v3026
      %3089 = vmatprep.subr.mxu0 0.0
      %3090 = vmatpush1.msra.mxu0 %v3027
      %3091 = vmatprep.subr.mxu0 0.0
      %3092 = vmatpush1.msra.mxu0 %v3028
      %3093 = vmatprep.mubr.f32.mxu0 %v2994
      %3094 = vmatmul.mubr.f32.gmra.mrb[0].mxu0 %v2993
      %v3095 = vpop.f32.mrb[0].mxu0
      %v3096 = vadd.f32 0.0, %v3095
      %v3097 = vpop.f32.mrb[0].mxu0
      %3098 = vdwg.mxu0
      %3099 = vmatprep.subr.mxu0 0.0
      %3100 = vmatpush1.msra.mxu0 %v2995
      %3101 = vmatprep.subr.mxu0 0.0
      %3102 = vmatpush1.msra.mxu0 %v2996
      %3103 = vmatprep.subr.mxu0 0.0
      %3104 = vmatpush1.msra.mxu0 0.0
      %3105 = vmatprep.subr.mxu0 0.0
      %3106 = vmatpush1.msra.mxu0 0.0
      %3107 = vmatprep.subr.mxu0 0.0
      %3108 = vmatpush1.msra.mxu0 0.0
      %3109 = vmatprep.subr.mxu0 0.0
      %3110 = vmatpush1.msra.mxu0 0.0
      %3111 = vmatprep.subr.mxu0 0.0
      %3112 = vmatpush1.msra.mxu0 0.0
      %3113 = vmatprep.subr.mxu0 0.0
      %3114 = vmatpush1.msra.mxu0 0.0
      %3115 = vmatprep.subr.mxu0 0.0
      %3116 = vmatpush1.msra.mxu0 0.0
      %3117 = vmatprep.subr.mxu0 0.0
      %3118 = vmatpush1.msra.mxu0 0.0
      %3119 = vmatprep.subr.mxu0 0.0
      %3120 = vmatpush1.msra.mxu0 0.0
      %3121 = vmatprep.subr.mxu0 0.0
      %3122 = vmatpush1.msra.mxu0 0.0
      %3123 = vmatprep.subr.mxu0 0.0
      %3124 = vmatpush1.msra.mxu0 0.0
      %3125 = vmatprep.subr.mxu0 0.0
      %3126 = vmatpush1.msra.mxu0 0.0
      %3127 = vmatprep.subr.mxu0 0.0
      %3128 = vmatpush1.msra.mxu0 0.0
      %3129 = vmatprep.subr.mxu0 0.0
      %3130 = vmatpush1.msra.mxu0 0.0
      %3131 = vmatprep.subr.mxu0 0.0
      %3132 = vmatpush1.msra.mxu0 0.0
      %3133 = vmatprep.subr.mxu0 0.0
      %3134 = vmatpush1.msra.mxu0 0.0
      %3135 = vmatprep.subr.mxu0 0.0
      %3136 = vmatpush1.msra.mxu0 0.0
      %3137 = vmatprep.subr.mxu0 0.0
      %3138 = vmatpush1.msra.mxu0 0.0
      %3139 = vmatprep.subr.mxu0 0.0
      %3140 = vmatpush1.msra.mxu0 0.0
      %3141 = vmatprep.subr.mxu0 0.0
      %3142 = vmatpush1.msra.mxu0 0.0
      %3143 = vmatprep.subr.mxu0 0.0
      %3144 = vmatpush1.msra.mxu0 0.0
      %3145 = vmatprep.subr.mxu0 0.0
      %3146 = vmatpush1.msra.mxu0 0.0
      %3147 = vmatprep.subr.mxu0 0.0
      %3148 = vmatpush1.msra.mxu0 0.0
      %3149 = vmatprep.subr.mxu0 0.0
      %3150 = vmatpush1.msra.mxu0 0.0
      %3151 = vmatprep.subr.mxu0 0.0
      %3152 = vmatpush1.msra.mxu0 0.0
      %3153 = vmatprep.subr.mxu0 0.0
      %3154 = vmatpush1.msra.mxu0 0.0
      %3155 = vmatprep.subr.mxu0 0.0
      %3156 = vmatpush1.msra.mxu0 0.0
      %3157 = vmatprep.subr.mxu0 0.0
      %3158 = vmatpush1.msra.mxu0 0.0
      %3159 = vmatprep.subr.mxu0 0.0
      %3160 = vmatpush1.msra.mxu0 0.0
      %3161 = vmatprep.subr.mxu0 0.0
      %3162 = vmatpush1.msra.mxu0 0.0
      %3163 = vmatprep.mubr.f32.mxu0 0.0
      %3164 = vmatmul.mubr.f32.gmra.mrb[0].mxu0 %v2916
      %v3165 = vpop.f32.mrb[0].mxu0
      %v3166 = vadd.f32 %v3096, %v3165
      %v3167 = vpop.f32.mrb[0].mxu0
      %3168 = vdwg.mxu0
      %v3169 = vld [vmem:[%s65] sm:$0x1]
      %v3171 = vlaneseq
      %v3172 = vshrl.u32 %v3171, 7
      %v3173 = vsub.s32 0, %v3172
      %v3174 = vrot.slane %v3169, %v3173
      %v3176 = vadd.f32 %v3166, %v3174
      %v3178 = vsel %vm1870, %v3176, 0
      %3180 = vmatprep.subr.mxu0 0.0
      %3181 = vmatpush1.msra.mxu0 %v3178
      %3182 = vmatprep.subr.mxu0 0.0
      %3183 = vmatpush1.msra.mxu0 0.0
      %3184 = vmatprep.subr.mxu0 0.0
      %3185 = vmatpush1.msra.mxu0 0.0
      %3186 = vmatprep.subr.mxu0 0.0
      %3187 = vmatpush1.msra.mxu0 0.0
      %3188 = vmatprep.subr.mxu0 0.0
      %3189 = vmatpush1.msra.mxu0 0.0
      %3190 = vmatprep.subr.mxu0 0.0
      %3191 = vmatpush1.msra.mxu0 0.0
      %3192 = vmatprep.subr.mxu0 0.0
      %3193 = vmatpush1.msra.mxu0 0.0
      %3194 = vmatprep.subr.mxu0 0.0
      %3195 = vmatpush1.msra.mxu0 0.0
      %3196 = vmatprep.subr.mxu0 0.0
      %3197 = vmatpush1.msra.mxu0 0.0
      %3198 = vmatprep.subr.mxu0 0.0
      %3199 = vmatpush1.msra.mxu0 0.0
      %3200 = vmatprep.subr.mxu0 0.0
      %3201 = vmatpush1.msra.mxu0 0.0
      %3202 = vmatprep.subr.mxu0 0.0
      %3203 = vmatpush1.msra.mxu0 0.0
      %3204 = vmatprep.subr.mxu0 0.0
      %3205 = vmatpush1.msra.mxu0 0.0
      %3206 = vmatprep.subr.mxu0 0.0
      %3207 = vmatpush1.msra.mxu0 0.0
      %3208 = vmatprep.subr.mxu0 0.0
      %3209 = vmatpush1.msra.mxu0 0.0
      %3210 = vmatprep.subr.mxu0 0.0
      %3211 = vmatpush1.msra.mxu0 0.0
      %3212 = vmatprep.subr.mxu0 0.0
      %3213 = vmatpush1.msra.mxu0 0.0
      %3214 = vmatprep.subr.mxu0 0.0
      %3215 = vmatpush1.msra.mxu0 0.0
      %3216 = vmatprep.subr.mxu0 0.0
      %3217 = vmatpush1.msra.mxu0 0.0
      %3218 = vmatprep.subr.mxu0 0.0
      %3219 = vmatpush1.msra.mxu0 0.0
      %3220 = vmatprep.subr.mxu0 0.0
      %3221 = vmatpush1.msra.mxu0 0.0
      %3222 = vmatprep.subr.mxu0 0.0
      %3223 = vmatpush1.msra.mxu0 0.0
      %3224 = vmatprep.subr.mxu0 0.0
      %3225 = vmatpush1.msra.mxu0 0.0
      %3226 = vmatprep.subr.mxu0 0.0
      %3227 = vmatpush1.msra.mxu0 0.0
      %3228 = vmatprep.subr.mxu0 0.0
      %3229 = vmatpush1.msra.mxu0 0.0
      %3230 = vmatprep.subr.mxu0 0.0
      %3231 = vmatpush1.msra.mxu0 0.0
      %3232 = vmatprep.subr.mxu0 0.0
      %3233 = vmatpush1.msra.mxu0 0.0
      %3234 = vmatprep.subr.mxu0 0.0
      %3235 = vmatpush1.msra.mxu0 0.0
      %3236 = vmatprep.subr.mxu0 0.0
      %3237 = vmatpush1.msra.mxu0 0.0
      %3238 = vmatprep.subr.mxu0 0.0
      %3239 = vmatpush1.msra.mxu0 0.0
      %3240 = vmatprep.subr.mxu0 0.0
      %3241 = vmatpush1.msra.mxu0 0.0
      %3242 = vmatprep.subr.mxu0 0.0
      %3243 = vmatpush1.msra.mxu0 0.0
      %3244 = vmatprep.mubr.f32.mxu0 0.0
      %3245 = vmatmul.mubr.f32.gmra.mrb[0].mxu0 %v1865
      %v3246 = vpop.f32.mrb[0].mxu0
      %v3247 = vadd.f32 0.0, %v3246
      %v3248 = vpop.f32.mrb[0].mxu0
      %3249 = vmatprep.mubr.f32.mxu0 0.0
      %3250 = vmatmul.mubr.f32.gmra.mrb[0].mxu0 %v1868
      %v3251 = vpop.f32.mrb[0].mxu0
      %v3252 = vadd.f32 0.0, %v3251
      %v3253 = vpop.f32.mrb[0].mxu0
      %3254 = vdwg.mxu0
      %v3255 = vld [vmem:[%s67] sm:$0xff]
      %v3256 = vld [vmem:[%s67 + $0x8] sm:$0xff]
      %v3257 = vld [vmem:[%s67 + $0x10] sm:$0xff]
      %v3258 = vld [vmem:[%s67 + $0x18] sm:$0xff]
      %v3259 = vld [vmem:[%s67 + $0x20] sm:$0xf]
      %v3260 = vld [vmem:[%s69] sm:$0xff]
      %v3261 = vld [vmem:[%s69 + $0x8] sm:$0xff]
      %v3262 = vld [vmem:[%s69 + $0x10] sm:$0xff]
      %v3263 = vld [vmem:[%s69 + $0x18] sm:$0xff]
      %v3264 = vld [vmem:[%s69 + $0x20] sm:$0xf]
      %3266 = vset.pattern.permute.xlu0 0
      %3267 = vperm.xlu0 %3266, %v3260
      %v3268 = vpop.permute.xlu0 %3267
      %3271 = vset.pattern.permute.xlu0 0
      %3272 = vperm.xlu0 %3271, %v3261
      %v3273 = vpop.permute.xlu0 %3272
      %3276 = vset.pattern.permute.xlu0 0
      %3277 = vperm.xlu0 %3276, %v3262
      %v3278 = vpop.permute.xlu0 %3277
      %3281 = vset.pattern.permute.xlu0 0
      %3282 = vperm.xlu0 %3281, %v3263
      %v3283 = vpop.permute.xlu0 %3282
      %3286 = vset.pattern.permute.xlu0 0
      %3287 = vperm.xlu0 %3286, %v3264
      %v3288 = vpop.permute.xlu0 %3287
      %v3291 = vsel %vm1984, %v3255, 0
      %v3294 = vsel %vm1984, %v3256, 0
      %v3297 = vsel %vm1984, %v3257, 0
      %v3300 = vsel %vm1984, %v3258, 0
      %v3303 = vsel %vm1984, %v3259, 0
      %v3306 = vsel %vm2000, %v3252, 0
      %3308 = vmatprep.subr.mxu0 0.0
      %3309 = vmatpush1.msra.mxu0 %v3247
      %3310 = vmatprep.subr.mxu0 0.0
      %3311 = vmatpush1.msra.mxu0 %v3306
      %3312 = vmatprep.subr.mxu0 0.0
      %3313 = vmatpush1.msra.mxu0 0.0
      %3314 = vmatprep.subr.mxu0 0.0
      %3315 = vmatpush1.msra.mxu0 0.0
      %3316 = vmatprep.subr.mxu0 0.0
      %3317 = vmatpush1.msra.mxu0 0.0
      %3318 = vmatprep.subr.mxu0 0.0
      %3319 = vmatpush1.msra.mxu0 0.0
      %3320 = vmatprep.subr.mxu0 0.0
      %3321 = vmatpush1.msra.mxu0 0.0
      %3322 = vmatprep.subr.mxu0 0.0
      %3323 = vmatpush1.msra.mxu0 0.0
      %3324 = vmatprep.subr.mxu0 0.0
      %3325 = vmatpush1.msra.mxu0 0.0
      %3326 = vmatprep.subr.mxu0 0.0
      %3327 = vmatpush1.msra.mxu0 0.0
      %3328 = vmatprep.subr.mxu0 0.0
      %3329 = vmatpush1.msra.mxu0 0.0
      %3330 = vmatprep.subr.mxu0 0.0
      %3331 = vmatpush1.msra.mxu0 0.0
      %3332 = vmatprep.subr.mxu0 0.0
      %3333 = vmatpush1.msra.mxu0 0.0
      %3334 = vmatprep.subr.mxu0 0.0
      %3335 = vmatpush1.msra.mxu0 0.0
      %3336 = vmatprep.subr.mxu0 0.0
      %3337 = vmatpush1.msra.mxu0 0.0
      %3338 = vmatprep.subr.mxu0 0.0
      %3339 = vmatpush1.msra.mxu0 0.0
      %3340 = vmatprep.subr.mxu0 0.0
      %3341 = vmatpush1.msra.mxu0 0.0
      %3342 = vmatprep.subr.mxu0 0.0
      %3343 = vmatpush1.msra.mxu0 0.0
      %3344 = vmatprep.subr.mxu0 0.0
      %3345 = vmatpush1.msra.mxu0 0.0
      %3346 = vmatprep.subr.mxu0 0.0
      %3347 = vmatpush1.msra.mxu0 0.0
      %3348 = vmatprep.subr.mxu0 0.0
      %3349 = vmatpush1.msra.mxu0 0.0
      %3350 = vmatprep.subr.mxu0 0.0
      %3351 = vmatpush1.msra.mxu0 0.0
      %3352 = vmatprep.subr.mxu0 0.0
      %3353 = vmatpush1.msra.mxu0 0.0
      %3354 = vmatprep.subr.mxu0 0.0
      %3355 = vmatpush1.msra.mxu0 0.0
      %3356 = vmatprep.subr.mxu0 0.0
      %3357 = vmatpush1.msra.mxu0 0.0
      %3358 = vmatprep.subr.mxu0 0.0
      %3359 = vmatpush1.msra.mxu0 0.0
      %3360 = vmatprep.subr.mxu0 0.0
      %3361 = vmatpush1.msra.mxu0 0.0
      %3362 = vmatprep.subr.mxu0 0.0
      %3363 = vmatpush1.msra.mxu0 0.0
      %3364 = vmatprep.subr.mxu0 0.0
      %3365 = vmatpush1.msra.mxu0 0.0
      %3366 = vmatprep.subr.mxu0 0.0
      %3367 = vmatpush1.msra.mxu0 0.0
      %3368 = vmatprep.subr.mxu0 0.0
      %3369 = vmatpush1.msra.mxu0 0.0
      %3370 = vmatprep.subr.mxu0 0.0
      %3371 = vmatpush1.msra.mxu0 0.0
      %3372 = vmatprep.mubr.f32.mxu0 0.0
      %3373 = vmatmul.mubr.f32.gmra.mrb[0].mxu0 %v3291
      %v3374 = vpop.f32.mrb[0].mxu0
      %v3375 = vadd.f32 %v3268, %v3374
      %v3376 = vpop.f32.mrb[0].mxu0
      %3377 = vmatprep.mubr.f32.mxu0 0.0
      %3378 = vmatmul.mubr.f32.gmra.mrb[0].mxu0 %v3294
      %v3379 = vpop.f32.mrb[0].mxu0
      %v3380 = vadd.f32 %v3273, %v3379
      %v3381 = vpop.f32.mrb[0].mxu0
      %3382 = vmatprep.mubr.f32.mxu0 0.0
      %3383 = vmatmul.mubr.f32.gmra.mrb[0].mxu0 %v3297
      %v3384 = vpop.f32.mrb[0].mxu0
      %v3385 = vadd.f32 %v3278, %v3384
      %v3386 = vpop.f32.mrb[0].mxu0
      %3387 = vmatprep.mubr.f32.mxu0 0.0
      %3388 = vmatmul.mubr.f32.gmra.mrb[0].mxu0 %v3300
      %v3389 = vpop.f32.mrb[0].mxu0
      %v3390 = vadd.f32 %v3283, %v3389
      %v3391 = vpop.f32.mrb[0].mxu0
      %3392 = vmatprep.mubr.f32.mxu0 0.0
      %3393 = vmatmul.mubr.f32.gmra.mrb[0].mxu0 %v3303
      %v3394 = vpop.f32.mrb[0].mxu0
      %v3395 = vadd.f32 %v3288, %v3394
      %v3396 = vpop.f32.mrb[0].mxu0
      %3397 = vdwg.mxu0
      %vm3398 = vcmp.gt.f32.partialorder %v3375, 0.0
      %vm3399 = vcmp.gt.f32.partialorder %v3380, 0.0
      %vm3400 = vcmp.gt.f32.partialorder %v3385, 0.0
      %vm3401 = vcmp.gt.f32.partialorder %v3390, 0.0
      %vm3402 = vcmp.gt.f32.partialorder %v3395, 0.0
      %v3403 = vmul.f32 %v3375, 0.1
      %v3404 = vmul.f32 %v3380, 0.1
      %v3405 = vmul.f32 %v3385, 0.1
      %v3406 = vmul.f32 %v3390, 0.1
      %v3407 = vmul.f32 %v3395, 0.1
      %v3408 = vsel %vm3398, %v3375, %v3403
      %v3409 = vsel %vm3399, %v3380, %v3404
      %v3410 = vsel %vm3400, %v3385, %v3405
      %v3411 = vsel %vm3401, %v3390, %v3406
      %v3412 = vsel %vm3402, %v3395, %v3407
      %v3413 = vld [vmem:[%s71] sm:$0xff]
      %v3414 = vld [vmem:[%s71 + $0x8] sm:$0x1]
      %v3416 = vsel %vm2111, %v3413, 0
      %v3419 = vsel %vm2111, %v3414, 0
      %v3422 = vsel %vm2118, %v3412, 0
      %3424 = vmatprep.subr.mxu0 0.0
      %3425 = vmatpush1.msra.mxu0 %v3408
      %3426 = vmatprep.subr.mxu0 0.0
      %3427 = vmatpush1.msra.mxu0 %v3409
      %3428 = vmatprep.subr.mxu0 0.0
      %3429 = vmatpush1.msra.mxu0 %v3410
      %3430 = vmatprep.subr.mxu0 0.0
      %3431 = vmatpush1.msra.mxu0 %v3411
      %3432 = vmatprep.subr.mxu0 0.0
      %3433 = vmatpush1.msra.mxu0 %v3422
      %3434 = vmatprep.subr.mxu0 0.0
      %3435 = vmatpush1.msra.mxu0 0.0
      %3436 = vmatprep.subr.mxu0 0.0
      %3437 = vmatpush1.msra.mxu0 0.0
      %3438 = vmatprep.subr.mxu0 0.0
      %3439 = vmatpush1.msra.mxu0 0.0
      %3440 = vmatprep.subr.mxu0 0.0
      %3441 = vmatpush1.msra.mxu0 0.0
      %3442 = vmatprep.subr.mxu0 0.0
      %3443 = vmatpush1.msra.mxu0 0.0
      %3444 = vmatprep.subr.mxu0 0.0
      %3445 = vmatpush1.msra.mxu0 0.0
      %3446 = vmatprep.subr.mxu0 0.0
      %3447 = vmatpush1.msra.mxu0 0.0
      %3448 = vmatprep.subr.mxu0 0.0
      %3449 = vmatpush1.msra.mxu0 0.0
      %3450 = vmatprep.subr.mxu0 0.0
      %3451 = vmatpush1.msra.mxu0 0.0
      %3452 = vmatprep.subr.mxu0 0.0
      %3453 = vmatpush1.msra.mxu0 0.0
      %3454 = vmatprep.subr.mxu0 0.0
      %3455 = vmatpush1.msra.mxu0 0.0
      %3456 = vmatprep.subr.mxu0 0.0
      %3457 = vmatpush1.msra.mxu0 0.0
      %3458 = vmatprep.subr.mxu0 0.0
      %3459 = vmatpush1.msra.mxu0 0.0
      %3460 = vmatprep.subr.mxu0 0.0
      %3461 = vmatpush1.msra.mxu0 0.0
      %3462 = vmatprep.subr.mxu0 0.0
      %3463 = vmatpush1.msra.mxu0 0.0
      %3464 = vmatprep.subr.mxu0 0.0
      %3465 = vmatpush1.msra.mxu0 0.0
      %3466 = vmatprep.subr.mxu0 0.0
      %3467 = vmatpush1.msra.mxu0 0.0
      %3468 = vmatprep.subr.mxu0 0.0
      %3469 = vmatpush1.msra.mxu0 0.0
      %3470 = vmatprep.subr.mxu0 0.0
      %3471 = vmatpush1.msra.mxu0 0.0
      %3472 = vmatprep.subr.mxu0 0.0
      %3473 = vmatpush1.msra.mxu0 0.0
      %3474 = vmatprep.subr.mxu0 0.0
      %3475 = vmatpush1.msra.mxu0 0.0
      %3476 = vmatprep.subr.mxu0 0.0
      %3477 = vmatpush1.msra.mxu0 0.0
      %3478 = vmatprep.subr.mxu0 0.0
      %3479 = vmatpush1.msra.mxu0 0.0
      %3480 = vmatprep.subr.mxu0 0.0
      %3481 = vmatpush1.msra.mxu0 0.0
      %3482 = vmatprep.subr.mxu0 0.0
      %3483 = vmatpush1.msra.mxu0 0.0
      %3484 = vmatprep.subr.mxu0 0.0
      %3485 = vmatpush1.msra.mxu0 0.0
      %3486 = vmatprep.subr.mxu0 0.0
      %3487 = vmatpush1.msra.mxu0 0.0
      %3488 = vmatprep.mubr.f32.mxu0 0.0
      %3489 = vmatmul.mubr.f32.gmra.mrb[0].mxu0 %v3416
      %v3490 = vpop.f32.mrb[0].mxu0
      %v3491 = vadd.f32 0.0, %v3490
      %v3492 = vpop.f32.mrb[0].mxu0
      %3493 = vmatprep.mubr.f32.mxu0 0.0
      %3494 = vmatmul.mubr.f32.gmra.mrb[0].mxu0 %v3419
      %v3495 = vpop.f32.mrb[0].mxu0
      %v3496 = vadd.f32 0.0, %v3495
      %v3497 = vpop.f32.mrb[0].mxu0
      %3498 = vdwg.mxu0
      %v3499 = vadd.f32 %v3247, %v3491
      %v3500 = vadd.f32 %v3252, %v3496
      %v3501 = vld [vmem:[%s73] sm:$0xff]
      %v3502 = vld [vmem:[%s73 + $0x8] sm:$0x1]
      %3504 = vset.pattern.permute.xlu0 0
      %3505 = vperm.xlu0 %3504, %v3501
      %v3506 = vpop.permute.xlu0 %3505
      %3509 = vset.pattern.permute.xlu0 0
      %3510 = vperm.xlu0 %3509, %v3502
      %v3511 = vpop.permute.xlu0 %3510
      %v3513 = vadd.f32 %v3499, %v3506
      %v3514 = vadd.f32 %v3500, %v3511
      %v3515 = vld [vmem:[%s75] sm:$0xff]
      %v3516 = vld [vmem:[%s75 + $0x8] sm:$0xff]
      %v3517 = vld [vmem:[%s75 + $0x10] sm:$0xff]
      %v3518 = vld [vmem:[%s75 + $0x18] sm:$0xff]
      %v3519 = vld [vmem:[%s75 + $0x20] sm:$0xf]
      %v3520 = vld [vmem:[%s77] sm:$0xff]
      %v3521 = vld [vmem:[%s77 + $0x8] sm:$0xff]
      %v3522 = vld [vmem:[%s77 + $0x10] sm:$0xff]
      %v3523 = vld [vmem:[%s77 + $0x18] sm:$0xff]
      %v3524 = vld [vmem:[%s77 + $0x20] sm:$0xf]
      %3526 = vset.pattern.permute.xlu0 0
      %3527 = vperm.xlu0 %3526, %v3520
      %v3528 = vpop.permute.xlu0 %3527
      %3531 = vset.pattern.permute.xlu0 0
      %3532 = vperm.xlu0 %3531, %v3521
      %v3533 = vpop.permute.xlu0 %3532
      %3536 = vset.pattern.permute.xlu0 0
      %3537 = vperm.xlu0 %3536, %v3522
      %v3538 = vpop.permute.xlu0 %3537
      %3541 = vset.pattern.permute.xlu0 0
      %3542 = vperm.xlu0 %3541, %v3523
      %v3543 = vpop.permute.xlu0 %3542
      %3546 = vset.pattern.permute.xlu0 0
      %3547 = vperm.xlu0 %3546, %v3524
      %v3548 = vpop.permute.xlu0 %3547
      %v3551 = vsel %vm1984, %v3515, 0
      %v3554 = vsel %vm1984, %v3516, 0
      %v3557 = vsel %vm1984, %v3517, 0
      %v3560 = vsel %vm1984, %v3518, 0
      %v3563 = vsel %vm1984, %v3519, 0
      %v3566 = vsel %vm2000, %v3514, 0
      %3568 = vmatprep.subr.mxu0 0.0
      %3569 = vmatpush1.msra.mxu0 %v3513
      %3570 = vmatprep.subr.mxu0 0.0
      %3571 = vmatpush1.msra.mxu0 %v3566
      %3572 = vmatprep.subr.mxu0 0.0
      %3573 = vmatpush1.msra.mxu0 0.0
      %3574 = vmatprep.subr.mxu0 0.0
      %3575 = vmatpush1.msra.mxu0 0.0
      %3576 = vmatprep.subr.mxu0 0.0
      %3577 = vmatpush1.msra.mxu0 0.0
      %3578 = vmatprep.subr.mxu0 0.0
      %3579 = vmatpush1.msra.mxu0 0.0
      %3580 = vmatprep.subr.mxu0 0.0
      %3581 = vmatpush1.msra.mxu0 0.0
      %3582 = vmatprep.subr.mxu0 0.0
      %3583 = vmatpush1.msra.mxu0 0.0
      %3584 = vmatprep.subr.mxu0 0.0
      %3585 = vmatpush1.msra.mxu0 0.0
      %3586 = vmatprep.subr.mxu0 0.0
      %3587 = vmatpush1.msra.mxu0 0.0
      %3588 = vmatprep.subr.mxu0 0.0
      %3589 = vmatpush1.msra.mxu0 0.0
      %3590 = vmatprep.subr.mxu0 0.0
      %3591 = vmatpush1.msra.mxu0 0.0
      %3592 = vmatprep.subr.mxu0 0.0
      %3593 = vmatpush1.msra.mxu0 0.0
      %3594 = vmatprep.subr.mxu0 0.0
      %3595 = vmatpush1.msra.mxu0 0.0
      %3596 = vmatprep.subr.mxu0 0.0
      %3597 = vmatpush1.msra.mxu0 0.0
      %3598 = vmatprep.subr.mxu0 0.0
      %3599 = vmatpush1.msra.mxu0 0.0
      %3600 = vmatprep.subr.mxu0 0.0
      %3601 = vmatpush1.msra.mxu0 0.0
      %3602 = vmatprep.subr.mxu0 0.0
      %3603 = vmatpush1.msra.mxu0 0.0
      %3604 = vmatprep.subr.mxu0 0.0
      %3605 = vmatpush1.msra.mxu0 0.0
      %3606 = vmatprep.subr.mxu0 0.0
      %3607 = vmatpush1.msra.mxu0 0.0
      %3608 = vmatprep.subr.mxu0 0.0
      %3609 = vmatpush1.msra.mxu0 0.0
      %3610 = vmatprep.subr.mxu0 0.0
      %3611 = vmatpush1.msra.mxu0 0.0
      %3612 = vmatprep.subr.mxu0 0.0
      %3613 = vmatpush1.msra.mxu0 0.0
      %3614 = vmatprep.subr.mxu0 0.0
      %3615 = vmatpush1.msra.mxu0 0.0
      %3616 = vmatprep.subr.mxu0 0.0
      %3617 = vmatpush1.msra.mxu0 0.0
      %3618 = vmatprep.subr.mxu0 0.0
      %3619 = vmatpush1.msra.mxu0 0.0
      %3620 = vmatprep.subr.mxu0 0.0
      %3621 = vmatpush1.msra.mxu0 0.0
      %3622 = vmatprep.subr.mxu0 0.0
      %3623 = vmatpush1.msra.mxu0 0.0
      %3624 = vmatprep.subr.mxu0 0.0
      %3625 = vmatpush1.msra.mxu0 0.0
      %3626 = vmatprep.subr.mxu0 0.0
      %3627 = vmatpush1.msra.mxu0 0.0
      %3628 = vmatprep.subr.mxu0 0.0
      %3629 = vmatpush1.msra.mxu0 0.0
      %3630 = vmatprep.subr.mxu0 0.0
      %3631 = vmatpush1.msra.mxu0 0.0
      %3632 = vmatprep.mubr.f32.mxu0 0.0
      %3633 = vmatmul.mubr.f32.gmra.mrb[0].mxu0 %v3551
      %v3634 = vpop.f32.mrb[0].mxu0
      %v3635 = vadd.f32 %v3528, %v3634
      %v3636 = vpop.f32.mrb[0].mxu0
      %3637 = vmatprep.mubr.f32.mxu0 0.0
      %3638 = vmatmul.mubr.f32.gmra.mrb[0].mxu0 %v3554
      %v3639 = vpop.f32.mrb[0].mxu0
      %v3640 = vadd.f32 %v3533, %v3639
      %v3641 = vpop.f32.mrb[0].mxu0
      %3642 = vmatprep.mubr.f32.mxu0 0.0
      %3643 = vmatmul.mubr.f32.gmra.mrb[0].mxu0 %v3557
      %v3644 = vpop.f32.mrb[0].mxu0
      %v3645 = vadd.f32 %v3538, %v3644
      %v3646 = vpop.f32.mrb[0].mxu0
      %3647 = vmatprep.mubr.f32.mxu0 0.0
      %3648 = vmatmul.mubr.f32.gmra.mrb[0].mxu0 %v3560
      %v3649 = vpop.f32.mrb[0].mxu0
      %v3650 = vadd.f32 %v3543, %v3649
      %v3651 = vpop.f32.mrb[0].mxu0
      %3652 = vmatprep.mubr.f32.mxu0 0.0
      %3653 = vmatmul.mubr.f32.gmra.mrb[0].mxu0 %v3563
      %v3654 = vpop.f32.mrb[0].mxu0
      %v3655 = vadd.f32 %v3548, %v3654
      %v3656 = vpop.f32.mrb[0].mxu0
      %3657 = vdwg.mxu0
      %vm3658 = vcmp.gt.f32.partialorder %v3635, 0.0
      %vm3659 = vcmp.gt.f32.partialorder %v3640, 0.0
      %vm3660 = vcmp.gt.f32.partialorder %v3645, 0.0
      %vm3661 = vcmp.gt.f32.partialorder %v3650, 0.0
      %vm3662 = vcmp.gt.f32.partialorder %v3655, 0.0
      %v3663 = vmul.f32 %v3635, 0.1
      %v3664 = vmul.f32 %v3640, 0.1
      %v3665 = vmul.f32 %v3645, 0.1
      %v3666 = vmul.f32 %v3650, 0.1
      %v3667 = vmul.f32 %v3655, 0.1
      %v3668 = vsel %vm3658, %v3635, %v3663
      %v3669 = vsel %vm3659, %v3640, %v3664
      %v3670 = vsel %vm3660, %v3645, %v3665
      %v3671 = vsel %vm3661, %v3650, %v3666
      %v3672 = vsel %vm3662, %v3655, %v3667
      %v3673 = vld [vmem:[%s79] sm:$0xff]
      %v3674 = vld [vmem:[%s79 + $0x8] sm:$0x1]
      %v3676 = vsel %vm2111, %v3673, 0
      %v3679 = vsel %vm2111, %v3674, 0
      %v3682 = vsel %vm2118, %v3672, 0
      %3684 = vmatprep.subr.mxu0 0.0
      %3685 = vmatpush1.msra.mxu0 %v3668
      %3686 = vmatprep.subr.mxu0 0.0
      %3687 = vmatpush1.msra.mxu0 %v3669
      %3688 = vmatprep.subr.mxu0 0.0
      %3689 = vmatpush1.msra.mxu0 %v3670
      %3690 = vmatprep.subr.mxu0 0.0
      %3691 = vmatpush1.msra.mxu0 %v3671
      %3692 = vmatprep.subr.mxu0 0.0
      %3693 = vmatpush1.msra.mxu0 %v3682
      %3694 = vmatprep.subr.mxu0 0.0
      %3695 = vmatpush1.msra.mxu0 0.0
      %3696 = vmatprep.subr.mxu0 0.0
      %3697 = vmatpush1.msra.mxu0 0.0
      %3698 = vmatprep.subr.mxu0 0.0
      %3699 = vmatpush1.msra.mxu0 0.0
      %3700 = vmatprep.subr.mxu0 0.0
      %3701 = vmatpush1.msra.mxu0 0.0
      %3702 = vmatprep.subr.mxu0 0.0
      %3703 = vmatpush1.msra.mxu0 0.0
      %3704 = vmatprep.subr.mxu0 0.0
      %3705 = vmatpush1.msra.mxu0 0.0
      %3706 = vmatprep.subr.mxu0 0.0
      %3707 = vmatpush1.msra.mxu0 0.0
      %3708 = vmatprep.subr.mxu0 0.0
      %3709 = vmatpush1.msra.mxu0 0.0
      %3710 = vmatprep.subr.mxu0 0.0
      %3711 = vmatpush1.msra.mxu0 0.0
      %3712 = vmatprep.subr.mxu0 0.0
      %3713 = vmatpush1.msra.mxu0 0.0
      %3714 = vmatprep.subr.mxu0 0.0
      %3715 = vmatpush1.msra.mxu0 0.0
      %3716 = vmatprep.subr.mxu0 0.0
      %3717 = vmatpush1.msra.mxu0 0.0
      %3718 = vmatprep.subr.mxu0 0.0
      %3719 = vmatpush1.msra.mxu0 0.0
      %3720 = vmatprep.subr.mxu0 0.0
      %3721 = vmatpush1.msra.mxu0 0.0
      %3722 = vmatprep.subr.mxu0 0.0
      %3723 = vmatpush1.msra.mxu0 0.0
      %3724 = vmatprep.subr.mxu0 0.0
      %3725 = vmatpush1.msra.mxu0 0.0
      %3726 = vmatprep.subr.mxu0 0.0
      %3727 = vmatpush1.msra.mxu0 0.0
      %3728 = vmatprep.subr.mxu0 0.0
      %3729 = vmatpush1.msra.mxu0 0.0
      %3730 = vmatprep.subr.mxu0 0.0
      %3731 = vmatpush1.msra.mxu0 0.0
      %3732 = vmatprep.subr.mxu0 0.0
      %3733 = vmatpush1.msra.mxu0 0.0
      %3734 = vmatprep.subr.mxu0 0.0
      %3735 = vmatpush1.msra.mxu0 0.0
      %3736 = vmatprep.subr.mxu0 0.0
      %3737 = vmatpush1.msra.mxu0 0.0
      %3738 = vmatprep.subr.mxu0 0.0
      %3739 = vmatpush1.msra.mxu0 0.0
      %3740 = vmatprep.subr.mxu0 0.0
      %3741 = vmatpush1.msra.mxu0 0.0
      %3742 = vmatprep.subr.mxu0 0.0
      %3743 = vmatpush1.msra.mxu0 0.0
      %3744 = vmatprep.subr.mxu0 0.0
      %3745 = vmatpush1.msra.mxu0 0.0
      %3746 = vmatprep.subr.mxu0 0.0
      %3747 = vmatpush1.msra.mxu0 0.0
      %3748 = vmatprep.mubr.f32.mxu0 0.0
      %3749 = vmatmul.mubr.f32.gmra.mrb[0].mxu0 %v3676
      %v3750 = vpop.f32.mrb[0].mxu0
      %v3751 = vadd.f32 0.0, %v3750
      %v3752 = vpop.f32.mrb[0].mxu0
      %3753 = vmatprep.mubr.f32.mxu0 0.0
      %3754 = vmatmul.mubr.f32.gmra.mrb[0].mxu0 %v3679
      %v3755 = vpop.f32.mrb[0].mxu0
      %v3756 = vadd.f32 0.0, %v3755
      %v3757 = vpop.f32.mrb[0].mxu0
      %3758 = vdwg.mxu0
      %v3759 = vadd.f32 %v3513, %v3751
      %v3760 = vadd.f32 %v3514, %v3756
      %v3761 = vld [vmem:[%s81] sm:$0xff]
      %v3762 = vld [vmem:[%s81 + $0x8] sm:$0x1]
      %3764 = vset.pattern.permute.xlu0 0
      %3765 = vperm.xlu0 %3764, %v3761
      %v3766 = vpop.permute.xlu0 %3765
      %3769 = vset.pattern.permute.xlu0 0
      %3770 = vperm.xlu0 %3769, %v3762
      %v3771 = vpop.permute.xlu0 %3770
      %v3773 = vadd.f32 %v3759, %v3766
      %v3774 = vadd.f32 %v3760, %v3771
      %v3776 = vsel %vm2000, %v3774, 0
      %3778 = vmatprep.subr.mxu0 0.0
      %3779 = vmatpush1.msra.mxu0 %v3773
      %3780 = vmatprep.subr.mxu0 0.0
      %3781 = vmatpush1.msra.mxu0 %v3776
      %3782 = vmatprep.subr.mxu0 0.0
      %3783 = vmatpush1.msra.mxu0 0.0
      %3784 = vmatprep.subr.mxu0 0.0
      %3785 = vmatpush1.msra.mxu0 0.0
      %3786 = vmatprep.subr.mxu0 0.0
      %3787 = vmatpush1.msra.mxu0 0.0
      %3788 = vmatprep.subr.mxu0 0.0
      %3789 = vmatpush1.msra.mxu0 0.0
      %3790 = vmatprep.subr.mxu0 0.0
      %3791 = vmatpush1.msra.mxu0 0.0
      %3792 = vmatprep.subr.mxu0 0.0
      %3793 = vmatpush1.msra.mxu0 0.0
      %3794 = vmatprep.subr.mxu0 0.0
      %3795 = vmatpush1.msra.mxu0 0.0
      %3796 = vmatprep.subr.mxu0 0.0
      %3797 = vmatpush1.msra.mxu0 0.0
      %3798 = vmatprep.subr.mxu0 0.0
      %3799 = vmatpush1.msra.mxu0 0.0
      %3800 = vmatprep.subr.mxu0 0.0
      %3801 = vmatpush1.msra.mxu0 0.0
      %3802 = vmatprep.subr.mxu0 0.0
      %3803 = vmatpush1.msra.mxu0 0.0
      %3804 = vmatprep.subr.mxu0 0.0
      %3805 = vmatpush1.msra.mxu0 0.0
      %3806 = vmatprep.subr.mxu0 0.0
      %3807 = vmatpush1.msra.mxu0 0.0
      %3808 = vmatprep.subr.mxu0 0.0
      %3809 = vmatpush1.msra.mxu0 0.0
      %3810 = vmatprep.subr.mxu0 0.0
      %3811 = vmatpush1.msra.mxu0 0.0
      %3812 = vmatprep.subr.mxu0 0.0
      %3813 = vmatpush1.msra.mxu0 0.0
      %3814 = vmatprep.subr.mxu0 0.0
      %3815 = vmatpush1.msra.mxu0 0.0
      %3816 = vmatprep.subr.mxu0 0.0
      %3817 = vmatpush1.msra.mxu0 0.0
      %3818 = vmatprep.subr.mxu0 0.0
      %3819 = vmatpush1.msra.mxu0 0.0
      %3820 = vmatprep.subr.mxu0 0.0
      %3821 = vmatpush1.msra.mxu0 0.0
      %3822 = vmatprep.subr.mxu0 0.0
      %3823 = vmatpush1.msra.mxu0 0.0
      %3824 = vmatprep.subr.mxu0 0.0
      %3825 = vmatpush1.msra.mxu0 0.0
      %3826 = vmatprep.subr.mxu0 0.0
      %3827 = vmatpush1.msra.mxu0 0.0
      %3828 = vmatprep.subr.mxu0 0.0
      %3829 = vmatpush1.msra.mxu0 0.0
      %3830 = vmatprep.subr.mxu0 0.0
      %3831 = vmatpush1.msra.mxu0 0.0
      %3832 = vmatprep.subr.mxu0 0.0
      %3833 = vmatpush1.msra.mxu0 0.0
      %3834 = vmatprep.subr.mxu0 0.0
      %3835 = vmatpush1.msra.mxu0 0.0
      %3836 = vmatprep.subr.mxu0 0.0
      %3837 = vmatpush1.msra.mxu0 0.0
      %3838 = vmatprep.subr.mxu0 0.0
      %3839 = vmatpush1.msra.mxu0 0.0
      %3840 = vmatprep.subr.mxu0 0.0
      %3841 = vmatpush1.msra.mxu0 0.0
      %3842 = vmatprep.mubr.f32.mxu0 0.0
      %3843 = vmatmul.mubr.f32.gmra.mrb[0].mxu0 %v2475
      %v3844 = vpop.f32.mrb[0].mxu0
      %v3845 = vadd.f32 0.0, %v3844
      %v3846 = vpop.f32.mrb[0].mxu0
      %3847 = vdwg.mxu0
      %v3848 = vld [vmem:[%s83] sm:$0xff]
      %v3849 = vld [vmem:[%s83 + $0x8] sm:$0xff]
      %v3851 = vsel %vm1329, %v3845, 0
      %3853 = vmatprep.subr.mxu0 0.0
      %3854 = vmatpush1.msra.mxu0 %v3848
      %3855 = vmatprep.subr.mxu0 0.0
      %3856 = vmatpush1.msra.mxu0 %v3849
      %3857 = vmatprep.subr.mxu0 0.0
      %3858 = vmatpush1.msra.mxu0 0.0
      %3859 = vmatprep.subr.mxu0 0.0
      %3860 = vmatpush1.msra.mxu0 0.0
      %3861 = vmatprep.subr.mxu0 0.0
      %3862 = vmatpush1.msra.mxu0 0.0
      %3863 = vmatprep.subr.mxu0 0.0
      %3864 = vmatpush1.msra.mxu0 0.0
      %3865 = vmatprep.subr.mxu0 0.0
      %3866 = vmatpush1.msra.mxu0 0.0
      %3867 = vmatprep.subr.mxu0 0.0
      %3868 = vmatpush1.msra.mxu0 0.0
      %3869 = vmatprep.subr.mxu0 0.0
      %3870 = vmatpush1.msra.mxu0 0.0
      %3871 = vmatprep.subr.mxu0 0.0
      %3872 = vmatpush1.msra.mxu0 0.0
      %3873 = vmatprep.subr.mxu0 0.0
      %3874 = vmatpush1.msra.mxu0 0.0
      %3875 = vmatprep.subr.mxu0 0.0
      %3876 = vmatpush1.msra.mxu0 0.0
      %3877 = vmatprep.subr.mxu0 0.0
      %3878 = vmatpush1.msra.mxu0 0.0
      %3879 = vmatprep.subr.mxu0 0.0
      %3880 = vmatpush1.msra.mxu0 0.0
      %3881 = vmatprep.subr.mxu0 0.0
      %3882 = vmatpush1.msra.mxu0 0.0
      %3883 = vmatprep.subr.mxu0 0.0
      %3884 = vmatpush1.msra.mxu0 0.0
      %3885 = vmatprep.subr.mxu0 0.0
      %3886 = vmatpush1.msra.mxu0 0.0
      %3887 = vmatprep.subr.mxu0 0.0
      %3888 = vmatpush1.msra.mxu0 0.0
      %3889 = vmatprep.subr.mxu0 0.0
      %3890 = vmatpush1.msra.mxu0 0.0
      %3891 = vmatprep.subr.mxu0 0.0
      %3892 = vmatpush1.msra.mxu0 0.0
      %3893 = vmatprep.subr.mxu0 0.0
      %3894 = vmatpush1.msra.mxu0 0.0
      %3895 = vmatprep.subr.mxu0 0.0
      %3896 = vmatpush1.msra.mxu0 0.0
      %3897 = vmatprep.subr.mxu0 0.0
      %3898 = vmatpush1.msra.mxu0 0.0
      %3899 = vmatprep.subr.mxu0 0.0
      %3900 = vmatpush1.msra.mxu0 0.0
      %3901 = vmatprep.subr.mxu0 0.0
      %3902 = vmatpush1.msra.mxu0 0.0
      %3903 = vmatprep.subr.mxu0 0.0
      %3904 = vmatpush1.msra.mxu0 0.0
      %3905 = vmatprep.subr.mxu0 0.0
      %3906 = vmatpush1.msra.mxu0 0.0
      %3907 = vmatprep.subr.mxu0 0.0
      %3908 = vmatpush1.msra.mxu0 0.0
      %3909 = vmatprep.subr.mxu0 0.0
      %3910 = vmatpush1.msra.mxu0 0.0
      %3911 = vmatprep.subr.mxu0 0.0
      %3912 = vmatpush1.msra.mxu0 0.0
      %3913 = vmatprep.subr.mxu0 0.0
      %3914 = vmatpush1.msra.mxu0 0.0
      %3915 = vmatprep.subr.mxu0 0.0
      %3916 = vmatpush1.msra.mxu0 0.0
      %3917 = vmatprep.mubr.f32.mxu0 0.0
      %3918 = vmatmul.mubr.f32.gmra.mrb[0].mxu0 %v3851
      %v3919 = vpop.f32.mrb[0].mxu0
      %v3920 = vadd.f32 0.0, %v3919
      %v3921 = vpop.f32.mrb[0].mxu0
      %3922 = vdwg.mxu0
      %v3923 = vadd.f32 %v2629, %v3920
      %v3924 = vld [vmem:[%s85] sm:$0x1]
      %v3926 = vlaneseq
      %v3927 = vshrl.u32 %v3926, 7
      %v3928 = vsub.s32 0, %v3927
      %v3929 = vrot.slane %v3924, %v3928
      %v3931 = vadd.f32 %v3923, %v3929
      %v3932 = vmul.f32 %v3931, %v1310
      %v3933 = vadd.f32 %v3932, %v1296
      %vm3934 = vcmask 63488
      %3935 = vst.msk [vmem:[%s1289] sm:$0x7f] %vm3934, %v3933
      %p3936 = scmp.lt.s32.totalorder %s98, 1
      %s3937 = scalar_select %p3936, %s98, 1
      %s3938 = smul.addr %s3937, 8
      %s3939 = scalar_lea.vmem %s87, %s3938
      // Predicated region
      $region193: #{model_forward.1} parent=191 // pred_check
        %p3940 = pneg %p1024
      $region194: #{model_forward.1} parent=191 // pred_check_branch
        %3942 = sbr.rel (%p3940) target = $region196
      $region195: #{model_forward.1} parent=191 // pred_region
        _
      $region196: #{model_forward.1} parent=191 // pred_fallthru
        _
    $region192: #{model_forward.1} parent=5 // pred_fallthru
      _
    %p3943 = scmp.le.s32.totalorder 2, %s93
    // Predicated region
    $region197: #{model_forward.1} parent=5 // pred_check
      %p3944 = pneg %p3943
    $region198: #{model_forward.1} parent=5 // pred_check_branch
      %3946 = sbr.rel (%p3944) target = $region200
    $region199: #{model_forward.1} parent=5 // pred_region
      %s3947 = ssub.s32 %s93, 2
      // Predicated region
      $region201: #{model_forward.1} parent=199 // pred_check
        %p3948 = pneg %p1030
      $region202: #{model_forward.1} parent=199 // pred_check_branch
        %3950 = sbr.rel (%p3948) target = $region204
      $region203: #{model_forward.1} parent=199 // pred_region
        %p3951 = scmp.lt.s32.totalorder %s99, 1
        %s3952 = scalar_select %p3951, %s99, 1
        %s3953 = smul.addr %s3952, 8
        %s3954 = scalar_lea.vmem %s87, %s3953
      $region204: #{model_forward.1} parent=199 // pred_fallthru
        _
    $region200: #{model_forward.1} parent=5 // pred_fallthru
      _
  $region6: #{model_forward.1} parent=0 // loop_footer
    %s97 = sadd.s32 1, %s93
  $region7: #{model_forward.1} parent=0 // loop_footer_branch
    %92 = sbr.rel target = $region3
  $region8: #{model_forward.1} parent=0 // loop_exit
    _

</llo_original>
